<compile_context>
chip_gen: v7x
topology: tpu7x:2x2x1
jax: 0.10.0
libtpu: 0.0.40
codegen_flags: <defaults>
</compile_context>

<pallas_src>
import math
import functools

import jax
import jax.numpy as jnp
from jax.experimental import pallas as pl
from jax.experimental.pallas import tpu as pltpu

# ---- model hyper-parameters (small, consistent with the module) ----
S = 8            # sequence length
B = 2            # batch
D_MODEL = 32     # d_model
NHEAD = 4        # number of attention heads
HEAD_DIM = D_MODEL // NHEAD
DIM_FF = 64      # dim_feedforward
NUM_LAYERS = 2
LN_EPS = 1e-5

# packed per-layer vector slab: rows of biases + LayerNorm params
VEC_W = max(2 * D_MODEL, DIM_FF)           # 64
(ROW_BQK, ROW_BV, ROW_BO, ROW_LN1G, ROW_LN1B,
 ROW_B1, ROW_B2, ROW_LN2G, ROW_LN2B) = range(9)
VEC_ROWS = 9


def _layernorm(x, gamma, beta):
    mu = jnp.mean(x, axis=-1, keepdims=True)
    var = jnp.mean((x - mu) ** 2, axis=-1, keepdims=True)
    return (x - mu) * jax.lax.rsqrt(var + LN_EPS) * gamma + beta


def _encoder_kernel(src_ref, pos_ref, wqk_ref, wv_ref, wo_ref, w1_ref, w2_ref,
                    vec_ref, out_ref, *, nhead, head_dim, batch, seq):
    """Runs the FULL encoder (all layers, all batch elements) in one invocation.

    src_ref/pos_ref/out_ref : (B*S, D)        f32
    wqk_ref                 : (L, D, 2D)      bf16   [Wq || Wk]
    wv_ref, wo_ref          : (L, D, D)       bf16
    w1_ref                  : (L, D, FF)      bf16
    w2_ref                  : (L, FF, D)      bf16
    vec_ref                 : (L, 9, VEC_W)   f32    packed biases / LN params
    """
    f32 = jnp.float32
    bf16 = jnp.bfloat16
    d_model = nhead * head_dim
    num_layers = wqk_ref.shape[0]
    scale = 1.0 / math.sqrt(head_dim)

    x = src_ref[...].astype(f32)        # (B*S, D)
    pos = pos_ref[...].astype(f32)      # (B*S, D)

    for layer in range(num_layers):     # static unroll (NUM_LAYERS = 2)
        wqk = wqk_ref[layer]            # (D, 2D) bf16
        wv = wv_ref[layer]              # (D, D)  bf16
        wo = wo_ref[layer]              # (D, D)  bf16
        w1 = w1_ref[layer]              # (D, FF) bf16
        w2 = w2_ref[layer]              # (FF, D) bf16
        vecs = vec_ref[layer]           # (9, VEC_W) f32
        d_ff = w1.shape[1]

        bqk   = vecs[ROW_BQK:ROW_BQK + 1, :2 * d_model]
        bv    = vecs[ROW_BV:ROW_BV + 1, :d_model]
        bo    = vecs[ROW_BO:ROW_BO + 1, :d_model]
        ln1_g = vecs[ROW_LN1G:ROW_LN1G + 1, :d_model]
        ln1_b = vecs[ROW_LN1B:ROW_LN1B + 1, :d_model]
        b1    = vecs[ROW_B1:ROW_B1 + 1, :d_ff]
        b2    = vecs[ROW_B2:ROW_B2 + 1, :d_model]
        ln2_g = vecs[ROW_LN2G:ROW_LN2G + 1, :d_model]
        ln2_b = vecs[ROW_LN2B:ROW_LN2B + 1, :d_model]

        # fused q||k in-projection on (src + pos); v projection on src
        xp = (x + pos).astype(bf16)
        qk = jnp.dot(xp, wqk, preferred_element_type=f32) + bqk            # (BS, 2D)
        v = jnp.dot(x.astype(bf16), wv, preferred_element_type=f32) + bv   # (BS, D)

        q = (qk[:, :d_model] * scale).astype(bf16)
        k = qk[:, d_model:].astype(bf16)
        vb = v.astype(bf16)

        # per-(batch, head) attention with Wo folded into the head loop:
        # acc += (softmax(q_h k_h^T) v_h) @ Wo[h]  -> full-D results, no concat.
        attn_rows = []
        for b in range(batch):          # static unroll, sublane-aligned slices
            r0 = b * seq
            acc = jnp.zeros((seq, d_model), f32)
            for h in range(nhead):      # static unroll, lane slices at 8*h
                c0 = h * head_dim
                qh = q[r0:r0 + seq, c0:c0 + head_dim]
                kh = k[r0:r0 + seq, c0:c0 + head_dim]
                vh = vb[r0:r0 + seq, c0:c0 + head_dim]
                # scores = qh @ kh^T  (contraction on last dims, no explicit .T)
                s = jax.lax.dot_general(qh, kh, (((1,), (1,)), ((), ())),
                                        preferred_element_type=f32)        # (S, S)
                s = s - jnp.max(s, axis=-1, keepdims=True)
                probs = jnp.exp(s)
                probs = probs * pl.reciprocal(
                    jnp.sum(probs, axis=-1, keepdims=True), approx=True)
                pv = jnp.dot(probs.astype(bf16), vh,
                             preferred_element_type=f32)                   # (S, hd)
                acc = acc + jnp.dot(pv.astype(bf16), wo[c0:c0 + head_dim, :],
                                    preferred_element_type=f32)            # (S, D)
            attn_rows.append(acc)
        attn = jnp.concatenate(attn_rows, axis=0) if batch > 1 else attn_rows[0]
        attn = attn + bo

        # residual + LayerNorm1 (post-norm)
        y = _layernorm(x + attn, ln1_g, ln1_b)

        # FFN: linear1 -> relu -> linear2 (dropout == identity in eval)
        h1 = jnp.dot(y.astype(bf16), w1, preferred_element_type=f32) + b1
        h1 = jnp.maximum(h1, 0.0)
        h2 = jnp.dot(h1.astype(bf16), w2, preferred_element_type=f32) + b2

        # residual + LayerNorm2
        x = _layernorm(y + h2, ln2_g, ln2_b)

    out_ref[...] = x.astype(out_ref.dtype)


def transformer_encoder(src_sbd, pos_sbd, packed):
    """Equivalent of TransformerEncoder.forward(src, mask=None,
    src_key_padding_mask=None, pos=pos) with norm=None (post-norm config).

    src_sbd, pos_sbd: (S, B, D) -- PyTorch seq-first convention.
    packed: dict from pack_params() (layer-stacked, fused weights).
    """
    s, b, d = src_sbd.shape
    x2d = jnp.transpose(src_sbd, (1, 0, 2)).reshape(b * s, d)
    p2d = jnp.transpose(pos_sbd, (1, 0, 2)).reshape(b * s, d)

    kernel = functools.partial(_encoder_kernel, nhead=NHEAD, head_dim=HEAD_DIM,
                               batch=b, seq=s)
    vmem = pl.BlockSpec(memory_space=pltpu.MemorySpace.VMEM)   # whole array in VMEM

    out2d = pl.pallas_call(
        kernel,
        out_shape=jax.ShapeDtypeStruct((b * s, d), jnp.float32),
        in_specs=[vmem] * 8,
        out_specs=vmem,
    )(x2d, p2d, packed["wqk"], packed["wv"], packed["wo"],
      packed["w1"], packed["w2"], packed["vecs"])

    return jnp.transpose(out2d.reshape(b, s, d), (1, 0, 2))   # back to (S, B, D)


def init_layer_params(key):
    """Deterministic synthetic parameters for one encoder layer.
    Projection weights are stored pre-transposed (in_dim, out_dim) so the
    kernel computes x @ W + b (matches PyTorch's x @ W.T with W (out, in))."""
    ks = jax.random.split(key, 16)
    f32 = jnp.float32
    sc = 0.05
    n = lambda k, shape: sc * jax.random.normal(k, shape, f32)
    return {
        "wq": n(ks[0], (D_MODEL, D_MODEL)),
        "wk": n(ks[1], (D_MODEL, D_MODEL)),
        "wv": n(ks[2], (D_MODEL, D_MODEL)),
        "bq": n(ks[3], (D_MODEL,)),
        "bk": n(ks[4], (D_MODEL,)),
        "bv": n(ks[5], (D_MODEL,)),
        "wo": n(ks[6], (D_MODEL, D_MODEL)),
        "bo": n(ks[7], (D_MODEL,)),
        "ln1_g": 1.0 + n(ks[8], (D_MODEL,)),
        "ln1_b": n(ks[9], (D_MODEL,)),
        "w1": n(ks[10], (D_MODEL, DIM_FF)),
        "b1": n(ks[11], (DIM_FF,)),
        "w2": n(ks[12], (DIM_FF, D_MODEL)),
        "b2": n(ks[13], (D_MODEL,)),
        "ln2_g": 1.0 + n(ks[14], (D_MODEL,)),
        "ln2_b": n(ks[15], (D_MODEL,)),
    }


def pack_params(layer_params):
    """Stack per-layer params along a leading layer axis, fuse Wq||Wk, pack all
    small bias/LN vectors into one (L, 9, VEC_W) slab, and store matmul
    weights as bf16 (f32 accumulation happens in-kernel)."""
    bf16 = jnp.bfloat16
    wqk = jnp.stack([jnp.concatenate([p["wq"], p["wk"]], axis=1)
                     for p in layer_params]).astype(bf16)          # (L, D, 2D)
    wv = jnp.stack([p["wv"] for p in layer_params]).astype(bf16)   # (L, D, D)
    wo = jnp.stack([p["wo"] for p in layer_params]).astype(bf16)   # (L, D, D)
    w1 = jnp.stack([p["w1"] for p in layer_params]).astype(bf16)   # (L, D, FF)
    w2 = jnp.stack([p["w2"] for p in layer_params]).astype(bf16)   # (L, FF, D)

    def rows(p):
        r = jnp.zeros((VEC_ROWS, VEC_W), jnp.float32)
        r = r.at[ROW_BQK, :2 * D_MODEL].set(jnp.concatenate([p["bq"], p["bk"]]))
        r = r.at[ROW_BV, :D_MODEL].set(p["bv"])
        r = r.at[ROW_BO, :D_MODEL].set(p["bo"])
        r = r.at[ROW_LN1G, :D_MODEL].set(p["ln1_g"])
        r = r.at[ROW_LN1B, :D_MODEL].set(p["ln1_b"])
        r = r.at[ROW_B1, :DIM_FF].set(p["b1"])
        r = r.at[ROW_B2, :D_MODEL].set(p["b2"])
        r = r.at[ROW_LN2G, :D_MODEL].set(p["ln2_g"])
        r = r.at[ROW_LN2B, :D_MODEL].set(p["ln2_b"])
        return r

    vecs = jnp.stack([rows(p) for p in layer_params])              # (L, 9, VEC_W)
    return {"wqk": wqk, "wv": wv, "wo": wo, "w1": w1, "w2": w2, "vecs": vecs}


def _reference_encoder(src_sbd, pos_sbd, layer_params):
    """Pure-JAX f32 reference of the PyTorch post-norm encoder (for checking)."""
    x = jnp.transpose(src_sbd, (1, 0, 2)).astype(jnp.float32)      # (B, S, D)
    pos = jnp.transpose(pos_sbd, (1, 0, 2)).astype(jnp.float32)
    scale = 1.0 / math.sqrt(HEAD_DIM)
    for p in layer_params:
        qk_in = x + pos
        q = qk_in @ p["wq"] + p["bq"]
        k = qk_in @ p["wk"] + p["bk"]
        v = x @ p["wv"] + p["bv"]
        b_, s_, _ = x.shape
        qh = q.reshape(b_, s_, NHEAD, HEAD_DIM).transpose(0, 2, 1, 3) * scale
        kh = k.reshape(b_, s_, NHEAD, HEAD_DIM).transpose(0, 2, 1, 3)
        vh = v.reshape(b_, s_, NHEAD, HEAD_DIM).transpose(0, 2, 1, 3)
        sc = jnp.einsum("bhqd,bhkd->bhqk", qh, kh)
        pr = jax.nn.softmax(sc, axis=-1)
        o = jnp.einsum("bhqk,bhkd->bhqd", pr, vh)
        o = o.transpose(0, 2, 1, 3).reshape(b_, s_, D_MODEL)
        o = o @ p["wo"] + p["bo"]
        x = _layernorm(x + o, p["ln1_g"], p["ln1_b"])
        h = jnp.maximum(x @ p["w1"] + p["b1"], 0.0)
        h = h @ p["w2"] + p["b2"]
        x = _layernorm(x + h, p["ln2_g"], p["ln2_b"])
    return jnp.transpose(x, (1, 0, 2))


if __name__ == "__main__":
    key = jax.random.PRNGKey(0)
    k_src, k_pos, k_params = jax.random.split(key, 3)

    src = jax.random.normal(k_src, (S, B, D_MODEL), jnp.float32)   # (S, B, D)
    pos = jax.random.normal(k_pos, (S, B, D_MODEL), jnp.float32)   # (S, B, D)

    layer_keys = jax.random.split(k_params, NUM_LAYERS)
    layer_params = [init_layer_params(k) for k in layer_keys]
    packed = pack_params(layer_params)

    out = transformer_encoder(src, pos, packed)
    out = jax.block_until_ready(out)

    assert out.shape == (S, B, D_MODEL)
    assert bool(jnp.all(jnp.isfinite(out)))

    ref = _reference_encoder(src, pos, layer_params)
    max_err = float(jnp.max(jnp.abs(out - ref)))
    assert max_err < 3e-2, f"kernel/reference mismatch: max abs err {max_err}"

    print("KERNEL_OK")
</pallas_src>

<mosaic_0001>
module attributes {stable_mosaic.version = 11 : i64} {
  func.func @_encoder_kernel(%arg0: memref<16x32xf32, #tpu.memory_space<vmem>>, %arg1: memref<16x32xf32, #tpu.memory_space<vmem>>, %arg2: memref<2x32x64xbf16, #tpu.memory_space<vmem>>, %arg3: memref<2x32x32xbf16, #tpu.memory_space<vmem>>, %arg4: memref<2x32x32xbf16, #tpu.memory_space<vmem>>, %arg5: memref<2x32x64xbf16, #tpu.memory_space<vmem>>, %arg6: memref<2x64x32xbf16, #tpu.memory_space<vmem>>, %arg7: memref<2x9x64xf32, #tpu.memory_space<vmem>>, %arg8: memref<16x32xf32, #tpu.memory_space<vmem>>) attributes {dimension_semantics = [], scalar_prefetch = 0 : i64, scratch_operands = 0 : i64, tpu.core_type = #tpu.core_type<tc>} {
    %c0 = arith.constant 0 : index
    %c0_0 = arith.constant 0 : index
    %0 = vector.load %arg0[%c0, %c0_0] : memref<16x32xf32, #tpu.memory_space<vmem>>, vector<16x32xf32>
    %c0_1 = arith.constant 0 : index
    %c0_2 = arith.constant 0 : index
    %1 = vector.load %arg1[%c0_1, %c0_2] : memref<16x32xf32, #tpu.memory_space<vmem>>, vector<16x32xf32>
    %c0_3 = arith.constant 0 : index
    %c0_4 = arith.constant 0 : index
    %c0_5 = arith.constant 0 : index
    %2 = vector.load %arg2[%c0_3, %c0_4, %c0_5] : memref<2x32x64xbf16, #tpu.memory_space<vmem>>, vector<1x32x64xbf16>
    %3 = vector.shape_cast %2 : vector<1x32x64xbf16> to vector<32x64xbf16>
    %c0_6 = arith.constant 0 : index
    %c0_7 = arith.constant 0 : index
    %c0_8 = arith.constant 0 : index
    %4 = vector.load %arg3[%c0_6, %c0_7, %c0_8] : memref<2x32x32xbf16, #tpu.memory_space<vmem>>, vector<1x32x32xbf16>
    %5 = vector.shape_cast %4 : vector<1x32x32xbf16> to vector<32x32xbf16>
    %c0_9 = arith.constant 0 : index
    %c0_10 = arith.constant 0 : index
    %c0_11 = arith.constant 0 : index
    %6 = vector.load %arg4[%c0_9, %c0_10, %c0_11] : memref<2x32x32xbf16, #tpu.memory_space<vmem>>, vector<1x32x32xbf16>
    %7 = vector.shape_cast %6 : vector<1x32x32xbf16> to vector<32x32xbf16>
    %c0_12 = arith.constant 0 : index
    %c0_13 = arith.constant 0 : index
    %c0_14 = arith.constant 0 : index
    %8 = vector.load %arg5[%c0_12, %c0_13, %c0_14] : memref<2x32x64xbf16, #tpu.memory_space<vmem>>, vector<1x32x64xbf16>
    %9 = vector.shape_cast %8 : vector<1x32x64xbf16> to vector<32x64xbf16>
    %c0_15 = arith.constant 0 : index
    %c0_16 = arith.constant 0 : index
    %c0_17 = arith.constant 0 : index
    %10 = vector.load %arg6[%c0_15, %c0_16, %c0_17] : memref<2x64x32xbf16, #tpu.memory_space<vmem>>, vector<1x64x32xbf16>
    %11 = vector.shape_cast %10 : vector<1x64x32xbf16> to vector<64x32xbf16>
    %c0_18 = arith.constant 0 : index
    %c0_19 = arith.constant 0 : index
    %c0_20 = arith.constant 0 : index
    %12 = vector.load %arg7[%c0_18, %c0_19, %c0_20] : memref<2x9x64xf32, #tpu.memory_space<vmem>>, vector<1x9x64xf32>
    %13 = vector.shape_cast %12 : vector<1x9x64xf32> to vector<9x64xf32>
    %14 = vector.extract_strided_slice %13 {offsets = [0, 0], sizes = [1, 64], strides = [1, 1]} : vector<9x64xf32> to vector<1x64xf32>
    %15 = vector.extract_strided_slice %13 {offsets = [1, 0], sizes = [1, 32], strides = [1, 1]} : vector<9x64xf32> to vector<1x32xf32>
    %16 = vector.extract_strided_slice %13 {offsets = [2, 0], sizes = [1, 32], strides = [1, 1]} : vector<9x64xf32> to vector<1x32xf32>
    %17 = vector.extract_strided_slice %13 {offsets = [3, 0], sizes = [1, 32], strides = [1, 1]} : vector<9x64xf32> to vector<1x32xf32>
    %18 = vector.extract_strided_slice %13 {offsets = [4, 0], sizes = [1, 32], strides = [1, 1]} : vector<9x64xf32> to vector<1x32xf32>
    %19 = vector.extract_strided_slice %13 {offsets = [5, 0], sizes = [1, 64], strides = [1, 1]} : vector<9x64xf32> to vector<1x64xf32>
    %20 = vector.extract_strided_slice %13 {offsets = [6, 0], sizes = [1, 32], strides = [1, 1]} : vector<9x64xf32> to vector<1x32xf32>
    %21 = vector.extract_strided_slice %13 {offsets = [7, 0], sizes = [1, 32], strides = [1, 1]} : vector<9x64xf32> to vector<1x32xf32>
    %22 = vector.extract_strided_slice %13 {offsets = [8, 0], sizes = [1, 32], strides = [1, 1]} : vector<9x64xf32> to vector<1x32xf32>
    %23 = arith.addf %0, %1 : vector<16x32xf32>
    %24 = arith.truncf %23 : vector<16x32xf32> to vector<16x32xbf16>
    %cst = arith.constant dense<0.000000e+00> : vector<16x64xf32>
    %25 = tpu.matmul %24, %3, %cst {dimension_numbers = #tpu.dot_dimension_numbers<[1], [0], [0], [1], [0, 0, 1, 1], [], []>} : vector<16x32xbf16>, vector<32x64xbf16>, vector<16x64xf32> -> vector<16x64xf32>
    %26 = vector.broadcast %14 : vector<1x64xf32> to vector<16x64xf32>
    %27 = arith.addf %25, %26 : vector<16x64xf32>
    %28 = arith.truncf %0 : vector<16x32xf32> to vector<16x32xbf16>
    %cst_21 = arith.constant dense<0.000000e+00> : vector<16x32xf32>
    %29 = tpu.matmul %28, %5, %cst_21 {dimension_numbers = #tpu.dot_dimension_numbers<[1], [0], [0], [1], [0, 0, 1, 1], [], []>} : vector<16x32xbf16>, vector<32x32xbf16>, vector<16x32xf32> -> vector<16x32xf32>
    %30 = vector.broadcast %15 : vector<1x32xf32> to vector<16x32xf32>
    %31 = arith.addf %29, %30 : vector<16x32xf32>
    %32 = vector.extract_strided_slice %27 {offsets = [0, 0], sizes = [16, 32], strides = [1, 1]} : vector<16x64xf32> to vector<16x32xf32>
    %cst_22 = arith.constant 0.353553385 : f32
    %33 = vector.broadcast %cst_22 : f32 to vector<16x32xf32>
    %34 = arith.mulf %32, %33 : vector<16x32xf32>
    %35 = arith.truncf %34 : vector<16x32xf32> to vector<16x32xbf16>
    %36 = vector.extract_strided_slice %27 {offsets = [0, 32], sizes = [16, 32], strides = [1, 1]} : vector<16x64xf32> to vector<16x32xf32>
    %37 = arith.truncf %36 : vector<16x32xf32> to vector<16x32xbf16>
    %38 = arith.truncf %31 : vector<16x32xf32> to vector<16x32xbf16>
    %cst_23 = arith.constant 0.000000e+00 : f32
    %39 = vector.broadcast %cst_23 : f32 to vector<8x32xf32>
    %40 = vector.extract_strided_slice %35 {offsets = [0, 0], sizes = [8, 8], strides = [1, 1]} : vector<16x32xbf16> to vector<8x8xbf16>
    %41 = vector.extract_strided_slice %37 {offsets = [0, 0], sizes = [8, 8], strides = [1, 1]} : vector<16x32xbf16> to vector<8x8xbf16>
    %42 = vector.extract_strided_slice %38 {offsets = [0, 0], sizes = [8, 8], strides = [1, 1]} : vector<16x32xbf16> to vector<8x8xbf16>
    %cst_24 = arith.constant dense<0.000000e+00> : vector<8x8xf32>
    %43 = tpu.matmul %40, %41, %cst_24 {dimension_numbers = #tpu.dot_dimension_numbers<[1], [1], [0], [0], [0, 0, 1, 0], [], []>} : vector<8x8xbf16>, vector<8x8xbf16>, vector<8x8xf32> -> vector<8x8xf32>
    %cst_25 = arith.constant dense<0xFF800000> : vector<8xf32>
    %44 = vector.multi_reduction <maximumf>, %43, %cst_25 [1] : vector<8x8xf32> to vector<8xf32>
    %45 = vector.shape_cast %44 : vector<8xf32> to vector<8x1xf32>
    %46 = vector.broadcast %45 : vector<8x1xf32> to vector<8x8xf32>
    %47 = arith.subf %43, %46 : vector<8x8xf32>
    %48 = math.exp %47 : vector<8x8xf32>
    %cst_26 = arith.constant dense<0.000000e+00> : vector<8xf32>
    %49 = vector.multi_reduction <add>, %48, %cst_26 [1] : vector<8x8xf32> to vector<8xf32>
    %50 = vector.shape_cast %49 : vector<8xf32> to vector<8x1xf32>
    %51 = tpu.reciprocal %50 {approx = true} : vector<8x1xf32> -> vector<8x1xf32>
    %52 = vector.broadcast %51 : vector<8x1xf32> to vector<8x8xf32>
    %53 = arith.mulf %48, %52 : vector<8x8xf32>
    %54 = arith.truncf %53 : vector<8x8xf32> to vector<8x8xbf16>
    %cst_27 = arith.constant dense<0.000000e+00> : vector<8x8xf32>
    %55 = tpu.matmul %54, %42, %cst_27 {dimension_numbers = #tpu.dot_dimension_numbers<[1], [0], [0], [1], [0, 0, 1, 1], [], []>} : vector<8x8xbf16>, vector<8x8xbf16>, vector<8x8xf32> -> vector<8x8xf32>
    %56 = arith.truncf %55 : vector<8x8xf32> to vector<8x8xbf16>
    %57 = vector.extract_strided_slice %7 {offsets = [0, 0], sizes = [8, 32], strides = [1, 1]} : vector<32x32xbf16> to vector<8x32xbf16>
    %cst_28 = arith.constant dense<0.000000e+00> : vector<8x32xf32>
    %58 = tpu.matmul %56, %57, %cst_28 {dimension_numbers = #tpu.dot_dimension_numbers<[1], [0], [0], [1], [0, 0, 1, 1], [], []>} : vector<8x8xbf16>, vector<8x32xbf16>, vector<8x32xf32> -> vector<8x32xf32>
    %59 = arith.addf %39, %58 : vector<8x32xf32>
    %60 = vector.extract_strided_slice %35 {offsets = [0, 8], sizes = [8, 8], strides = [1, 1]} : vector<16x32xbf16> to vector<8x8xbf16>
    %61 = vector.extract_strided_slice %37 {offsets = [0, 8], sizes = [8, 8], strides = [1, 1]} : vector<16x32xbf16> to vector<8x8xbf16>
    %62 = vector.extract_strided_slice %38 {offsets = [0, 8], sizes = [8, 8], strides = [1, 1]} : vector<16x32xbf16> to vector<8x8xbf16>
    %cst_29 = arith.constant dense<0.000000e+00> : vector<8x8xf32>
    %63 = tpu.matmul %60, %61, %cst_29 {dimension_numbers = #tpu.dot_dimension_numbers<[1], [1], [0], [0], [0, 0, 1, 0], [], []>} : vector<8x8xbf16>, vector<8x8xbf16>, vector<8x8xf32> -> vector<8x8xf32>
    %cst_30 = arith.constant dense<0xFF800000> : vector<8xf32>
    %64 = vector.multi_reduction <maximumf>, %63, %cst_30 [1] : vector<8x8xf32> to vector<8xf32>
    %65 = vector.shape_cast %64 : vector<8xf32> to vector<8x1xf32>
    %66 = vector.broadcast %65 : vector<8x1xf32> to vector<8x8xf32>
    %67 = arith.subf %63, %66 : vector<8x8xf32>
    %68 = math.exp %67 : vector<8x8xf32>
    %cst_31 = arith.constant dense<0.000000e+00> : vector<8xf32>
    %69 = vector.multi_reduction <add>, %68, %cst_31 [1] : vector<8x8xf32> to vector<8xf32>
    %70 = vector.shape_cast %69 : vector<8xf32> to vector<8x1xf32>
    %71 = tpu.reciprocal %70 {approx = true} : vector<8x1xf32> -> vector<8x1xf32>
    %72 = vector.broadcast %71 : vector<8x1xf32> to vector<8x8xf32>
    %73 = arith.mulf %68, %72 : vector<8x8xf32>
    %74 = arith.truncf %73 : vector<8x8xf32> to vector<8x8xbf16>
    %cst_32 = arith.constant dense<0.000000e+00> : vector<8x8xf32>
    %75 = tpu.matmul %74, %62, %cst_32 {dimension_numbers = #tpu.dot_dimension_numbers<[1], [0], [0], [1], [0, 0, 1, 1], [], []>} : vector<8x8xbf16>, vector<8x8xbf16>, vector<8x8xf32> -> vector<8x8xf32>
    %76 = arith.truncf %75 : vector<8x8xf32> to vector<8x8xbf16>
    %77 = vector.extract_strided_slice %7 {offsets = [8, 0], sizes = [8, 32], strides = [1, 1]} : vector<32x32xbf16> to vector<8x32xbf16>
    %cst_33 = arith.constant dense<0.000000e+00> : vector<8x32xf32>
    %78 = tpu.matmul %76, %77, %cst_33 {dimension_numbers = #tpu.dot_dimension_numbers<[1], [0], [0], [1], [0, 0, 1, 1], [], []>} : vector<8x8xbf16>, vector<8x32xbf16>, vector<8x32xf32> -> vector<8x32xf32>
    %79 = arith.addf %59, %78 : vector<8x32xf32>
    %80 = vector.extract_strided_slice %35 {offsets = [0, 16], sizes = [8, 8], strides = [1, 1]} : vector<16x32xbf16> to vector<8x8xbf16>
    %81 = vector.extract_strided_slice %37 {offsets = [0, 16], sizes = [8, 8], strides = [1, 1]} : vector<16x32xbf16> to vector<8x8xbf16>
    %82 = vector.extract_strided_slice %38 {offsets = [0, 16], sizes = [8, 8], strides = [1, 1]} : vector<16x32xbf16> to vector<8x8xbf16>
    %cst_34 = arith.constant dense<0.000000e+00> : vector<8x8xf32>
    %83 = tpu.matmul %80, %81, %cst_34 {dimension_numbers = #tpu.dot_dimension_numbers<[1], [1], [0], [0], [0, 0, 1, 0], [], []>} : vector<8x8xbf16>, vector<8x8xbf16>, vector<8x8xf32> -> vector<8x8xf32>
    %cst_35 = arith.constant dense<0xFF800000> : vector<8xf32>
    %84 = vector.multi_reduction <maximumf>, %83, %cst_35 [1] : vector<8x8xf32> to vector<8xf32>
    %85 = vector.shape_cast %84 : vector<8xf32> to vector<8x1xf32>
    %86 = vector.broadcast %85 : vector<8x1xf32> to vector<8x8xf32>
    %87 = arith.subf %83, %86 : vector<8x8xf32>
    %88 = math.exp %87 : vector<8x8xf32>
    %cst_36 = arith.constant dense<0.000000e+00> : vector<8xf32>
    %89 = vector.multi_reduction <add>, %88, %cst_36 [1] : vector<8x8xf32> to vector<8xf32>
    %90 = vector.shape_cast %89 : vector<8xf32> to vector<8x1xf32>
    %91 = tpu.reciprocal %90 {approx = true} : vector<8x1xf32> -> vector<8x1xf32>
    %92 = vector.broadcast %91 : vector<8x1xf32> to vector<8x8xf32>
    %93 = arith.mulf %88, %92 : vector<8x8xf32>
    %94 = arith.truncf %93 : vector<8x8xf32> to vector<8x8xbf16>
    %cst_37 = arith.constant dense<0.000000e+00> : vector<8x8xf32>
    %95 = tpu.matmul %94, %82, %cst_37 {dimension_numbers = #tpu.dot_dimension_numbers<[1], [0], [0], [1], [0, 0, 1, 1], [], []>} : vector<8x8xbf16>, vector<8x8xbf16>, vector<8x8xf32> -> vector<8x8xf32>
    %96 = arith.truncf %95 : vector<8x8xf32> to vector<8x8xbf16>
    %97 = vector.extract_strided_slice %7 {offsets = [16, 0], sizes = [8, 32], strides = [1, 1]} : vector<32x32xbf16> to vector<8x32xbf16>
    %cst_38 = arith.constant dense<0.000000e+00> : vector<8x32xf32>
    %98 = tpu.matmul %96, %97, %cst_38 {dimension_numbers = #tpu.dot_dimension_numbers<[1], [0], [0], [1], [0, 0, 1, 1], [], []>} : vector<8x8xbf16>, vector<8x32xbf16>, vector<8x32xf32> -> vector<8x32xf32>
    %99 = arith.addf %79, %98 : vector<8x32xf32>
    %100 = vector.extract_strided_slice %35 {offsets = [0, 24], sizes = [8, 8], strides = [1, 1]} : vector<16x32xbf16> to vector<8x8xbf16>
    %101 = vector.extract_strided_slice %37 {offsets = [0, 24], sizes = [8, 8], strides = [1, 1]} : vector<16x32xbf16> to vector<8x8xbf16>
    %102 = vector.extract_strided_slice %38 {offsets = [0, 24], sizes = [8, 8], strides = [1, 1]} : vector<16x32xbf16> to vector<8x8xbf16>
    %cst_39 = arith.constant dense<0.000000e+00> : vector<8x8xf32>
    %103 = tpu.matmul %100, %101, %cst_39 {dimension_numbers = #tpu.dot_dimension_numbers<[1], [1], [0], [0], [0, 0, 1, 0], [], []>} : vector<8x8xbf16>, vector<8x8xbf16>, vector<8x8xf32> -> vector<8x8xf32>
    %cst_40 = arith.constant dense<0xFF800000> : vector<8xf32>
    %104 = vector.multi_reduction <maximumf>, %103, %cst_40 [1] : vector<8x8xf32> to vector<8xf32>
    %105 = vector.shape_cast %104 : vector<8xf32> to vector<8x1xf32>
    %106 = vector.broadcast %105 : vector<8x1xf32> to vector<8x8xf32>
    %107 = arith.subf %103, %106 : vector<8x8xf32>
    %108 = math.exp %107 : vector<8x8xf32>
    %cst_41 = arith.constant dense<0.000000e+00> : vector<8xf32>
    %109 = vector.multi_reduction <add>, %108, %cst_41 [1] : vector<8x8xf32> to vector<8xf32>
    %110 = vector.shape_cast %109 : vector<8xf32> to vector<8x1xf32>
    %111 = tpu.reciprocal %110 {approx = true} : vector<8x1xf32> -> vector<8x1xf32>
    %112 = vector.broadcast %111 : vector<8x1xf32> to vector<8x8xf32>
    %113 = arith.mulf %108, %112 : vector<8x8xf32>
    %114 = arith.truncf %113 : vector<8x8xf32> to vector<8x8xbf16>
    %cst_42 = arith.constant dense<0.000000e+00> : vector<8x8xf32>
    %115 = tpu.matmul %114, %102, %cst_42 {dimension_numbers = #tpu.dot_dimension_numbers<[1], [0], [0], [1], [0, 0, 1, 1], [], []>} : vector<8x8xbf16>, vector<8x8xbf16>, vector<8x8xf32> -> vector<8x8xf32>
    %116 = arith.truncf %115 : vector<8x8xf32> to vector<8x8xbf16>
    %117 = vector.extract_strided_slice %7 {offsets = [24, 0], sizes = [8, 32], strides = [1, 1]} : vector<32x32xbf16> to vector<8x32xbf16>
    %cst_43 = arith.constant dense<0.000000e+00> : vector<8x32xf32>
    %118 = tpu.matmul %116, %117, %cst_43 {dimension_numbers = #tpu.dot_dimension_numbers<[1], [0], [0], [1], [0, 0, 1, 1], [], []>} : vector<8x8xbf16>, vector<8x32xbf16>, vector<8x32xf32> -> vector<8x32xf32>
    %119 = arith.addf %99, %118 : vector<8x32xf32>
    %cst_44 = arith.constant 0.000000e+00 : f32
    %120 = vector.broadcast %cst_44 : f32 to vector<8x32xf32>
    %121 = vector.extract_strided_slice %35 {offsets = [8, 0], sizes = [8, 8], strides = [1, 1]} : vector<16x32xbf16> to vector<8x8xbf16>
    %122 = vector.extract_strided_slice %37 {offsets = [8, 0], sizes = [8, 8], strides = [1, 1]} : vector<16x32xbf16> to vector<8x8xbf16>
    %123 = vector.extract_strided_slice %38 {offsets = [8, 0], sizes = [8, 8], strides = [1, 1]} : vector<16x32xbf16> to vector<8x8xbf16>
    %cst_45 = arith.constant dense<0.000000e+00> : vector<8x8xf32>
    %124 = tpu.matmul %121, %122, %cst_45 {dimension_numbers = #tpu.dot_dimension_numbers<[1], [1], [0], [0], [0, 0, 1, 0], [], []>} : vector<8x8xbf16>, vector<8x8xbf16>, vector<8x8xf32> -> vector<8x8xf32>
    %cst_46 = arith.constant dense<0xFF800000> : vector<8xf32>
    %125 = vector.multi_reduction <maximumf>, %124, %cst_46 [1] : vector<8x8xf32> to vector<8xf32>
    %126 = vector.shape_cast %125 : vector<8xf32> to vector<8x1xf32>
    %127 = vector.broadcast %126 : vector<8x1xf32> to vector<8x8xf32>
    %128 = arith.subf %124, %127 : vector<8x8xf32>
    %129 = math.exp %128 : vector<8x8xf32>
    %cst_47 = arith.constant dense<0.000000e+00> : vector<8xf32>
    %130 = vector.multi_reduction <add>, %129, %cst_47 [1] : vector<8x8xf32> to vector<8xf32>
    %131 = vector.shape_cast %130 : vector<8xf32> to vector<8x1xf32>
    %132 = tpu.reciprocal %131 {approx = true} : vector<8x1xf32> -> vector<8x1xf32>
    %133 = vector.broadcast %132 : vector<8x1xf32> to vector<8x8xf32>
    %134 = arith.mulf %129, %133 : vector<8x8xf32>
    %135 = arith.truncf %134 : vector<8x8xf32> to vector<8x8xbf16>
    %cst_48 = arith.constant dense<0.000000e+00> : vector<8x8xf32>
    %136 = tpu.matmul %135, %123, %cst_48 {dimension_numbers = #tpu.dot_dimension_numbers<[1], [0], [0], [1], [0, 0, 1, 1], [], []>} : vector<8x8xbf16>, vector<8x8xbf16>, vector<8x8xf32> -> vector<8x8xf32>
    %137 = arith.truncf %136 : vector<8x8xf32> to vector<8x8xbf16>
    %138 = vector.extract_strided_slice %7 {offsets = [0, 0], sizes = [8, 32], strides = [1, 1]} : vector<32x32xbf16> to vector<8x32xbf16>
    %cst_49 = arith.constant dense<0.000000e+00> : vector<8x32xf32>
    %139 = tpu.matmul %137, %138, %cst_49 {dimension_numbers = #tpu.dot_dimension_numbers<[1], [0], [0], [1], [0, 0, 1, 1], [], []>} : vector<8x8xbf16>, vector<8x32xbf16>, vector<8x32xf32> -> vector<8x32xf32>
    %140 = arith.addf %120, %139 : vector<8x32xf32>
    %141 = vector.extract_strided_slice %35 {offsets = [8, 8], sizes = [8, 8], strides = [1, 1]} : vector<16x32xbf16> to vector<8x8xbf16>
    %142 = vector.extract_strided_slice %37 {offsets = [8, 8], sizes = [8, 8], strides = [1, 1]} : vector<16x32xbf16> to vector<8x8xbf16>
    %143 = vector.extract_strided_slice %38 {offsets = [8, 8], sizes = [8, 8], strides = [1, 1]} : vector<16x32xbf16> to vector<8x8xbf16>
    %cst_50 = arith.constant dense<0.000000e+00> : vector<8x8xf32>
    %144 = tpu.matmul %141, %142, %cst_50 {dimension_numbers = #tpu.dot_dimension_numbers<[1], [1], [0], [0], [0, 0, 1, 0], [], []>} : vector<8x8xbf16>, vector<8x8xbf16>, vector<8x8xf32> -> vector<8x8xf32>
    %cst_51 = arith.constant dense<0xFF800000> : vector<8xf32>
    %145 = vector.multi_reduction <maximumf>, %144, %cst_51 [1] : vector<8x8xf32> to vector<8xf32>
    %146 = vector.shape_cast %145 : vector<8xf32> to vector<8x1xf32>
    %147 = vector.broadcast %146 : vector<8x1xf32> to vector<8x8xf32>
    %148 = arith.subf %144, %147 : vector<8x8xf32>
    %149 = math.exp %148 : vector<8x8xf32>
    %cst_52 = arith.constant dense<0.000000e+00> : vector<8xf32>
    %150 = vector.multi_reduction <add>, %149, %cst_52 [1] : vector<8x8xf32> to vector<8xf32>
    %151 = vector.shape_cast %150 : vector<8xf32> to vector<8x1xf32>
    %152 = tpu.reciprocal %151 {approx = true} : vector<8x1xf32> -> vector<8x1xf32>
    %153 = vector.broadcast %152 : vector<8x1xf32> to vector<8x8xf32>
    %154 = arith.mulf %149, %153 : vector<8x8xf32>
    %155 = arith.truncf %154 : vector<8x8xf32> to vector<8x8xbf16>
    %cst_53 = arith.constant dense<0.000000e+00> : vector<8x8xf32>
    %156 = tpu.matmul %155, %143, %cst_53 {dimension_numbers = #tpu.dot_dimension_numbers<[1], [0], [0], [1], [0, 0, 1, 1], [], []>} : vector<8x8xbf16>, vector<8x8xbf16>, vector<8x8xf32> -> vector<8x8xf32>
    %157 = arith.truncf %156 : vector<8x8xf32> to vector<8x8xbf16>
    %158 = vector.extract_strided_slice %7 {offsets = [8, 0], sizes = [8, 32], strides = [1, 1]} : vector<32x32xbf16> to vector<8x32xbf16>
    %cst_54 = arith.constant dense<0.000000e+00> : vector<8x32xf32>
    %159 = tpu.matmul %157, %158, %cst_54 {dimension_numbers = #tpu.dot_dimension_numbers<[1], [0], [0], [1], [0, 0, 1, 1], [], []>} : vector<8x8xbf16>, vector<8x32xbf16>, vector<8x32xf32> -> vector<8x32xf32>
    %160 = arith.addf %140, %159 : vector<8x32xf32>
    %161 = vector.extract_strided_slice %35 {offsets = [8, 16], sizes = [8, 8], strides = [1, 1]} : vector<16x32xbf16> to vector<8x8xbf16>
    %162 = vector.extract_strided_slice %37 {offsets = [8, 16], sizes = [8, 8], strides = [1, 1]} : vector<16x32xbf16> to vector<8x8xbf16>
    %163 = vector.extract_strided_slice %38 {offsets = [8, 16], sizes = [8, 8], strides = [1, 1]} : vector<16x32xbf16> to vector<8x8xbf16>
    %cst_55 = arith.constant dense<0.000000e+00> : vector<8x8xf32>
    %164 = tpu.matmul %161, %162, %cst_55 {dimension_numbers = #tpu.dot_dimension_numbers<[1], [1], [0], [0], [0, 0, 1, 0], [], []>} : vector<8x8xbf16>, vector<8x8xbf16>, vector<8x8xf32> -> vector<8x8xf32>
    %cst_56 = arith.constant dense<0xFF800000> : vector<8xf32>
    %165 = vector.multi_reduction <maximumf>, %164, %cst_56 [1] : vector<8x8xf32> to vector<8xf32>
    %166 = vector.shape_cast %165 : vector<8xf32> to vector<8x1xf32>
    %167 = vector.broadcast %166 : vector<8x1xf32> to vector<8x8xf32>
    %168 = arith.subf %164, %167 : vector<8x8xf32>
    %169 = math.exp %168 : vector<8x8xf32>
    %cst_57 = arith.constant dense<0.000000e+00> : vector<8xf32>
    %170 = vector.multi_reduction <add>, %169, %cst_57 [1] : vector<8x8xf32> to vector<8xf32>
    %171 = vector.shape_cast %170 : vector<8xf32> to vector<8x1xf32>
    %172 = tpu.reciprocal %171 {approx = true} : vector<8x1xf32> -> vector<8x1xf32>
    %173 = vector.broadcast %172 : vector<8x1xf32> to vector<8x8xf32>
    %174 = arith.mulf %169, %173 : vector<8x8xf32>
    %175 = arith.truncf %174 : vector<8x8xf32> to vector<8x8xbf16>
    %cst_58 = arith.constant dense<0.000000e+00> : vector<8x8xf32>
    %176 = tpu.matmul %175, %163, %cst_58 {dimension_numbers = #tpu.dot_dimension_numbers<[1], [0], [0], [1], [0, 0, 1, 1], [], []>} : vector<8x8xbf16>, vector<8x8xbf16>, vector<8x8xf32> -> vector<8x8xf32>
    %177 = arith.truncf %176 : vector<8x8xf32> to vector<8x8xbf16>
    %178 = vector.extract_strided_slice %7 {offsets = [16, 0], sizes = [8, 32], strides = [1, 1]} : vector<32x32xbf16> to vector<8x32xbf16>
    %cst_59 = arith.constant dense<0.000000e+00> : vector<8x32xf32>
    %179 = tpu.matmul %177, %178, %cst_59 {dimension_numbers = #tpu.dot_dimension_numbers<[1], [0], [0], [1], [0, 0, 1, 1], [], []>} : vector<8x8xbf16>, vector<8x32xbf16>, vector<8x32xf32> -> vector<8x32xf32>
    %180 = arith.addf %160, %179 : vector<8x32xf32>
    %181 = vector.extract_strided_slice %35 {offsets = [8, 24], sizes = [8, 8], strides = [1, 1]} : vector<16x32xbf16> to vector<8x8xbf16>
    %182 = vector.extract_strided_slice %37 {offsets = [8, 24], sizes = [8, 8], strides = [1, 1]} : vector<16x32xbf16> to vector<8x8xbf16>
    %183 = vector.extract_strided_slice %38 {offsets = [8, 24], sizes = [8, 8], strides = [1, 1]} : vector<16x32xbf16> to vector<8x8xbf16>
    %cst_60 = arith.constant dense<0.000000e+00> : vector<8x8xf32>
    %184 = tpu.matmul %181, %182, %cst_60 {dimension_numbers = #tpu.dot_dimension_numbers<[1], [1], [0], [0], [0, 0, 1, 0], [], []>} : vector<8x8xbf16>, vector<8x8xbf16>, vector<8x8xf32> -> vector<8x8xf32>
    %cst_61 = arith.constant dense<0xFF800000> : vector<8xf32>
    %185 = vector.multi_reduction <maximumf>, %184, %cst_61 [1] : vector<8x8xf32> to vector<8xf32>
    %186 = vector.shape_cast %185 : vector<8xf32> to vector<8x1xf32>
    %187 = vector.broadcast %186 : vector<8x1xf32> to vector<8x8xf32>
    %188 = arith.subf %184, %187 : vector<8x8xf32>
    %189 = math.exp %188 : vector<8x8xf32>
    %cst_62 = arith.constant dense<0.000000e+00> : vector<8xf32>
    %190 = vector.multi_reduction <add>, %189, %cst_62 [1] : vector<8x8xf32> to vector<8xf32>
    %191 = vector.shape_cast %190 : vector<8xf32> to vector<8x1xf32>
    %192 = tpu.reciprocal %191 {approx = true} : vector<8x1xf32> -> vector<8x1xf32>
    %193 = vector.broadcast %192 : vector<8x1xf32> to vector<8x8xf32>
    %194 = arith.mulf %189, %193 : vector<8x8xf32>
    %195 = arith.truncf %194 : vector<8x8xf32> to vector<8x8xbf16>
    %cst_63 = arith.constant dense<0.000000e+00> : vector<8x8xf32>
    %196 = tpu.matmul %195, %183, %cst_63 {dimension_numbers = #tpu.dot_dimension_numbers<[1], [0], [0], [1], [0, 0, 1, 1], [], []>} : vector<8x8xbf16>, vector<8x8xbf16>, vector<8x8xf32> -> vector<8x8xf32>
    %197 = arith.truncf %196 : vector<8x8xf32> to vector<8x8xbf16>
    %198 = vector.extract_strided_slice %7 {offsets = [24, 0], sizes = [8, 32], strides = [1, 1]} : vector<32x32xbf16> to vector<8x32xbf16>
    %cst_64 = arith.constant dense<0.000000e+00> : vector<8x32xf32>
    %199 = tpu.matmul %197, %198, %cst_64 {dimension_numbers = #tpu.dot_dimension_numbers<[1], [0], [0], [1], [0, 0, 1, 1], [], []>} : vector<8x8xbf16>, vector<8x32xbf16>, vector<8x32xf32> -> vector<8x32xf32>
    %200 = arith.addf %180, %199 : vector<8x32xf32>
    %201 = tpu.concatenate %119, %200 in 0 : vector<8x32xf32>, vector<8x32xf32> -> vector<16x32xf32>
    %202 = vector.broadcast %16 : vector<1x32xf32> to vector<16x32xf32>
    %203 = arith.addf %201, %202 : vector<16x32xf32>
    %204 = arith.addf %0, %203 : vector<16x32xf32>
    %cst_65 = arith.constant dense<0.000000e+00> : vector<16xf32>
    %205 = vector.multi_reduction <add>, %204, %cst_65 [1] : vector<16x32xf32> to vector<16xf32>
    %206 = vector.shape_cast %205 : vector<16xf32> to vector<16x1xf32>
    %cst_66 = arith.constant 3.200000e+01 : f32
    %207 = vector.broadcast %cst_66 : f32 to vector<16x1xf32>
    %208 = arith.divf %206, %207 : vector<16x1xf32>
    %209 = vector.broadcast %208 : vector<16x1xf32> to vector<16x32xf32>
    %210 = arith.subf %204, %209 : vector<16x32xf32>
    %211 = arith.mulf %210, %210 : vector<16x32xf32>
    %cst_67 = arith.constant dense<0.000000e+00> : vector<16xf32>
    %212 = vector.multi_reduction <add>, %211, %cst_67 [1] : vector<16x32xf32> to vector<16xf32>
    %213 = vector.shape_cast %212 : vector<16xf32> to vector<16x1xf32>
    %cst_68 = arith.constant 3.200000e+01 : f32
    %214 = vector.broadcast %cst_68 : f32 to vector<16x1xf32>
    %215 = arith.divf %213, %214 : vector<16x1xf32>
    %216 = vector.broadcast %208 : vector<16x1xf32> to vector<16x32xf32>
    %217 = arith.subf %204, %216 : vector<16x32xf32>
    %cst_69 = arith.constant 9.99999974E-6 : f32
    %218 = vector.broadcast %cst_69 : f32 to vector<16x1xf32>
    %219 = arith.addf %215, %218 : vector<16x1xf32>
    %220 = math.rsqrt %219 : vector<16x1xf32>
    %221 = vector.broadcast %220 : vector<16x1xf32> to vector<16x32xf32>
    %222 = arith.mulf %217, %221 : vector<16x32xf32>
    %223 = vector.broadcast %17 : vector<1x32xf32> to vector<16x32xf32>
    %224 = arith.mulf %222, %223 : vector<16x32xf32>
    %225 = vector.broadcast %18 : vector<1x32xf32> to vector<16x32xf32>
    %226 = arith.addf %224, %225 : vector<16x32xf32>
    %227 = arith.truncf %226 : vector<16x32xf32> to vector<16x32xbf16>
    %cst_70 = arith.constant dense<0.000000e+00> : vector<16x64xf32>
    %228 = tpu.matmul %227, %9, %cst_70 {dimension_numbers = #tpu.dot_dimension_numbers<[1], [0], [0], [1], [0, 0, 1, 1], [], []>} : vector<16x32xbf16>, vector<32x64xbf16>, vector<16x64xf32> -> vector<16x64xf32>
    %229 = vector.broadcast %19 : vector<1x64xf32> to vector<16x64xf32>
    %230 = arith.addf %228, %229 : vector<16x64xf32>
    %cst_71 = arith.constant 0.000000e+00 : f32
    %231 = vector.broadcast %cst_71 : f32 to vector<16x64xf32>
    %232 = arith.maximumf %230, %231 : vector<16x64xf32>
    %233 = arith.truncf %232 : vector<16x64xf32> to vector<16x64xbf16>
    %cst_72 = arith.constant dense<0.000000e+00> : vector<16x32xf32>
    %234 = tpu.matmul %233, %11, %cst_72 {dimension_numbers = #tpu.dot_dimension_numbers<[1], [0], [0], [1], [0, 0, 1, 1], [], []>} : vector<16x64xbf16>, vector<64x32xbf16>, vector<16x32xf32> -> vector<16x32xf32>
    %235 = vector.broadcast %20 : vector<1x32xf32> to vector<16x32xf32>
    %236 = arith.addf %234, %235 : vector<16x32xf32>
    %237 = arith.addf %226, %236 : vector<16x32xf32>
    %cst_73 = arith.constant dense<0.000000e+00> : vector<16xf32>
    %238 = vector.multi_reduction <add>, %237, %cst_73 [1] : vector<16x32xf32> to vector<16xf32>
    %239 = vector.shape_cast %238 : vector<16xf32> to vector<16x1xf32>
    %cst_74 = arith.constant 3.200000e+01 : f32
    %240 = vector.broadcast %cst_74 : f32 to vector<16x1xf32>
    %241 = arith.divf %239, %240 : vector<16x1xf32>
    %242 = vector.broadcast %241 : vector<16x1xf32> to vector<16x32xf32>
    %243 = arith.subf %237, %242 : vector<16x32xf32>
    %244 = arith.mulf %243, %243 : vector<16x32xf32>
    %cst_75 = arith.constant dense<0.000000e+00> : vector<16xf32>
    %245 = vector.multi_reduction <add>, %244, %cst_75 [1] : vector<16x32xf32> to vector<16xf32>
    %246 = vector.shape_cast %245 : vector<16xf32> to vector<16x1xf32>
    %cst_76 = arith.constant 3.200000e+01 : f32
    %247 = vector.broadcast %cst_76 : f32 to vector<16x1xf32>
    %248 = arith.divf %246, %247 : vector<16x1xf32>
    %249 = vector.broadcast %241 : vector<16x1xf32> to vector<16x32xf32>
    %250 = arith.subf %237, %249 : vector<16x32xf32>
    %cst_77 = arith.constant 9.99999974E-6 : f32
    %251 = vector.broadcast %cst_77 : f32 to vector<16x1xf32>
    %252 = arith.addf %248, %251 : vector<16x1xf32>
    %253 = math.rsqrt %252 : vector<16x1xf32>
    %254 = vector.broadcast %253 : vector<16x1xf32> to vector<16x32xf32>
    %255 = arith.mulf %250, %254 : vector<16x32xf32>
    %256 = vector.broadcast %21 : vector<1x32xf32> to vector<16x32xf32>
    %257 = arith.mulf %255, %256 : vector<16x32xf32>
    %258 = vector.broadcast %22 : vector<1x32xf32> to vector<16x32xf32>
    %259 = arith.addf %257, %258 : vector<16x32xf32>
    %c1 = arith.constant 1 : index
    %c0_78 = arith.constant 0 : index
    %c0_79 = arith.constant 0 : index
    %260 = vector.load %arg2[%c1, %c0_78, %c0_79] : memref<2x32x64xbf16, #tpu.memory_space<vmem>>, vector<1x32x64xbf16>
    %261 = vector.shape_cast %260 : vector<1x32x64xbf16> to vector<32x64xbf16>
    %c1_80 = arith.constant 1 : index
    %c0_81 = arith.constant 0 : index
    %c0_82 = arith.constant 0 : index
    %262 = vector.load %arg3[%c1_80, %c0_81, %c0_82] : memref<2x32x32xbf16, #tpu.memory_space<vmem>>, vector<1x32x32xbf16>
    %263 = vector.shape_cast %262 : vector<1x32x32xbf16> to vector<32x32xbf16>
    %c1_83 = arith.constant 1 : index
    %c0_84 = arith.constant 0 : index
    %c0_85 = arith.constant 0 : index
    %264 = vector.load %arg4[%c1_83, %c0_84, %c0_85] : memref<2x32x32xbf16, #tpu.memory_space<vmem>>, vector<1x32x32xbf16>
    %265 = vector.shape_cast %264 : vector<1x32x32xbf16> to vector<32x32xbf16>
    %c1_86 = arith.constant 1 : index
    %c0_87 = arith.constant 0 : index
    %c0_88 = arith.constant 0 : index
    %266 = vector.load %arg5[%c1_86, %c0_87, %c0_88] : memref<2x32x64xbf16, #tpu.memory_space<vmem>>, vector<1x32x64xbf16>
    %267 = vector.shape_cast %266 : vector<1x32x64xbf16> to vector<32x64xbf16>
    %c1_89 = arith.constant 1 : index
    %c0_90 = arith.constant 0 : index
    %c0_91 = arith.constant 0 : index
    %268 = vector.load %arg6[%c1_89, %c0_90, %c0_91] : memref<2x64x32xbf16, #tpu.memory_space<vmem>>, vector<1x64x32xbf16>
    %269 = vector.shape_cast %268 : vector<1x64x32xbf16> to vector<64x32xbf16>
    %c1_92 = arith.constant 1 : index
    %c0_93 = arith.constant 0 : index
    %c0_94 = arith.constant 0 : index
    %270 = vector.load %arg7[%c1_92, %c0_93, %c0_94] : memref<2x9x64xf32, #tpu.memory_space<vmem>>, vector<1x9x64xf32>
    %271 = vector.shape_cast %270 : vector<1x9x64xf32> to vector<9x64xf32>
    %272 = vector.extract_strided_slice %271 {offsets = [0, 0], sizes = [1, 64], strides = [1, 1]} : vector<9x64xf32> to vector<1x64xf32>
    %273 = vector.extract_strided_slice %271 {offsets = [1, 0], sizes = [1, 32], strides = [1, 1]} : vector<9x64xf32> to vector<1x32xf32>
    %274 = vector.extract_strided_slice %271 {offsets = [2, 0], sizes = [1, 32], strides = [1, 1]} : vector<9x64xf32> to vector<1x32xf32>
    %275 = vector.extract_strided_slice %271 {offsets = [3, 0], sizes = [1, 32], strides = [1, 1]} : vector<9x64xf32> to vector<1x32xf32>
    %276 = vector.extract_strided_slice %271 {offsets = [4, 0], sizes = [1, 32], strides = [1, 1]} : vector<9x64xf32> to vector<1x32xf32>
    %277 = vector.extract_strided_slice %271 {offsets = [5, 0], sizes = [1, 64], strides = [1, 1]} : vector<9x64xf32> to vector<1x64xf32>
    %278 = vector.extract_strided_slice %271 {offsets = [6, 0], sizes = [1, 32], strides = [1, 1]} : vector<9x64xf32> to vector<1x32xf32>
    %279 = vector.extract_strided_slice %271 {offsets = [7, 0], sizes = [1, 32], strides = [1, 1]} : vector<9x64xf32> to vector<1x32xf32>
    %280 = vector.extract_strided_slice %271 {offsets = [8, 0], sizes = [1, 32], strides = [1, 1]} : vector<9x64xf32> to vector<1x32xf32>
    %281 = arith.addf %259, %1 : vector<16x32xf32>
    %282 = arith.truncf %281 : vector<16x32xf32> to vector<16x32xbf16>
    %cst_95 = arith.constant dense<0.000000e+00> : vector<16x64xf32>
    %283 = tpu.matmul %282, %261, %cst_95 {dimension_numbers = #tpu.dot_dimension_numbers<[1], [0], [0], [1], [0, 0, 1, 1], [], []>} : vector<16x32xbf16>, vector<32x64xbf16>, vector<16x64xf32> -> vector<16x64xf32>
    %284 = vector.broadcast %272 : vector<1x64xf32> to vector<16x64xf32>
    %285 = arith.addf %283, %284 : vector<16x64xf32>
    %286 = arith.truncf %259 : vector<16x32xf32> to vector<16x32xbf16>
    %cst_96 = arith.constant dense<0.000000e+00> : vector<16x32xf32>
    %287 = tpu.matmul %286, %263, %cst_96 {dimension_numbers = #tpu.dot_dimension_numbers<[1], [0], [0], [1], [0, 0, 1, 1], [], []>} : vector<16x32xbf16>, vector<32x32xbf16>, vector<16x32xf32> -> vector<16x32xf32>
    %288 = vector.broadcast %273 : vector<1x32xf32> to vector<16x32xf32>
    %289 = arith.addf %287, %288 : vector<16x32xf32>
    %290 = vector.extract_strided_slice %285 {offsets = [0, 0], sizes = [16, 32], strides = [1, 1]} : vector<16x64xf32> to vector<16x32xf32>
    %cst_97 = arith.constant 0.353553385 : f32
    %291 = vector.broadcast %cst_97 : f32 to vector<16x32xf32>
    %292 = arith.mulf %290, %291 : vector<16x32xf32>
    %293 = arith.truncf %292 : vector<16x32xf32> to vector<16x32xbf16>
    %294 = vector.extract_strided_slice %285 {offsets = [0, 32], sizes = [16, 32], strides = [1, 1]} : vector<16x64xf32> to vector<16x32xf32>
    %295 = arith.truncf %294 : vector<16x32xf32> to vector<16x32xbf16>
    %296 = arith.truncf %289 : vector<16x32xf32> to vector<16x32xbf16>
    %cst_98 = arith.constant 0.000000e+00 : f32
    %297 = vector.broadcast %cst_98 : f32 to vector<8x32xf32>
    %298 = vector.extract_strided_slice %293 {offsets = [0, 0], sizes = [8, 8], strides = [1, 1]} : vector<16x32xbf16> to vector<8x8xbf16>
    %299 = vector.extract_strided_slice %295 {offsets = [0, 0], sizes = [8, 8], strides = [1, 1]} : vector<16x32xbf16> to vector<8x8xbf16>
    %300 = vector.extract_strided_slice %296 {offsets = [0, 0], sizes = [8, 8], strides = [1, 1]} : vector<16x32xbf16> to vector<8x8xbf16>
    %cst_99 = arith.constant dense<0.000000e+00> : vector<8x8xf32>
    %301 = tpu.matmul %298, %299, %cst_99 {dimension_numbers = #tpu.dot_dimension_numbers<[1], [1], [0], [0], [0, 0, 1, 0], [], []>} : vector<8x8xbf16>, vector<8x8xbf16>, vector<8x8xf32> -> vector<8x8xf32>
    %cst_100 = arith.constant dense<0xFF800000> : vector<8xf32>
    %302 = vector.multi_reduction <maximumf>, %301, %cst_100 [1] : vector<8x8xf32> to vector<8xf32>
    %303 = vector.shape_cast %302 : vector<8xf32> to vector<8x1xf32>
    %304 = vector.broadcast %303 : vector<8x1xf32> to vector<8x8xf32>
    %305 = arith.subf %301, %304 : vector<8x8xf32>
    %306 = math.exp %305 : vector<8x8xf32>
    %cst_101 = arith.constant dense<0.000000e+00> : vector<8xf32>
    %307 = vector.multi_reduction <add>, %306, %cst_101 [1] : vector<8x8xf32> to vector<8xf32>
    %308 = vector.shape_cast %307 : vector<8xf32> to vector<8x1xf32>
    %309 = tpu.reciprocal %308 {approx = true} : vector<8x1xf32> -> vector<8x1xf32>
    %310 = vector.broadcast %309 : vector<8x1xf32> to vector<8x8xf32>
    %311 = arith.mulf %306, %310 : vector<8x8xf32>
    %312 = arith.truncf %311 : vector<8x8xf32> to vector<8x8xbf16>
    %cst_102 = arith.constant dense<0.000000e+00> : vector<8x8xf32>
    %313 = tpu.matmul %312, %300, %cst_102 {dimension_numbers = #tpu.dot_dimension_numbers<[1], [0], [0], [1], [0, 0, 1, 1], [], []>} : vector<8x8xbf16>, vector<8x8xbf16>, vector<8x8xf32> -> vector<8x8xf32>
    %314 = arith.truncf %313 : vector<8x8xf32> to vector<8x8xbf16>
    %315 = vector.extract_strided_slice %265 {offsets = [0, 0], sizes = [8, 32], strides = [1, 1]} : vector<32x32xbf16> to vector<8x32xbf16>
    %cst_103 = arith.constant dense<0.000000e+00> : vector<8x32xf32>
    %316 = tpu.matmul %314, %315, %cst_103 {dimension_numbers = #tpu.dot_dimension_numbers<[1], [0], [0], [1], [0, 0, 1, 1], [], []>} : vector<8x8xbf16>, vector<8x32xbf16>, vector<8x32xf32> -> vector<8x32xf32>
    %317 = arith.addf %297, %316 : vector<8x32xf32>
    %318 = vector.extract_strided_slice %293 {offsets = [0, 8], sizes = [8, 8], strides = [1, 1]} : vector<16x32xbf16> to vector<8x8xbf16>
    %319 = vector.extract_strided_slice %295 {offsets = [0, 8], sizes = [8, 8], strides = [1, 1]} : vector<16x32xbf16> to vector<8x8xbf16>
    %320 = vector.extract_strided_slice %296 {offsets = [0, 8], sizes = [8, 8], strides = [1, 1]} : vector<16x32xbf16> to vector<8x8xbf16>
    %cst_104 = arith.constant dense<0.000000e+00> : vector<8x8xf32>
    %321 = tpu.matmul %318, %319, %cst_104 {dimension_numbers = #tpu.dot_dimension_numbers<[1], [1], [0], [0], [0, 0, 1, 0], [], []>} : vector<8x8xbf16>, vector<8x8xbf16>, vector<8x8xf32> -> vector<8x8xf32>
    %cst_105 = arith.constant dense<0xFF800000> : vector<8xf32>
    %322 = vector.multi_reduction <maximumf>, %321, %cst_105 [1] : vector<8x8xf32> to vector<8xf32>
    %323 = vector.shape_cast %322 : vector<8xf32> to vector<8x1xf32>
    %324 = vector.broadcast %323 : vector<8x1xf32> to vector<8x8xf32>
    %325 = arith.subf %321, %324 : vector<8x8xf32>
    %326 = math.exp %325 : vector<8x8xf32>
    %cst_106 = arith.constant dense<0.000000e+00> : vector<8xf32>
    %327 = vector.multi_reduction <add>, %326, %cst_106 [1] : vector<8x8xf32> to vector<8xf32>
    %328 = vector.shape_cast %327 : vector<8xf32> to vector<8x1xf32>
    %329 = tpu.reciprocal %328 {approx = true} : vector<8x1xf32> -> vector<8x1xf32>
    %330 = vector.broadcast %329 : vector<8x1xf32> to vector<8x8xf32>
    %331 = arith.mulf %326, %330 : vector<8x8xf32>
    %332 = arith.truncf %331 : vector<8x8xf32> to vector<8x8xbf16>
    %cst_107 = arith.constant dense<0.000000e+00> : vector<8x8xf32>
    %333 = tpu.matmul %332, %320, %cst_107 {dimension_numbers = #tpu.dot_dimension_numbers<[1], [0], [0], [1], [0, 0, 1, 1], [], []>} : vector<8x8xbf16>, vector<8x8xbf16>, vector<8x8xf32> -> vector<8x8xf32>
    %334 = arith.truncf %333 : vector<8x8xf32> to vector<8x8xbf16>
    %335 = vector.extract_strided_slice %265 {offsets = [8, 0], sizes = [8, 32], strides = [1, 1]} : vector<32x32xbf16> to vector<8x32xbf16>
    %cst_108 = arith.constant dense<0.000000e+00> : vector<8x32xf32>
    %336 = tpu.matmul %334, %335, %cst_108 {dimension_numbers = #tpu.dot_dimension_numbers<[1], [0], [0], [1], [0, 0, 1, 1], [], []>} : vector<8x8xbf16>, vector<8x32xbf16>, vector<8x32xf32> -> vector<8x32xf32>
    %337 = arith.addf %317, %336 : vector<8x32xf32>
    %338 = vector.extract_strided_slice %293 {offsets = [0, 16], sizes = [8, 8], strides = [1, 1]} : vector<16x32xbf16> to vector<8x8xbf16>
    %339 = vector.extract_strided_slice %295 {offsets = [0, 16], sizes = [8, 8], strides = [1, 1]} : vector<16x32xbf16> to vector<8x8xbf16>
    %340 = vector.extract_strided_slice %296 {offsets = [0, 16], sizes = [8, 8], strides = [1, 1]} : vector<16x32xbf16> to vector<8x8xbf16>
    %cst_109 = arith.constant dense<0.000000e+00> : vector<8x8xf32>
    %341 = tpu.matmul %338, %339, %cst_109 {dimension_numbers = #tpu.dot_dimension_numbers<[1], [1], [0], [0], [0, 0, 1, 0], [], []>} : vector<8x8xbf16>, vector<8x8xbf16>, vector<8x8xf32> -> vector<8x8xf32>
    %cst_110 = arith.constant dense<0xFF800000> : vector<8xf32>
    %342 = vector.multi_reduction <maximumf>, %341, %cst_110 [1] : vector<8x8xf32> to vector<8xf32>
    %343 = vector.shape_cast %342 : vector<8xf32> to vector<8x1xf32>
    %344 = vector.broadcast %343 : vector<8x1xf32> to vector<8x8xf32>
    %345 = arith.subf %341, %344 : vector<8x8xf32>
    %346 = math.exp %345 : vector<8x8xf32>
    %cst_111 = arith.constant dense<0.000000e+00> : vector<8xf32>
    %347 = vector.multi_reduction <add>, %346, %cst_111 [1] : vector<8x8xf32> to vector<8xf32>
    %348 = vector.shape_cast %347 : vector<8xf32> to vector<8x1xf32>
    %349 = tpu.reciprocal %348 {approx = true} : vector<8x1xf32> -> vector<8x1xf32>
    %350 = vector.broadcast %349 : vector<8x1xf32> to vector<8x8xf32>
    %351 = arith.mulf %346, %350 : vector<8x8xf32>
    %352 = arith.truncf %351 : vector<8x8xf32> to vector<8x8xbf16>
    %cst_112 = arith.constant dense<0.000000e+00> : vector<8x8xf32>
    %353 = tpu.matmul %352, %340, %cst_112 {dimension_numbers = #tpu.dot_dimension_numbers<[1], [0], [0], [1], [0, 0, 1, 1], [], []>} : vector<8x8xbf16>, vector<8x8xbf16>, vector<8x8xf32> -> vector<8x8xf32>
    %354 = arith.truncf %353 : vector<8x8xf32> to vector<8x8xbf16>
    %355 = vector.extract_strided_slice %265 {offsets = [16, 0], sizes = [8, 32], strides = [1, 1]} : vector<32x32xbf16> to vector<8x32xbf16>
    %cst_113 = arith.constant dense<0.000000e+00> : vector<8x32xf32>
    %356 = tpu.matmul %354, %355, %cst_113 {dimension_numbers = #tpu.dot_dimension_numbers<[1], [0], [0], [1], [0, 0, 1, 1], [], []>} : vector<8x8xbf16>, vector<8x32xbf16>, vector<8x32xf32> -> vector<8x32xf32>
    %357 = arith.addf %337, %356 : vector<8x32xf32>
    %358 = vector.extract_strided_slice %293 {offsets = [0, 24], sizes = [8, 8], strides = [1, 1]} : vector<16x32xbf16> to vector<8x8xbf16>
    %359 = vector.extract_strided_slice %295 {offsets = [0, 24], sizes = [8, 8], strides = [1, 1]} : vector<16x32xbf16> to vector<8x8xbf16>
    %360 = vector.extract_strided_slice %296 {offsets = [0, 24], sizes = [8, 8], strides = [1, 1]} : vector<16x32xbf16> to vector<8x8xbf16>
    %cst_114 = arith.constant dense<0.000000e+00> : vector<8x8xf32>
    %361 = tpu.matmul %358, %359, %cst_114 {dimension_numbers = #tpu.dot_dimension_numbers<[1], [1], [0], [0], [0, 0, 1, 0], [], []>} : vector<8x8xbf16>, vector<8x8xbf16>, vector<8x8xf32> -> vector<8x8xf32>
    %cst_115 = arith.constant dense<0xFF800000> : vector<8xf32>
    %362 = vector.multi_reduction <maximumf>, %361, %cst_115 [1] : vector<8x8xf32> to vector<8xf32>
    %363 = vector.shape_cast %362 : vector<8xf32> to vector<8x1xf32>
    %364 = vector.broadcast %363 : vector<8x1xf32> to vector<8x8xf32>
    %365 = arith.subf %361, %364 : vector<8x8xf32>
    %366 = math.exp %365 : vector<8x8xf32>
    %cst_116 = arith.constant dense<0.000000e+00> : vector<8xf32>
    %367 = vector.multi_reduction <add>, %366, %cst_116 [1] : vector<8x8xf32> to vector<8xf32>
    %368 = vector.shape_cast %367 : vector<8xf32> to vector<8x1xf32>
    %369 = tpu.reciprocal %368 {approx = true} : vector<8x1xf32> -> vector<8x1xf32>
    %370 = vector.broadcast %369 : vector<8x1xf32> to vector<8x8xf32>
    %371 = arith.mulf %366, %370 : vector<8x8xf32>
    %372 = arith.truncf %371 : vector<8x8xf32> to vector<8x8xbf16>
    %cst_117 = arith.constant dense<0.000000e+00> : vector<8x8xf32>
    %373 = tpu.matmul %372, %360, %cst_117 {dimension_numbers = #tpu.dot_dimension_numbers<[1], [0], [0], [1], [0, 0, 1, 1], [], []>} : vector<8x8xbf16>, vector<8x8xbf16>, vector<8x8xf32> -> vector<8x8xf32>
    %374 = arith.truncf %373 : vector<8x8xf32> to vector<8x8xbf16>
    %375 = vector.extract_strided_slice %265 {offsets = [24, 0], sizes = [8, 32], strides = [1, 1]} : vector<32x32xbf16> to vector<8x32xbf16>
    %cst_118 = arith.constant dense<0.000000e+00> : vector<8x32xf32>
    %376 = tpu.matmul %374, %375, %cst_118 {dimension_numbers = #tpu.dot_dimension_numbers<[1], [0], [0], [1], [0, 0, 1, 1], [], []>} : vector<8x8xbf16>, vector<8x32xbf16>, vector<8x32xf32> -> vector<8x32xf32>
    %377 = arith.addf %357, %376 : vector<8x32xf32>
    %cst_119 = arith.constant 0.000000e+00 : f32
    %378 = vector.broadcast %cst_119 : f32 to vector<8x32xf32>
    %379 = vector.extract_strided_slice %293 {offsets = [8, 0], sizes = [8, 8], strides = [1, 1]} : vector<16x32xbf16> to vector<8x8xbf16>
    %380 = vector.extract_strided_slice %295 {offsets = [8, 0], sizes = [8, 8], strides = [1, 1]} : vector<16x32xbf16> to vector<8x8xbf16>
    %381 = vector.extract_strided_slice %296 {offsets = [8, 0], sizes = [8, 8], strides = [1, 1]} : vector<16x32xbf16> to vector<8x8xbf16>
    %cst_120 = arith.constant dense<0.000000e+00> : vector<8x8xf32>
    %382 = tpu.matmul %379, %380, %cst_120 {dimension_numbers = #tpu.dot_dimension_numbers<[1], [1], [0], [0], [0, 0, 1, 0], [], []>} : vector<8x8xbf16>, vector<8x8xbf16>, vector<8x8xf32> -> vector<8x8xf32>
    %cst_121 = arith.constant dense<0xFF800000> : vector<8xf32>
    %383 = vector.multi_reduction <maximumf>, %382, %cst_121 [1] : vector<8x8xf32> to vector<8xf32>
    %384 = vector.shape_cast %383 : vector<8xf32> to vector<8x1xf32>
    %385 = vector.broadcast %384 : vector<8x1xf32> to vector<8x8xf32>
    %386 = arith.subf %382, %385 : vector<8x8xf32>
    %387 = math.exp %386 : vector<8x8xf32>
    %cst_122 = arith.constant dense<0.000000e+00> : vector<8xf32>
    %388 = vector.multi_reduction <add>, %387, %cst_122 [1] : vector<8x8xf32> to vector<8xf32>
    %389 = vector.shape_cast %388 : vector<8xf32> to vector<8x1xf32>
    %390 = tpu.reciprocal %389 {approx = true} : vector<8x1xf32> -> vector<8x1xf32>
    %391 = vector.broadcast %390 : vector<8x1xf32> to vector<8x8xf32>
    %392 = arith.mulf %387, %391 : vector<8x8xf32>
    %393 = arith.truncf %392 : vector<8x8xf32> to vector<8x8xbf16>
    %cst_123 = arith.constant dense<0.000000e+00> : vector<8x8xf32>
    %394 = tpu.matmul %393, %381, %cst_123 {dimension_numbers = #tpu.dot_dimension_numbers<[1], [0], [0], [1], [0, 0, 1, 1], [], []>} : vector<8x8xbf16>, vector<8x8xbf16>, vector<8x8xf32> -> vector<8x8xf32>
    %395 = arith.truncf %394 : vector<8x8xf32> to vector<8x8xbf16>
    %396 = vector.extract_strided_slice %265 {offsets = [0, 0], sizes = [8, 32], strides = [1, 1]} : vector<32x32xbf16> to vector<8x32xbf16>
    %cst_124 = arith.constant dense<0.000000e+00> : vector<8x32xf32>
    %397 = tpu.matmul %395, %396, %cst_124 {dimension_numbers = #tpu.dot_dimension_numbers<[1], [0], [0], [1], [0, 0, 1, 1], [], []>} : vector<8x8xbf16>, vector<8x32xbf16>, vector<8x32xf32> -> vector<8x32xf32>
    %398 = arith.addf %378, %397 : vector<8x32xf32>
    %399 = vector.extract_strided_slice %293 {offsets = [8, 8], sizes = [8, 8], strides = [1, 1]} : vector<16x32xbf16> to vector<8x8xbf16>
    %400 = vector.extract_strided_slice %295 {offsets = [8, 8], sizes = [8, 8], strides = [1, 1]} : vector<16x32xbf16> to vector<8x8xbf16>
    %401 = vector.extract_strided_slice %296 {offsets = [8, 8], sizes = [8, 8], strides = [1, 1]} : vector<16x32xbf16> to vector<8x8xbf16>
    %cst_125 = arith.constant dense<0.000000e+00> : vector<8x8xf32>
    %402 = tpu.matmul %399, %400, %cst_125 {dimension_numbers = #tpu.dot_dimension_numbers<[1], [1], [0], [0], [0, 0, 1, 0], [], []>} : vector<8x8xbf16>, vector<8x8xbf16>, vector<8x8xf32> -> vector<8x8xf32>
    %cst_126 = arith.constant dense<0xFF800000> : vector<8xf32>
    %403 = vector.multi_reduction <maximumf>, %402, %cst_126 [1] : vector<8x8xf32> to vector<8xf32>
    %404 = vector.shape_cast %403 : vector<8xf32> to vector<8x1xf32>
    %405 = vector.broadcast %404 : vector<8x1xf32> to vector<8x8xf32>
    %406 = arith.subf %402, %405 : vector<8x8xf32>
    %407 = math.exp %406 : vector<8x8xf32>
    %cst_127 = arith.constant dense<0.000000e+00> : vector<8xf32>
    %408 = vector.multi_reduction <add>, %407, %cst_127 [1] : vector<8x8xf32> to vector<8xf32>
    %409 = vector.shape_cast %408 : vector<8xf32> to vector<8x1xf32>
    %410 = tpu.reciprocal %409 {approx = true} : vector<8x1xf32> -> vector<8x1xf32>
    %411 = vector.broadcast %410 : vector<8x1xf32> to vector<8x8xf32>
    %412 = arith.mulf %407, %411 : vector<8x8xf32>
    %413 = arith.truncf %412 : vector<8x8xf32> to vector<8x8xbf16>
    %cst_128 = arith.constant dense<0.000000e+00> : vector<8x8xf32>
    %414 = tpu.matmul %413, %401, %cst_128 {dimension_numbers = #tpu.dot_dimension_numbers<[1], [0], [0], [1], [0, 0, 1, 1], [], []>} : vector<8x8xbf16>, vector<8x8xbf16>, vector<8x8xf32> -> vector<8x8xf32>
    %415 = arith.truncf %414 : vector<8x8xf32> to vector<8x8xbf16>
    %416 = vector.extract_strided_slice %265 {offsets = [8, 0], sizes = [8, 32], strides = [1, 1]} : vector<32x32xbf16> to vector<8x32xbf16>
    %cst_129 = arith.constant dense<0.000000e+00> : vector<8x32xf32>
    %417 = tpu.matmul %415, %416, %cst_129 {dimension_numbers = #tpu.dot_dimension_numbers<[1], [0], [0], [1], [0, 0, 1, 1], [], []>} : vector<8x8xbf16>, vector<8x32xbf16>, vector<8x32xf32> -> vector<8x32xf32>
    %418 = arith.addf %398, %417 : vector<8x32xf32>
    %419 = vector.extract_strided_slice %293 {offsets = [8, 16], sizes = [8, 8], strides = [1, 1]} : vector<16x32xbf16> to vector<8x8xbf16>
    %420 = vector.extract_strided_slice %295 {offsets = [8, 16], sizes = [8, 8], strides = [1, 1]} : vector<16x32xbf16> to vector<8x8xbf16>
    %421 = vector.extract_strided_slice %296 {offsets = [8, 16], sizes = [8, 8], strides = [1, 1]} : vector<16x32xbf16> to vector<8x8xbf16>
    %cst_130 = arith.constant dense<0.000000e+00> : vector<8x8xf32>
    %422 = tpu.matmul %419, %420, %cst_130 {dimension_numbers = #tpu.dot_dimension_numbers<[1], [1], [0], [0], [0, 0, 1, 0], [], []>} : vector<8x8xbf16>, vector<8x8xbf16>, vector<8x8xf32> -> vector<8x8xf32>
    %cst_131 = arith.constant dense<0xFF800000> : vector<8xf32>
    %423 = vector.multi_reduction <maximumf>, %422, %cst_131 [1] : vector<8x8xf32> to vector<8xf32>
    %424 = vector.shape_cast %423 : vector<8xf32> to vector<8x1xf32>
    %425 = vector.broadcast %424 : vector<8x1xf32> to vector<8x8xf32>
    %426 = arith.subf %422, %425 : vector<8x8xf32>
    %427 = math.exp %426 : vector<8x8xf32>
    %cst_132 = arith.constant dense<0.000000e+00> : vector<8xf32>
    %428 = vector.multi_reduction <add>, %427, %cst_132 [1] : vector<8x8xf32> to vector<8xf32>
    %429 = vector.shape_cast %428 : vector<8xf32> to vector<8x1xf32>
    %430 = tpu.reciprocal %429 {approx = true} : vector<8x1xf32> -> vector<8x1xf32>
    %431 = vector.broadcast %430 : vector<8x1xf32> to vector<8x8xf32>
    %432 = arith.mulf %427, %431 : vector<8x8xf32>
    %433 = arith.truncf %432 : vector<8x8xf32> to vector<8x8xbf16>
    %cst_133 = arith.constant dense<0.000000e+00> : vector<8x8xf32>
    %434 = tpu.matmul %433, %421, %cst_133 {dimension_numbers = #tpu.dot_dimension_numbers<[1], [0], [0], [1], [0, 0, 1, 1], [], []>} : vector<8x8xbf16>, vector<8x8xbf16>, vector<8x8xf32> -> vector<8x8xf32>
    %435 = arith.truncf %434 : vector<8x8xf32> to vector<8x8xbf16>
    %436 = vector.extract_strided_slice %265 {offsets = [16, 0], sizes = [8, 32], strides = [1, 1]} : vector<32x32xbf16> to vector<8x32xbf16>
    %cst_134 = arith.constant dense<0.000000e+00> : vector<8x32xf32>
    %437 = tpu.matmul %435, %436, %cst_134 {dimension_numbers = #tpu.dot_dimension_numbers<[1], [0], [0], [1], [0, 0, 1, 1], [], []>} : vector<8x8xbf16>, vector<8x32xbf16>, vector<8x32xf32> -> vector<8x32xf32>
    %438 = arith.addf %418, %437 : vector<8x32xf32>
    %439 = vector.extract_strided_slice %293 {offsets = [8, 24], sizes = [8, 8], strides = [1, 1]} : vector<16x32xbf16> to vector<8x8xbf16>
    %440 = vector.extract_strided_slice %295 {offsets = [8, 24], sizes = [8, 8], strides = [1, 1]} : vector<16x32xbf16> to vector<8x8xbf16>
    %441 = vector.extract_strided_slice %296 {offsets = [8, 24], sizes = [8, 8], strides = [1, 1]} : vector<16x32xbf16> to vector<8x8xbf16>
    %cst_135 = arith.constant dense<0.000000e+00> : vector<8x8xf32>
    %442 = tpu.matmul %439, %440, %cst_135 {dimension_numbers = #tpu.dot_dimension_numbers<[1], [1], [0], [0], [0, 0, 1, 0], [], []>} : vector<8x8xbf16>, vector<8x8xbf16>, vector<8x8xf32> -> vector<8x8xf32>
    %cst_136 = arith.constant dense<0xFF800000> : vector<8xf32>
    %443 = vector.multi_reduction <maximumf>, %442, %cst_136 [1] : vector<8x8xf32> to vector<8xf32>
    %444 = vector.shape_cast %443 : vector<8xf32> to vector<8x1xf32>
    %445 = vector.broadcast %444 : vector<8x1xf32> to vector<8x8xf32>
    %446 = arith.subf %442, %445 : vector<8x8xf32>
    %447 = math.exp %446 : vector<8x8xf32>
    %cst_137 = arith.constant dense<0.000000e+00> : vector<8xf32>
    %448 = vector.multi_reduction <add>, %447, %cst_137 [1] : vector<8x8xf32> to vector<8xf32>
    %449 = vector.shape_cast %448 : vector<8xf32> to vector<8x1xf32>
    %450 = tpu.reciprocal %449 {approx = true} : vector<8x1xf32> -> vector<8x1xf32>
    %451 = vector.broadcast %450 : vector<8x1xf32> to vector<8x8xf32>
    %452 = arith.mulf %447, %451 : vector<8x8xf32>
    %453 = arith.truncf %452 : vector<8x8xf32> to vector<8x8xbf16>
    %cst_138 = arith.constant dense<0.000000e+00> : vector<8x8xf32>
    %454 = tpu.matmul %453, %441, %cst_138 {dimension_numbers = #tpu.dot_dimension_numbers<[1], [0], [0], [1], [0, 0, 1, 1], [], []>} : vector<8x8xbf16>, vector<8x8xbf16>, vector<8x8xf32> -> vector<8x8xf32>
    %455 = arith.truncf %454 : vector<8x8xf32> to vector<8x8xbf16>
    %456 = vector.extract_strided_slice %265 {offsets = [24, 0], sizes = [8, 32], strides = [1, 1]} : vector<32x32xbf16> to vector<8x32xbf16>
    %cst_139 = arith.constant dense<0.000000e+00> : vector<8x32xf32>
    %457 = tpu.matmul %455, %456, %cst_139 {dimension_numbers = #tpu.dot_dimension_numbers<[1], [0], [0], [1], [0, 0, 1, 1], [], []>} : vector<8x8xbf16>, vector<8x32xbf16>, vector<8x32xf32> -> vector<8x32xf32>
    %458 = arith.addf %438, %457 : vector<8x32xf32>
    %459 = tpu.concatenate %377, %458 in 0 : vector<8x32xf32>, vector<8x32xf32> -> vector<16x32xf32>
    %460 = vector.broadcast %274 : vector<1x32xf32> to vector<16x32xf32>
    %461 = arith.addf %459, %460 : vector<16x32xf32>
    %462 = arith.addf %259, %461 : vector<16x32xf32>
    %cst_140 = arith.constant dense<0.000000e+00> : vector<16xf32>
    %463 = vector.multi_reduction <add>, %462, %cst_140 [1] : vector<16x32xf32> to vector<16xf32>
    %464 = vector.shape_cast %463 : vector<16xf32> to vector<16x1xf32>
    %cst_141 = arith.constant 3.200000e+01 : f32
    %465 = vector.broadcast %cst_141 : f32 to vector<16x1xf32>
    %466 = arith.divf %464, %465 : vector<16x1xf32>
    %467 = vector.broadcast %466 : vector<16x1xf32> to vector<16x32xf32>
    %468 = arith.subf %462, %467 : vector<16x32xf32>
    %469 = arith.mulf %468, %468 : vector<16x32xf32>
    %cst_142 = arith.constant dense<0.000000e+00> : vector<16xf32>
    %470 = vector.multi_reduction <add>, %469, %cst_142 [1] : vector<16x32xf32> to vector<16xf32>
    %471 = vector.shape_cast %470 : vector<16xf32> to vector<16x1xf32>
    %cst_143 = arith.constant 3.200000e+01 : f32
    %472 = vector.broadcast %cst_143 : f32 to vector<16x1xf32>
    %473 = arith.divf %471, %472 : vector<16x1xf32>
    %474 = vector.broadcast %466 : vector<16x1xf32> to vector<16x32xf32>
    %475 = arith.subf %462, %474 : vector<16x32xf32>
    %cst_144 = arith.constant 9.99999974E-6 : f32
    %476 = vector.broadcast %cst_144 : f32 to vector<16x1xf32>
    %477 = arith.addf %473, %476 : vector<16x1xf32>
    %478 = math.rsqrt %477 : vector<16x1xf32>
    %479 = vector.broadcast %478 : vector<16x1xf32> to vector<16x32xf32>
    %480 = arith.mulf %475, %479 : vector<16x32xf32>
    %481 = vector.broadcast %275 : vector<1x32xf32> to vector<16x32xf32>
    %482 = arith.mulf %480, %481 : vector<16x32xf32>
    %483 = vector.broadcast %276 : vector<1x32xf32> to vector<16x32xf32>
    %484 = arith.addf %482, %483 : vector<16x32xf32>
    %485 = arith.truncf %484 : vector<16x32xf32> to vector<16x32xbf16>
    %cst_145 = arith.constant dense<0.000000e+00> : vector<16x64xf32>
    %486 = tpu.matmul %485, %267, %cst_145 {dimension_numbers = #tpu.dot_dimension_numbers<[1], [0], [0], [1], [0, 0, 1, 1], [], []>} : vector<16x32xbf16>, vector<32x64xbf16>, vector<16x64xf32> -> vector<16x64xf32>
    %487 = vector.broadcast %277 : vector<1x64xf32> to vector<16x64xf32>
    %488 = arith.addf %486, %487 : vector<16x64xf32>
    %cst_146 = arith.constant 0.000000e+00 : f32
    %489 = vector.broadcast %cst_146 : f32 to vector<16x64xf32>
    %490 = arith.maximumf %488, %489 : vector<16x64xf32>
    %491 = arith.truncf %490 : vector<16x64xf32> to vector<16x64xbf16>
    %cst_147 = arith.constant dense<0.000000e+00> : vector<16x32xf32>
    %492 = tpu.matmul %491, %269, %cst_147 {dimension_numbers = #tpu.dot_dimension_numbers<[1], [0], [0], [1], [0, 0, 1, 1], [], []>} : vector<16x64xbf16>, vector<64x32xbf16>, vector<16x32xf32> -> vector<16x32xf32>
    %493 = vector.broadcast %278 : vector<1x32xf32> to vector<16x32xf32>
    %494 = arith.addf %492, %493 : vector<16x32xf32>
    %495 = arith.addf %484, %494 : vector<16x32xf32>
    %cst_148 = arith.constant dense<0.000000e+00> : vector<16xf32>
    %496 = vector.multi_reduction <add>, %495, %cst_148 [1] : vector<16x32xf32> to vector<16xf32>
    %497 = vector.shape_cast %496 : vector<16xf32> to vector<16x1xf32>
    %cst_149 = arith.constant 3.200000e+01 : f32
    %498 = vector.broadcast %cst_149 : f32 to vector<16x1xf32>
    %499 = arith.divf %497, %498 : vector<16x1xf32>
    %500 = vector.broadcast %499 : vector<16x1xf32> to vector<16x32xf32>
    %501 = arith.subf %495, %500 : vector<16x32xf32>
    %502 = arith.mulf %501, %501 : vector<16x32xf32>
    %cst_150 = arith.constant dense<0.000000e+00> : vector<16xf32>
    %503 = vector.multi_reduction <add>, %502, %cst_150 [1] : vector<16x32xf32> to vector<16xf32>
    %504 = vector.shape_cast %503 : vector<16xf32> to vector<16x1xf32>
    %cst_151 = arith.constant 3.200000e+01 : f32
    %505 = vector.broadcast %cst_151 : f32 to vector<16x1xf32>
    %506 = arith.divf %504, %505 : vector<16x1xf32>
    %507 = vector.broadcast %499 : vector<16x1xf32> to vector<16x32xf32>
    %508 = arith.subf %495, %507 : vector<16x32xf32>
    %cst_152 = arith.constant 9.99999974E-6 : f32
    %509 = vector.broadcast %cst_152 : f32 to vector<16x1xf32>
    %510 = arith.addf %506, %509 : vector<16x1xf32>
    %511 = math.rsqrt %510 : vector<16x1xf32>
    %512 = vector.broadcast %511 : vector<16x1xf32> to vector<16x32xf32>
    %513 = arith.mulf %508, %512 : vector<16x32xf32>
    %514 = vector.broadcast %279 : vector<1x32xf32> to vector<16x32xf32>
    %515 = arith.mulf %513, %514 : vector<16x32xf32>
    %516 = vector.broadcast %280 : vector<1x32xf32> to vector<16x32xf32>
    %517 = arith.addf %515, %516 : vector<16x32xf32>
    %c0_153 = arith.constant 0 : index
    %c0_154 = arith.constant 0 : index
    %518 = vector.load %arg8[%c0_153, %c0_154] : memref<16x32xf32, #tpu.memory_space<vmem>>, vector<16x32xf32>
    tpu.vector_store %arg8[%c0_153, %c0_154], %517 {strides = array<i32>} : memref<16x32xf32, #tpu.memory_space<vmem>>, vector<16x32xf32>,
    return
  }
}

</mosaic_0001>

<llo_original>
// kernel: tpu_custom_call.1
$region0: #{tpu_custom_call.1}
  #allocation0 [shape = 'u32[]', space=smem, size = 0x4, offset = 0x4, fixed_abs, tag = 'smem constant byte address 0x4 - core index']
  #allocation1 [shape = 'u32[144,128]{1,0:T(1,128)}', space=vmem, size = 0x12000, scoped, tag = 'internal scratch']
  %s0 = inlined_call_operand.hbm [shape: f32[16,32], index: 0, kind: input, shape index: {}]
  %s1 = inlined_call_operand.hbm [shape: f32[16,32], index: 1, kind: input, shape index: {}]
  %s2 = inlined_call_operand.vmem [shape: bf16[2,32,64], index: 2, kind: input, shape index: {}]
  %s3 = inlined_call_operand.vmem [shape: bf16[2,32,32], index: 3, kind: input, shape index: {}]
  %s4 = inlined_call_operand.vmem [shape: bf16[2,32,32], index: 4, kind: input, shape index: {}]
  %s5 = inlined_call_operand.vmem [shape: bf16[2,32,64], index: 5, kind: input, shape index: {}]
  %s6 = inlined_call_operand.vmem [shape: bf16[2,64,32], index: 6, kind: input, shape index: {}]
  %s7 = inlined_call_operand.vmem [shape: f32[2,9,64], index: 7, kind: input, shape index: {}]
  %s8 = inlined_call_operand.hbm [shape: f32[16,32], index: 8, kind: output, shape index: {}]
  %s9 = sld [smem:[#allocation0]]
  $region50: #{tpu_custom_call.1} parent=0
    _
  %s11 = ssub.s32 1, %s9
  %s12 = scalar_select 0, %s11, %s9
  $region1: #{tpu_custom_call.1} parent=0
    #allocation2 [shape = 'u8[8192]{0}', space=vmem, size = 0x2000, scoped, tag = 'input window, operand 0, single buffered']
    #allocation3 [shape = 's32[1]{0}', space=sflag, size = 0x4, scoped, tag = 'scoped memory for tpu_custom_call.1']
    #allocation4 [shape = 's32[1]{0}', space=sflag, size = 0x4, scoped, tag = 'scoped memory for tpu_custom_call.1']
    #allocation5 [shape = 'u8[8192]{0}', space=vmem, size = 0x2000, scoped, tag = 'input window, operand 1, single buffered']
    #allocation6 [shape = 's32[1]{0}', space=sflag, size = 0x4, scoped, tag = 'scoped memory for tpu_custom_call.1']
    #allocation7 [shape = 'u8[8192]{0}', space=vmem, size = 0x2000, scoped, tag = 'output window, operand 0, single buffered']
    %13 = vsyncpa [#allocation3], 0
    %14 = vsyncpa [#allocation6], 0
    %15 = vsyncpa [#allocation4], 0
    // Predicated region
    $region2: #{tpu_custom_call.1} parent=1 // pred_check
      _
    $region3: #{tpu_custom_call.1} parent=1 // pred_check_branch
      %17 = sbr.rel (0) target = $region5
    $region4: #{tpu_custom_call.1} parent=1 // pred_region
      %s19 = ssub.s32 256, 256
      %20 = vsyncadd [#allocation3], %s19
      %s21 = sshll.u32 [#allocation2], 4
      %s22 = int_to_ptr.vmem [resolvable:$true] %s21
      %27 = dma.hbm_to_vmem [thread:$0]  %s0, 256, %s22, [#allocation3], 128, 128, 8
    $region5: #{tpu_custom_call.1} parent=1 // pred_fallthru
      _
    // Predicated region
    $region6: #{tpu_custom_call.1} parent=1 // pred_check
      _
    $region7: #{tpu_custom_call.1} parent=1 // pred_check_branch
      %29 = sbr.rel (0) target = $region9
    $region8: #{tpu_custom_call.1} parent=1 // pred_region
      %s31 = ssub.s32 256, 256
      %32 = vsyncadd [#allocation6], %s31
      %s33 = sshll.u32 [#allocation5], 4
      %s34 = int_to_ptr.vmem [resolvable:$true] %s33
      %39 = dma.hbm_to_vmem [thread:$0]  %s1, 256, %s34, [#allocation6], 128, 128, 8
    $region9: #{tpu_custom_call.1} parent=1 // pred_fallthru
      _
    // Predicated region
    $region10: #{tpu_custom_call.1} parent=1 // pred_check
      _
    $region11: #{tpu_custom_call.1} parent=1 // pred_check_branch
      %41 = sbr.rel (0) target = $region13
    $region12: #{tpu_custom_call.1} parent=1 // pred_region
      _
    $region13: #{tpu_custom_call.1} parent=1 // pred_fallthru
      _
    // Predicated region
    $region14: #{tpu_custom_call.1} parent=1 // pred_check
      _
    $region15: #{tpu_custom_call.1} parent=1 // pred_check_branch
      %43 = sbr.rel (0) target = $region17
    $region16: #{tpu_custom_call.1} parent=1 // pred_region
      _
    $region17: #{tpu_custom_call.1} parent=1 // pred_fallthru
      _
    // Predicated region
    $region18: #{tpu_custom_call.1} parent=1 // pred_check
      _
    $region19: #{tpu_custom_call.1} parent=1 // pred_check_branch
      %45 = sbr.rel (0) target = $region21
    $region20: #{tpu_custom_call.1} parent=1 // pred_region
      _
    $region21: #{tpu_custom_call.1} parent=1 // pred_fallthru
      _
    // Predicated region
    $region22: #{tpu_custom_call.1} parent=1 // pred_check
      _
    $region23: #{tpu_custom_call.1} parent=1 // pred_check_branch
      %47 = sbr.rel (0) target = $region25
    $region24: #{tpu_custom_call.1} parent=1 // pred_region
      _
    $region25: #{tpu_custom_call.1} parent=1 // pred_fallthru
      _
    // Predicated region
    $region26: #{tpu_custom_call.1} parent=1 // pred_check
      _
    $region27: #{tpu_custom_call.1} parent=1 // pred_check_branch
      %49 = sbr.rel (0) target = $region29
    $region28: #{tpu_custom_call.1} parent=1 // pred_region
      _
    $region29: #{tpu_custom_call.1} parent=1 // pred_fallthru
      _
    // Predicated region
    $region30: #{tpu_custom_call.1} parent=1 // pred_check
      _
    $region31: #{tpu_custom_call.1} parent=1 // pred_check_branch
      %51 = sbr.rel (0) target = $region33
    $region32: #{tpu_custom_call.1} parent=1 // pred_region
      _
    $region33: #{tpu_custom_call.1} parent=1 // pred_fallthru
      _
    // Predicated region
    $region34: #{tpu_custom_call.1} parent=1 // pred_check
      _
    $region35: #{tpu_custom_call.1} parent=1 // pred_check_branch
      %53 = sbr.rel (0) target = $region37
    $region36: #{tpu_custom_call.1} parent=1 // pred_region
      %54 = dma.done [#allocation3], 256
    $region37: #{tpu_custom_call.1} parent=1 // pred_fallthru
      _
    // Predicated region
    $region38: #{tpu_custom_call.1} parent=1 // pred_check
      _
    $region39: #{tpu_custom_call.1} parent=1 // pred_check_branch
      %56 = sbr.rel (0) target = $region41
    $region40: #{tpu_custom_call.1} parent=1 // pred_region
      %57 = dma.done [#allocation6], 256
    $region41: #{tpu_custom_call.1} parent=1 // pred_fallthru
      _
    %v59 = vld [vmem:[#allocation2] sm:$0xff]
    %v60 = vld [vmem:[#allocation2 + $0x8] sm:$0xff]
    %v61 = vld [vmem:[#allocation5] sm:$0xff]
    %v62 = vld [vmem:[#allocation5 + $0x8] sm:$0xff]
    %v63 = vld [vmem:[%s2] sm:$0xf]
    %v64 = vld [vmem:[%s2 + $0x4] sm:$0xf]
    %v65 = vld [vmem:[%s2 + $0x8] sm:$0xf]
    %v66 = vld [vmem:[%s2 + $0xc] sm:$0xf]
    %v67 = vld [vmem:[%s3] sm:$0xf]
    %v68 = vld [vmem:[%s3 + $0x4] sm:$0xf]
    %v69 = vld [vmem:[%s3 + $0x8] sm:$0xf]
    %v70 = vld [vmem:[%s3 + $0xc] sm:$0xf]
    %v71 = vld [vmem:[%s4] sm:$0xf]
    %v72 = vld [vmem:[%s4 + $0x4] sm:$0xf]
    %v73 = vld [vmem:[%s4 + $0x8] sm:$0xf]
    %v74 = vld [vmem:[%s4 + $0xc] sm:$0xf]
    %v75 = vld [vmem:[%s5] sm:$0xf]
    %v76 = vld [vmem:[%s5 + $0x4] sm:$0xf]
    %v77 = vld [vmem:[%s5 + $0x8] sm:$0xf]
    %v78 = vld [vmem:[%s5 + $0xc] sm:$0xf]
    %v79 = vld [vmem:[%s6] sm:$0xf]
    %v80 = vld [vmem:[%s6 + $0x4] sm:$0xf]
    %v81 = vld [vmem:[%s6 + $0x8] sm:$0xf]
    %v82 = vld [vmem:[%s6 + $0xc] sm:$0xf]
    %v83 = vld [vmem:[%s6 + $0x10] sm:$0xf]
    %v84 = vld [vmem:[%s6 + $0x14] sm:$0xf]
    %v85 = vld [vmem:[%s6 + $0x18] sm:$0xf]
    %v86 = vld [vmem:[%s6 + $0x1c] sm:$0xf]
    %v87 = vld [vmem:[%s7] sm:$0xff]
    %v88 = vld [vmem:[%s7 + $0x8] sm:$0x1]
    %v89 = vadd.f32 %v59, %v61
    %v90 = vadd.f32 %v60, %v62
    %v91 = vpack.c.bf16 %v90, %v89
    %v92 = vlaneseq
    %v93 = vshrl.u32 %v92, 7
    %v94 = vsub.s32 0, %v93
    %v95 = vrot.slane %v87, %v94
    %v100 = vunpack.c.l.b16 %v63
    %v101 = vunpack.c.l.b16 %v64
    %v102 = vunpack.c.l.b16 %v65
    %v103 = vunpack.c.l.b16 %v66
    %v104 = vpack.c.b16 %v101, %v100
    %v105 = vpack.c.b16 %v103, %v102
    %vm108 = vcmask 261120
    %v110 = vsel %vm108, %v91, 0
    %112 = vmatprep.subr.bf16.mxu0 0
    %113 = vmatpush1.bf16.msra.mxu0 %v104
    %114 = vmatprep.subr.bf16.mxu0 0
    %115 = vmatpush1.bf16.msra.mxu0 %v105
    %116 = vmatprep.subr.bf16.mxu0 0
    %117 = vmatpush1.bf16.msra.mxu0 0
    %118 = vmatprep.subr.bf16.mxu0 0
    %119 = vmatpush1.bf16.msra.mxu0 0
    %120 = vmatprep.subr.bf16.mxu0 0
    %121 = vmatpush1.bf16.msra.mxu0 0
    %122 = vmatprep.subr.bf16.mxu0 0
    %123 = vmatpush1.bf16.msra.mxu0 0
    %124 = vmatprep.subr.bf16.mxu0 0
    %125 = vmatpush1.bf16.msra.mxu0 0
    %126 = vmatprep.subr.bf16.mxu0 0
    %127 = vmatpush1.bf16.msra.mxu0 0
    %128 = vmatprep.subr.bf16.mxu0 0
    %129 = vmatpush1.bf16.msra.mxu0 0
    %130 = vmatprep.subr.bf16.mxu0 0
    %131 = vmatpush1.bf16.msra.mxu0 0
    %132 = vmatprep.subr.bf16.mxu0 0
    %133 = vmatpush1.bf16.msra.mxu0 0
    %134 = vmatprep.subr.bf16.mxu0 0
    %135 = vmatpush1.bf16.msra.mxu0 0
    %136 = vmatprep.subr.bf16.mxu0 0
    %137 = vmatpush1.bf16.msra.mxu0 0
    %138 = vmatprep.subr.bf16.mxu0 0
    %139 = vmatpush1.bf16.msra.mxu0 0
    %140 = vmatprep.subr.bf16.mxu0 0
    %141 = vmatpush1.bf16.msra.mxu0 0
    %142 = vmatprep.subr.bf16.mxu0 0
    %143 = vmatpush1.bf16.msra.mxu0 0
    %144 = vmatprep.mubr.bf16.mxu0 0
    %145 = vmatmul.mubr.bf16.gmra.mrb[0].mxu0 %v110
    %v146 = vpop.f32.mrb[0].mxu0
    %v147 = vadd.f32 %v95, %v146
    %v148 = vpop.f32.mrb[0].mxu0
    %v149 = vpop.f32.mrb[0].mxu0
    %v150 = vadd.f32 %v95, %v149
    %v151 = vpop.f32.mrb[0].mxu0
    %152 = vdwg.mxu0
    %v153 = vpack.c.bf16 %v60, %v59
    %v154 = vlaneseq
    %v155 = vshrl.u32 %v154, 7
    %v156 = vsub.s32 1, %v155
    %v157 = vrot.slane %v87, %v156
    %v162 = vunpack.c.l.b16 %v67
    %v163 = vunpack.c.l.b16 %v68
    %v164 = vunpack.c.l.b16 %v69
    %v165 = vunpack.c.l.b16 %v70
    %v166 = vpack.c.b16 %v163, %v162
    %v167 = vpack.c.b16 %v165, %v164
    %v171 = vsel %vm108, %v153, 0
    %173 = vmatprep.subr.bf16.mxu0 0
    %174 = vmatpush1.bf16.msra.mxu0 %v166
    %175 = vmatprep.subr.bf16.mxu0 0
    %176 = vmatpush1.bf16.msra.mxu0 %v167
    %177 = vmatprep.subr.bf16.mxu0 0
    %178 = vmatpush1.bf16.msra.mxu0 0
    %179 = vmatprep.subr.bf16.mxu0 0
    %180 = vmatpush1.bf16.msra.mxu0 0
    %181 = vmatprep.subr.bf16.mxu0 0
    %182 = vmatpush1.bf16.msra.mxu0 0
    %183 = vmatprep.subr.bf16.mxu0 0
    %184 = vmatpush1.bf16.msra.mxu0 0
    %185 = vmatprep.subr.bf16.mxu0 0
    %186 = vmatpush1.bf16.msra.mxu0 0
    %187 = vmatprep.subr.bf16.mxu0 0
    %188 = vmatpush1.bf16.msra.mxu0 0
    %189 = vmatprep.subr.bf16.mxu0 0
    %190 = vmatpush1.bf16.msra.mxu0 0
    %191 = vmatprep.subr.bf16.mxu0 0
    %192 = vmatpush1.bf16.msra.mxu0 0
    %193 = vmatprep.subr.bf16.mxu0 0
    %194 = vmatpush1.bf16.msra.mxu0 0
    %195 = vmatprep.subr.bf16.mxu0 0
    %196 = vmatpush1.bf16.msra.mxu0 0
    %197 = vmatprep.subr.bf16.mxu0 0
    %198 = vmatpush1.bf16.msra.mxu0 0
    %199 = vmatprep.subr.bf16.mxu0 0
    %200 = vmatpush1.bf16.msra.mxu0 0
    %201 = vmatprep.subr.bf16.mxu0 0
    %202 = vmatpush1.bf16.msra.mxu0 0
    %203 = vmatprep.subr.bf16.mxu0 0
    %204 = vmatpush1.bf16.msra.mxu0 0
    %205 = vmatprep.mubr.bf16.mxu0 0
    %206 = vmatmul.mubr.bf16.gmra.mrb[0].mxu0 %v171
    %v207 = vpop.f32.mrb[0].mxu0
    %v208 = vadd.f32 %v157, %v207
    %v209 = vpop.f32.mrb[0].mxu0
    %v210 = vpop.f32.mrb[0].mxu0
    %v211 = vadd.f32 %v157, %v210
    %v212 = vpop.f32.mrb[0].mxu0
    %213 = vdwg.mxu0
    %v214 = vmul.f32 %v147, 0.35355338
    %v215 = vmul.f32 %v150, 0.35355338
    %v216 = vpack.c.bf16 %v215, %v214
    %v217 = vpack.c.bf16 %v150, %v147
    %v218 = vpack.c.bf16 %v211, %v208
    %220 = vrot.lane.b32.xlu0 %v217, 96
    %v221 = vpop.permute.xlu0 %220
    %vm222 = vcmask 64512
    %v224 = vsel %vm222, %v216, 0
    %v227 = vsel %vm222, %v221, 0
    %229 = vmatprep.subr.bf16.mxu0 0
    %230 = vmatpush1.bf16.xpose.msra.mxu0 %v227
    %231 = vmatprep.subr.bf16.mxu0 0
    %232 = vmatpush1.bf16.xpose.msra.mxu0 0
    %233 = vmatprep.subr.bf16.mxu0 0
    %234 = vmatpush1.bf16.xpose.msra.mxu0 0
    %235 = vmatprep.subr.bf16.mxu0 0
    %236 = vmatpush1.bf16.xpose.msra.mxu0 0
    %237 = vmatprep.subr.bf16.mxu0 0
    %238 = vmatpush1.bf16.xpose.msra.mxu0 0
    %239 = vmatprep.subr.bf16.mxu0 0
    %240 = vmatpush1.bf16.xpose.msra.mxu0 0
    %241 = vmatprep.subr.bf16.mxu0 0
    %242 = vmatpush1.bf16.xpose.msra.mxu0 0
    %243 = vmatprep.subr.bf16.mxu0 0
    %244 = vmatpush1.bf16.xpose.msra.mxu0 0
    %245 = vmatprep.subr.bf16.mxu0 0
    %246 = vmatpush1.bf16.xpose.msra.mxu0 0
    %247 = vmatprep.subr.bf16.mxu0 0
    %248 = vmatpush1.bf16.xpose.msra.mxu0 0
    %249 = vmatprep.subr.bf16.mxu0 0
    %250 = vmatpush1.bf16.xpose.msra.mxu0 0
    %251 = vmatprep.subr.bf16.mxu0 0
    %252 = vmatpush1.bf16.xpose.msra.mxu0 0
    %253 = vmatprep.subr.bf16.mxu0 0
    %254 = vmatpush1.bf16.xpose.msra.mxu0 0
    %255 = vmatprep.subr.bf16.mxu0 0
    %256 = vmatpush1.bf16.xpose.msra.mxu0 0
    %257 = vmatprep.subr.bf16.mxu0 0
    %258 = vmatpush1.bf16.xpose.msra.mxu0 0
    %259 = vmatprep.subr.bf16.mxu0 0
    %260 = vmatpush1.bf16.xpose.msra.mxu0 0
    %261 = vmatprep.mubr.bf16.mxu0 0
    %262 = vmatmul.mubr.bf16.gmra.mrb[0].mxu0 %v224
    %v263 = vpop.f32.mrb[0].mxu0
    %v264 = vadd.f32 0.0, %v263
    %v265 = vpop.f32.mrb[0].mxu0
    %v266 = vpop.f32.mrb[0].mxu0
    %v267 = vpop.f32.mrb[0].mxu0
    %268 = vdwg.mxu0
    %v269 = vsel %vm222, %v264, -inf
    %270 = vmax.xlane.f32.xlu0 %v269
    %v271 = vpop.xlane.xlu0 %270
    %v272 = vsub.f32 %v264, %v271
    %v273 = vmul.f32 %v272, 1.442695
    %v274 = vpow.pop %v273
    %v275 = vsel %vm222, %v274, 0.0
    %276 = vadd.xlane.f32.xlu0 %v275
    %v277 = vpop.xlane.xlu0 %276
    %v278 = vrcp.pop %v277
    %v279 = vmul.f32 %v274, %v278
    %v280 = vpack.c.bf16 %v279, %v279
    %v282 = vsel %vm222, %v280, 0
    %vm284 = vcmask 1043456
    %v286 = vsel %vm284, %v218, 0
    %288 = vmatprep.subr.bf16.mxu0 0
    %289 = vmatpush1.bf16.msra.mxu0 %v286
    %290 = vmatprep.subr.bf16.mxu0 0
    %291 = vmatpush1.bf16.msra.mxu0 0
    %292 = vmatprep.subr.bf16.mxu0 0
    %293 = vmatpush1.bf16.msra.mxu0 0
    %294 = vmatprep.subr.bf16.mxu0 0
    %295 = vmatpush1.bf16.msra.mxu0 0
    %296 = vmatprep.subr.bf16.mxu0 0
    %297 = vmatpush1.bf16.msra.mxu0 0
    %298 = vmatprep.subr.bf16.mxu0 0
    %299 = vmatpush1.bf16.msra.mxu0 0
    %300 = vmatprep.subr.bf16.mxu0 0
    %301 = vmatpush1.bf16.msra.mxu0 0
    %302 = vmatprep.subr.bf16.mxu0 0
    %303 = vmatpush1.bf16.msra.mxu0 0
    %304 = vmatprep.subr.bf16.mxu0 0
    %305 = vmatpush1.bf16.msra.mxu0 0
    %306 = vmatprep.subr.bf16.mxu0 0
    %307 = vmatpush1.bf16.msra.mxu0 0
    %308 = vmatprep.subr.bf16.mxu0 0
    %309 = vmatpush1.bf16.msra.mxu0 0
    %310 = vmatprep.subr.bf16.mxu0 0
    %311 = vmatpush1.bf16.msra.mxu0 0
    %312 = vmatprep.subr.bf16.mxu0 0
    %313 = vmatpush1.bf16.msra.mxu0 0
    %314 = vmatprep.subr.bf16.mxu0 0
    %315 = vmatpush1.bf16.msra.mxu0 0
    %316 = vmatprep.subr.bf16.mxu0 0
    %317 = vmatpush1.bf16.msra.mxu0 0
    %318 = vmatprep.subr.bf16.mxu0 0
    %319 = vmatpush1.bf16.msra.mxu0 0
    %320 = vmatprep.mubr.bf16.mxu0 0
    %321 = vmatmul.mubr.bf16.gmra.mrb[0].mxu0 %v282
    %v322 = vpop.f32.mrb[0].mxu0
    %v323 = vadd.f32 0.0, %v322
    %v324 = vpop.f32.mrb[0].mxu0
    %v325 = vpop.f32.mrb[0].mxu0
    %v326 = vpop.f32.mrb[0].mxu0
    %327 = vdwg.mxu0
    %v328 = vpack.c.bf16 %v323, %v323
    %330 = vrot.lane.b32.xlu0 %v216, 120
    %v331 = vpop.permute.xlu0 %330
    %332 = vrot.lane.b32.xlu0 %v217, 88
    %v333 = vpop.permute.xlu0 %332
    %v335 = vsel %vm222, %v331, 0
    %v338 = vsel %vm222, %v333, 0
    %340 = vmatprep.subr.bf16.mxu0 0
    %341 = vmatpush1.bf16.xpose.msra.mxu0 %v338
    %342 = vmatprep.subr.bf16.mxu0 0
    %343 = vmatpush1.bf16.xpose.msra.mxu0 0
    %344 = vmatprep.subr.bf16.mxu0 0
    %345 = vmatpush1.bf16.xpose.msra.mxu0 0
    %346 = vmatprep.subr.bf16.mxu0 0
    %347 = vmatpush1.bf16.xpose.msra.mxu0 0
    %348 = vmatprep.subr.bf16.mxu0 0
    %349 = vmatpush1.bf16.xpose.msra.mxu0 0
    %350 = vmatprep.subr.bf16.mxu0 0
    %351 = vmatpush1.bf16.xpose.msra.mxu0 0
    %352 = vmatprep.subr.bf16.mxu0 0
    %353 = vmatpush1.bf16.xpose.msra.mxu0 0
    %354 = vmatprep.subr.bf16.mxu0 0
    %355 = vmatpush1.bf16.xpose.msra.mxu0 0
    %356 = vmatprep.subr.bf16.mxu0 0
    %357 = vmatpush1.bf16.xpose.msra.mxu0 0
    %358 = vmatprep.subr.bf16.mxu0 0
    %359 = vmatpush1.bf16.xpose.msra.mxu0 0
    %360 = vmatprep.subr.bf16.mxu0 0
    %361 = vmatpush1.bf16.xpose.msra.mxu0 0
    %362 = vmatprep.subr.bf16.mxu0 0
    %363 = vmatpush1.bf16.xpose.msra.mxu0 0
    %364 = vmatprep.subr.bf16.mxu0 0
    %365 = vmatpush1.bf16.xpose.msra.mxu0 0
    %366 = vmatprep.subr.bf16.mxu0 0
    %367 = vmatpush1.bf16.xpose.msra.mxu0 0
    %368 = vmatprep.subr.bf16.mxu0 0
    %369 = vmatpush1.bf16.xpose.msra.mxu0 0
    %370 = vmatprep.subr.bf16.mxu0 0
    %371 = vmatpush1.bf16.xpose.msra.mxu0 0
    %372 = vmatprep.mubr.bf16.mxu0 0
    %373 = vmatmul.mubr.bf16.gmra.mrb[0].mxu0 %v335
    %v374 = vpop.f32.mrb[0].mxu0
    %v375 = vadd.f32 0.0, %v374
    %v376 = vpop.f32.mrb[0].mxu0
    %v377 = vpop.f32.mrb[0].mxu0
    %v378 = vpop.f32.mrb[0].mxu0
    %379 = vdwg.mxu0
    %v380 = vsel %vm222, %v375, -inf
    %381 = vmax.xlane.f32.xlu0 %v380
    %v382 = vpop.xlane.xlu0 %381
    %v383 = vsub.f32 %v375, %v382
    %v384 = vmul.f32 %v383, 1.442695
    %v385 = vpow.pop %v384
    %v386 = vsel %vm222, %v385, 0.0
    %387 = vadd.xlane.f32.xlu0 %v386
    %v388 = vpop.xlane.xlu0 %387
    %v389 = vrcp.pop %v388
    %v390 = vmul.f32 %v385, %v389
    %v391 = vpack.c.bf16 %v390, %v390
    %393 = vrot.lane.b32.xlu0 %v218, 120
    %v394 = vpop.permute.xlu0 %393
    %v396 = vsel %vm222, %v391, 0
    %v399 = vsel %vm284, %v394, 0
    %401 = vmatprep.subr.bf16.mxu0 0
    %402 = vmatpush1.bf16.msra.mxu0 %v399
    %403 = vmatprep.subr.bf16.mxu0 0
    %404 = vmatpush1.bf16.msra.mxu0 0
    %405 = vmatprep.subr.bf16.mxu0 0
    %406 = vmatpush1.bf16.msra.mxu0 0
    %407 = vmatprep.subr.bf16.mxu0 0
    %408 = vmatpush1.bf16.msra.mxu0 0
    %409 = vmatprep.subr.bf16.mxu0 0
    %410 = vmatpush1.bf16.msra.mxu0 0
    %411 = vmatprep.subr.bf16.mxu0 0
    %412 = vmatpush1.bf16.msra.mxu0 0
    %413 = vmatprep.subr.bf16.mxu0 0
    %414 = vmatpush1.bf16.msra.mxu0 0
    %415 = vmatprep.subr.bf16.mxu0 0
    %416 = vmatpush1.bf16.msra.mxu0 0
    %417 = vmatprep.subr.bf16.mxu0 0
    %418 = vmatpush1.bf16.msra.mxu0 0
    %419 = vmatprep.subr.bf16.mxu0 0
    %420 = vmatpush1.bf16.msra.mxu0 0
    %421 = vmatprep.subr.bf16.mxu0 0
    %422 = vmatpush1.bf16.msra.mxu0 0
    %423 = vmatprep.subr.bf16.mxu0 0
    %424 = vmatpush1.bf16.msra.mxu0 0
    %425 = vmatprep.subr.bf16.mxu0 0
    %426 = vmatpush1.bf16.msra.mxu0 0
    %427 = vmatprep.subr.bf16.mxu0 0
    %428 = vmatpush1.bf16.msra.mxu0 0
    %429 = vmatprep.subr.bf16.mxu0 0
    %430 = vmatpush1.bf16.msra.mxu0 0
    %431 = vmatprep.subr.bf16.mxu0 0
    %432 = vmatpush1.bf16.msra.mxu0 0
    %433 = vmatprep.mubr.bf16.mxu0 0
    %434 = vmatmul.mubr.bf16.gmra.mrb[0].mxu0 %v396
    %v435 = vpop.f32.mrb[0].mxu0
    %v436 = vadd.f32 0.0, %v435
    %v437 = vpop.f32.mrb[0].mxu0
    %v438 = vpop.f32.mrb[0].mxu0
    %v439 = vpop.f32.mrb[0].mxu0
    %440 = vdwg.mxu0
    %v441 = vpack.c.bf16 %v436, %v436
    %v443 = vsel %vm222, %v441, 0
    %v446 = vsel %vm284, %v72, 0
    %448 = vmatprep.subr.bf16.mxu0 0
    %449 = vmatpush1.bf16.msra.mxu0 %v446
    %450 = vmatprep.subr.bf16.mxu0 0
    %451 = vmatpush1.bf16.msra.mxu0 0
    %452 = vmatprep.subr.bf16.mxu0 0
    %453 = vmatpush1.bf16.msra.mxu0 0
    %454 = vmatprep.subr.bf16.mxu0 0
    %455 = vmatpush1.bf16.msra.mxu0 0
    %456 = vmatprep.subr.bf16.mxu0 0
    %457 = vmatpush1.bf16.msra.mxu0 0
    %458 = vmatprep.subr.bf16.mxu0 0
    %459 = vmatpush1.bf16.msra.mxu0 0
    %460 = vmatprep.subr.bf16.mxu0 0
    %461 = vmatpush1.bf16.msra.mxu0 0
    %462 = vmatprep.subr.bf16.mxu0 0
    %463 = vmatpush1.bf16.msra.mxu0 0
    %464 = vmatprep.subr.bf16.mxu0 0
    %465 = vmatpush1.bf16.msra.mxu0 0
    %466 = vmatprep.subr.bf16.mxu0 0
    %467 = vmatpush1.bf16.msra.mxu0 0
    %468 = vmatprep.subr.bf16.mxu0 0
    %469 = vmatpush1.bf16.msra.mxu0 0
    %470 = vmatprep.subr.bf16.mxu0 0
    %471 = vmatpush1.bf16.msra.mxu0 0
    %472 = vmatprep.subr.bf16.mxu0 0
    %473 = vmatpush1.bf16.msra.mxu0 0
    %474 = vmatprep.subr.bf16.mxu0 0
    %475 = vmatpush1.bf16.msra.mxu0 0
    %476 = vmatprep.subr.bf16.mxu0 0
    %477 = vmatpush1.bf16.msra.mxu0 0
    %478 = vmatprep.subr.bf16.mxu0 0
    %479 = vmatpush1.bf16.msra.mxu0 0
    %480 = vmatprep.mubr.bf16.mxu0 0
    %481 = vmatmul.mubr.bf16.gmra.mrb[0].mxu0 %v443
    %v482 = vpop.f32.mrb[0].mxu0
    %v483 = vadd.f32 0.0, %v482
    %v484 = vpop.f32.mrb[0].mxu0
    %v485 = vpop.f32.mrb[0].mxu0
    %v486 = vpop.f32.mrb[0].mxu0
    %487 = vdwg.mxu0
    %v489 = vsel %vm222, %v328, 0
    %v492 = vsel %vm284, %v71, 0
    %494 = vmatprep.subr.bf16.mxu0 0
    %495 = vmatpush1.bf16.msra.mxu0 %v492
    %496 = vmatprep.subr.bf16.mxu0 0
    %497 = vmatpush1.bf16.msra.mxu0 0
    %498 = vmatprep.subr.bf16.mxu0 0
    %499 = vmatpush1.bf16.msra.mxu0 0
    %500 = vmatprep.subr.bf16.mxu0 0
    %501 = vmatpush1.bf16.msra.mxu0 0
    %502 = vmatprep.subr.bf16.mxu0 0
    %503 = vmatpush1.bf16.msra.mxu0 0
    %504 = vmatprep.subr.bf16.mxu0 0
    %505 = vmatpush1.bf16.msra.mxu0 0
    %506 = vmatprep.subr.bf16.mxu0 0
    %507 = vmatpush1.bf16.msra.mxu0 0
    %508 = vmatprep.subr.bf16.mxu0 0
    %509 = vmatpush1.bf16.msra.mxu0 0
    %510 = vmatprep.subr.bf16.mxu0 0
    %511 = vmatpush1.bf16.msra.mxu0 0
    %512 = vmatprep.subr.bf16.mxu0 0
    %513 = vmatpush1.bf16.msra.mxu0 0
    %514 = vmatprep.subr.bf16.mxu0 0
    %515 = vmatpush1.bf16.msra.mxu0 0
    %516 = vmatprep.subr.bf16.mxu0 0
    %517 = vmatpush1.bf16.msra.mxu0 0
    %518 = vmatprep.subr.bf16.mxu0 0
    %519 = vmatpush1.bf16.msra.mxu0 0
    %520 = vmatprep.subr.bf16.mxu0 0
    %521 = vmatpush1.bf16.msra.mxu0 0
    %522 = vmatprep.subr.bf16.mxu0 0
    %523 = vmatpush1.bf16.msra.mxu0 0
    %524 = vmatprep.subr.bf16.mxu0 0
    %525 = vmatpush1.bf16.msra.mxu0 0
    %526 = vmatprep.mubr.bf16.mxu0 0
    %527 = vmatmul.mubr.bf16.gmra.mrb[0].mxu0 %v489
    %v528 = vpop.f32.mrb[0].mxu0
    %v529 = vadd.f32 %v483, %v528
    %v530 = vpop.f32.mrb[0].mxu0
    %v531 = vpop.f32.mrb[0].mxu0
    %v532 = vpop.f32.mrb[0].mxu0
    %533 = vdwg.mxu0
    %534 = vrot.lane.b32.xlu0 %v216, 112
    %v535 = vpop.permute.xlu0 %534
    %536 = vrot.lane.b32.xlu0 %v217, 80
    %v537 = vpop.permute.xlu0 %536
    %v539 = vsel %vm222, %v535, 0
    %v542 = vsel %vm222, %v537, 0
    %544 = vmatprep.subr.bf16.mxu0 0
    %545 = vmatpush1.bf16.xpose.msra.mxu0 %v542
    %546 = vmatprep.subr.bf16.mxu0 0
    %547 = vmatpush1.bf16.xpose.msra.mxu0 0
    %548 = vmatprep.subr.bf16.mxu0 0
    %549 = vmatpush1.bf16.xpose.msra.mxu0 0
    %550 = vmatprep.subr.bf16.mxu0 0
    %551 = vmatpush1.bf16.xpose.msra.mxu0 0
    %552 = vmatprep.subr.bf16.mxu0 0
    %553 = vmatpush1.bf16.xpose.msra.mxu0 0
    %554 = vmatprep.subr.bf16.mxu0 0
    %555 = vmatpush1.bf16.xpose.msra.mxu0 0
    %556 = vmatprep.subr.bf16.mxu0 0
    %557 = vmatpush1.bf16.xpose.msra.mxu0 0
    %558 = vmatprep.subr.bf16.mxu0 0
    %559 = vmatpush1.bf16.xpose.msra.mxu0 0
    %560 = vmatprep.subr.bf16.mxu0 0
    %561 = vmatpush1.bf16.xpose.msra.mxu0 0
    %562 = vmatprep.subr.bf16.mxu0 0
    %563 = vmatpush1.bf16.xpose.msra.mxu0 0
    %564 = vmatprep.subr.bf16.mxu0 0
    %565 = vmatpush1.bf16.xpose.msra.mxu0 0
    %566 = vmatprep.subr.bf16.mxu0 0
    %567 = vmatpush1.bf16.xpose.msra.mxu0 0
    %568 = vmatprep.subr.bf16.mxu0 0
    %569 = vmatpush1.bf16.xpose.msra.mxu0 0
    %570 = vmatprep.subr.bf16.mxu0 0
    %571 = vmatpush1.bf16.xpose.msra.mxu0 0
    %572 = vmatprep.subr.bf16.mxu0 0
    %573 = vmatpush1.bf16.xpose.msra.mxu0 0
    %574 = vmatprep.subr.bf16.mxu0 0
    %575 = vmatpush1.bf16.xpose.msra.mxu0 0
    %576 = vmatprep.mubr.bf16.mxu0 0
    %577 = vmatmul.mubr.bf16.gmra.mrb[0].mxu0 %v539
    %v578 = vpop.f32.mrb[0].mxu0
    %v579 = vadd.f32 0.0, %v578
    %v580 = vpop.f32.mrb[0].mxu0
    %v581 = vpop.f32.mrb[0].mxu0
    %v582 = vpop.f32.mrb[0].mxu0
    %583 = vdwg.mxu0
    %v584 = vsel %vm222, %v579, -inf
    %585 = vmax.xlane.f32.xlu0 %v584
    %v586 = vpop.xlane.xlu0 %585
    %v587 = vsub.f32 %v579, %v586
    %v588 = vmul.f32 %v587, 1.442695
    %v589 = vpow.pop %v588
    %v590 = vsel %vm222, %v589, 0.0
    %591 = vadd.xlane.f32.xlu0 %v590
    %v592 = vpop.xlane.xlu0 %591
    %v593 = vrcp.pop %v592
    %v594 = vmul.f32 %v589, %v593
    %v595 = vpack.c.bf16 %v594, %v594
    %596 = vrot.lane.b32.xlu0 %v218, 112
    %v597 = vpop.permute.xlu0 %596
    %v599 = vsel %vm222, %v595, 0
    %v602 = vsel %vm284, %v597, 0
    %604 = vmatprep.subr.bf16.mxu0 0
    %605 = vmatpush1.bf16.msra.mxu0 %v602
    %606 = vmatprep.subr.bf16.mxu0 0
    %607 = vmatpush1.bf16.msra.mxu0 0
    %608 = vmatprep.subr.bf16.mxu0 0
    %609 = vmatpush1.bf16.msra.mxu0 0
    %610 = vmatprep.subr.bf16.mxu0 0
    %611 = vmatpush1.bf16.msra.mxu0 0
    %612 = vmatprep.subr.bf16.mxu0 0
    %613 = vmatpush1.bf16.msra.mxu0 0
    %614 = vmatprep.subr.bf16.mxu0 0
    %615 = vmatpush1.bf16.msra.mxu0 0
    %616 = vmatprep.subr.bf16.mxu0 0
    %617 = vmatpush1.bf16.msra.mxu0 0
    %618 = vmatprep.subr.bf16.mxu0 0
    %619 = vmatpush1.bf16.msra.mxu0 0
    %620 = vmatprep.subr.bf16.mxu0 0
    %621 = vmatpush1.bf16.msra.mxu0 0
    %622 = vmatprep.subr.bf16.mxu0 0
    %623 = vmatpush1.bf16.msra.mxu0 0
    %624 = vmatprep.subr.bf16.mxu0 0
    %625 = vmatpush1.bf16.msra.mxu0 0
    %626 = vmatprep.subr.bf16.mxu0 0
    %627 = vmatpush1.bf16.msra.mxu0 0
    %628 = vmatprep.subr.bf16.mxu0 0
    %629 = vmatpush1.bf16.msra.mxu0 0
    %630 = vmatprep.subr.bf16.mxu0 0
    %631 = vmatpush1.bf16.msra.mxu0 0
    %632 = vmatprep.subr.bf16.mxu0 0
    %633 = vmatpush1.bf16.msra.mxu0 0
    %634 = vmatprep.subr.bf16.mxu0 0
    %635 = vmatpush1.bf16.msra.mxu0 0
    %636 = vmatprep.mubr.bf16.mxu0 0
    %637 = vmatmul.mubr.bf16.gmra.mrb[0].mxu0 %v599
    %v638 = vpop.f32.mrb[0].mxu0
    %v639 = vadd.f32 0.0, %v638
    %v640 = vpop.f32.mrb[0].mxu0
    %v641 = vpop.f32.mrb[0].mxu0
    %v642 = vpop.f32.mrb[0].mxu0
    %643 = vdwg.mxu0
    %v644 = vpack.c.bf16 %v639, %v639
    %v646 = vsel %vm222, %v644, 0
    %v649 = vsel %vm284, %v73, 0
    %651 = vmatprep.subr.bf16.mxu0 0
    %652 = vmatpush1.bf16.msra.mxu0 %v649
    %653 = vmatprep.subr.bf16.mxu0 0
    %654 = vmatpush1.bf16.msra.mxu0 0
    %655 = vmatprep.subr.bf16.mxu0 0
    %656 = vmatpush1.bf16.msra.mxu0 0
    %657 = vmatprep.subr.bf16.mxu0 0
    %658 = vmatpush1.bf16.msra.mxu0 0
    %659 = vmatprep.subr.bf16.mxu0 0
    %660 = vmatpush1.bf16.msra.mxu0 0
    %661 = vmatprep.subr.bf16.mxu0 0
    %662 = vmatpush1.bf16.msra.mxu0 0
    %663 = vmatprep.subr.bf16.mxu0 0
    %664 = vmatpush1.bf16.msra.mxu0 0
    %665 = vmatprep.subr.bf16.mxu0 0
    %666 = vmatpush1.bf16.msra.mxu0 0
    %667 = vmatprep.subr.bf16.mxu0 0
    %668 = vmatpush1.bf16.msra.mxu0 0
    %669 = vmatprep.subr.bf16.mxu0 0
    %670 = vmatpush1.bf16.msra.mxu0 0
    %671 = vmatprep.subr.bf16.mxu0 0
    %672 = vmatpush1.bf16.msra.mxu0 0
    %673 = vmatprep.subr.bf16.mxu0 0
    %674 = vmatpush1.bf16.msra.mxu0 0
    %675 = vmatprep.subr.bf16.mxu0 0
    %676 = vmatpush1.bf16.msra.mxu0 0
    %677 = vmatprep.subr.bf16.mxu0 0
    %678 = vmatpush1.bf16.msra.mxu0 0
    %679 = vmatprep.subr.bf16.mxu0 0
    %680 = vmatpush1.bf16.msra.mxu0 0
    %681 = vmatprep.subr.bf16.mxu0 0
    %682 = vmatpush1.bf16.msra.mxu0 0
    %683 = vmatprep.mubr.bf16.mxu0 0
    %684 = vmatmul.mubr.bf16.gmra.mrb[0].mxu0 %v646
    %v685 = vpop.f32.mrb[0].mxu0
    %v686 = vadd.f32 0.0, %v685
    %v687 = vpop.f32.mrb[0].mxu0
    %v688 = vpop.f32.mrb[0].mxu0
    %v689 = vpop.f32.mrb[0].mxu0
    %690 = vdwg.mxu0
    %v691 = vadd.f32 %v529, %v686
    %692 = vrot.lane.b32.xlu0 %v216, 104
    %v693 = vpop.permute.xlu0 %692
    %694 = vrot.lane.b32.xlu0 %v217, 72
    %v695 = vpop.permute.xlu0 %694
    %v697 = vsel %vm222, %v693, 0
    %v700 = vsel %vm222, %v695, 0
    %702 = vmatprep.subr.bf16.mxu0 0
    %703 = vmatpush1.bf16.xpose.msra.mxu0 %v700
    %704 = vmatprep.subr.bf16.mxu0 0
    %705 = vmatpush1.bf16.xpose.msra.mxu0 0
    %706 = vmatprep.subr.bf16.mxu0 0
    %707 = vmatpush1.bf16.xpose.msra.mxu0 0
    %708 = vmatprep.subr.bf16.mxu0 0
    %709 = vmatpush1.bf16.xpose.msra.mxu0 0
    %710 = vmatprep.subr.bf16.mxu0 0
    %711 = vmatpush1.bf16.xpose.msra.mxu0 0
    %712 = vmatprep.subr.bf16.mxu0 0
    %713 = vmatpush1.bf16.xpose.msra.mxu0 0
    %714 = vmatprep.subr.bf16.mxu0 0
    %715 = vmatpush1.bf16.xpose.msra.mxu0 0
    %716 = vmatprep.subr.bf16.mxu0 0
    %717 = vmatpush1.bf16.xpose.msra.mxu0 0
    %718 = vmatprep.subr.bf16.mxu0 0
    %719 = vmatpush1.bf16.xpose.msra.mxu0 0
    %720 = vmatprep.subr.bf16.mxu0 0
    %721 = vmatpush1.bf16.xpose.msra.mxu0 0
    %722 = vmatprep.subr.bf16.mxu0 0
    %723 = vmatpush1.bf16.xpose.msra.mxu0 0
    %724 = vmatprep.subr.bf16.mxu0 0
    %725 = vmatpush1.bf16.xpose.msra.mxu0 0
    %726 = vmatprep.subr.bf16.mxu0 0
    %727 = vmatpush1.bf16.xpose.msra.mxu0 0
    %728 = vmatprep.subr.bf16.mxu0 0
    %729 = vmatpush1.bf16.xpose.msra.mxu0 0
    %730 = vmatprep.subr.bf16.mxu0 0
    %731 = vmatpush1.bf16.xpose.msra.mxu0 0
    %732 = vmatprep.subr.bf16.mxu0 0
    %733 = vmatpush1.bf16.xpose.msra.mxu0 0
    %734 = vmatprep.mubr.bf16.mxu0 0
    %735 = vmatmul.mubr.bf16.gmra.mrb[0].mxu0 %v697
    %v736 = vpop.f32.mrb[0].mxu0
    %v737 = vadd.f32 0.0, %v736
    %v738 = vpop.f32.mrb[0].mxu0
    %v739 = vpop.f32.mrb[0].mxu0
    %v740 = vpop.f32.mrb[0].mxu0
    %741 = vdwg.mxu0
    %v742 = vsel %vm222, %v737, -inf
    %743 = vmax.xlane.f32.xlu0 %v742
    %v744 = vpop.xlane.xlu0 %743
    %v745 = vsub.f32 %v737, %v744
    %v746 = vmul.f32 %v745, 1.442695
    %v747 = vpow.pop %v746
    %v748 = vsel %vm222, %v747, 0.0
    %749 = vadd.xlane.f32.xlu0 %v748
    %v750 = vpop.xlane.xlu0 %749
    %v751 = vrcp.pop %v750
    %v752 = vmul.f32 %v747, %v751
    %v753 = vpack.c.bf16 %v752, %v752
    %754 = vrot.lane.b32.xlu0 %v218, 104
    %v755 = vpop.permute.xlu0 %754
    %v757 = vsel %vm222, %v753, 0
    %v760 = vsel %vm284, %v755, 0
    %762 = vmatprep.subr.bf16.mxu0 0
    %763 = vmatpush1.bf16.msra.mxu0 %v760
    %764 = vmatprep.subr.bf16.mxu0 0
    %765 = vmatpush1.bf16.msra.mxu0 0
    %766 = vmatprep.subr.bf16.mxu0 0
    %767 = vmatpush1.bf16.msra.mxu0 0
    %768 = vmatprep.subr.bf16.mxu0 0
    %769 = vmatpush1.bf16.msra.mxu0 0
    %770 = vmatprep.subr.bf16.mxu0 0
    %771 = vmatpush1.bf16.msra.mxu0 0
    %772 = vmatprep.subr.bf16.mxu0 0
    %773 = vmatpush1.bf16.msra.mxu0 0
    %774 = vmatprep.subr.bf16.mxu0 0
    %775 = vmatpush1.bf16.msra.mxu0 0
    %776 = vmatprep.subr.bf16.mxu0 0
    %777 = vmatpush1.bf16.msra.mxu0 0
    %778 = vmatprep.subr.bf16.mxu0 0
    %779 = vmatpush1.bf16.msra.mxu0 0
    %780 = vmatprep.subr.bf16.mxu0 0
    %781 = vmatpush1.bf16.msra.mxu0 0
    %782 = vmatprep.subr.bf16.mxu0 0
    %783 = vmatpush1.bf16.msra.mxu0 0
    %784 = vmatprep.subr.bf16.mxu0 0
    %785 = vmatpush1.bf16.msra.mxu0 0
    %786 = vmatprep.subr.bf16.mxu0 0
    %787 = vmatpush1.bf16.msra.mxu0 0
    %788 = vmatprep.subr.bf16.mxu0 0
    %789 = vmatpush1.bf16.msra.mxu0 0
    %790 = vmatprep.subr.bf16.mxu0 0
    %791 = vmatpush1.bf16.msra.mxu0 0
    %792 = vmatprep.subr.bf16.mxu0 0
    %793 = vmatpush1.bf16.msra.mxu0 0
    %794 = vmatprep.mubr.bf16.mxu0 0
    %795 = vmatmul.mubr.bf16.gmra.mrb[0].mxu0 %v757
    %v796 = vpop.f32.mrb[0].mxu0
    %v797 = vadd.f32 0.0, %v796
    %v798 = vpop.f32.mrb[0].mxu0
    %v799 = vpop.f32.mrb[0].mxu0
    %v800 = vpop.f32.mrb[0].mxu0
    %801 = vdwg.mxu0
    %v802 = vpack.c.bf16 %v797, %v797
    %v804 = vsel %vm222, %v802, 0
    %v807 = vsel %vm284, %v74, 0
    %809 = vmatprep.subr.bf16.mxu0 0
    %810 = vmatpush1.bf16.msra.mxu0 %v807
    %811 = vmatprep.subr.bf16.mxu0 0
    %812 = vmatpush1.bf16.msra.mxu0 0
    %813 = vmatprep.subr.bf16.mxu0 0
    %814 = vmatpush1.bf16.msra.mxu0 0
    %815 = vmatprep.subr.bf16.mxu0 0
    %816 = vmatpush1.bf16.msra.mxu0 0
    %817 = vmatprep.subr.bf16.mxu0 0
    %818 = vmatpush1.bf16.msra.mxu0 0
    %819 = vmatprep.subr.bf16.mxu0 0
    %820 = vmatpush1.bf16.msra.mxu0 0
    %821 = vmatprep.subr.bf16.mxu0 0
    %822 = vmatpush1.bf16.msra.mxu0 0
    %823 = vmatprep.subr.bf16.mxu0 0
    %824 = vmatpush1.bf16.msra.mxu0 0
    %825 = vmatprep.subr.bf16.mxu0 0
    %826 = vmatpush1.bf16.msra.mxu0 0
    %827 = vmatprep.subr.bf16.mxu0 0
    %828 = vmatpush1.bf16.msra.mxu0 0
    %829 = vmatprep.subr.bf16.mxu0 0
    %830 = vmatpush1.bf16.msra.mxu0 0
    %831 = vmatprep.subr.bf16.mxu0 0
    %832 = vmatpush1.bf16.msra.mxu0 0
    %833 = vmatprep.subr.bf16.mxu0 0
    %834 = vmatpush1.bf16.msra.mxu0 0
    %835 = vmatprep.subr.bf16.mxu0 0
    %836 = vmatpush1.bf16.msra.mxu0 0
    %837 = vmatprep.subr.bf16.mxu0 0
    %838 = vmatpush1.bf16.msra.mxu0 0
    %839 = vmatprep.subr.bf16.mxu0 0
    %840 = vmatpush1.bf16.msra.mxu0 0
    %841 = vmatprep.mubr.bf16.mxu0 0
    %842 = vmatmul.mubr.bf16.gmra.mrb[0].mxu0 %v804
    %v843 = vpop.f32.mrb[0].mxu0
    %v844 = vadd.f32 0.0, %v843
    %v845 = vpop.f32.mrb[0].mxu0
    %v846 = vpop.f32.mrb[0].mxu0
    %v847 = vpop.f32.mrb[0].mxu0
    %848 = vdwg.mxu0
    %v849 = vadd.f32 %v691, %v844
    %v850 = vrot.slane %v216, 4
    %v851 = vrot.slane %v217, 4
    %852 = vrot.lane.b32.xlu0 %v851, 96
    %v853 = vpop.permute.xlu0 %852
    %v855 = vsel %vm222, %v850, 0
    %v858 = vsel %vm222, %v853, 0
    %860 = vmatprep.subr.bf16.mxu0 0
    %861 = vmatpush1.bf16.xpose.msra.mxu0 %v858
    %862 = vmatprep.subr.bf16.mxu0 0
    %863 = vmatpush1.bf16.xpose.msra.mxu0 0
    %864 = vmatprep.subr.bf16.mxu0 0
    %865 = vmatpush1.bf16.xpose.msra.mxu0 0
    %866 = vmatprep.subr.bf16.mxu0 0
    %867 = vmatpush1.bf16.xpose.msra.mxu0 0
    %868 = vmatprep.subr.bf16.mxu0 0
    %869 = vmatpush1.bf16.xpose.msra.mxu0 0
    %870 = vmatprep.subr.bf16.mxu0 0
    %871 = vmatpush1.bf16.xpose.msra.mxu0 0
    %872 = vmatprep.subr.bf16.mxu0 0
    %873 = vmatpush1.bf16.xpose.msra.mxu0 0
    %874 = vmatprep.subr.bf16.mxu0 0
    %875 = vmatpush1.bf16.xpose.msra.mxu0 0
    %876 = vmatprep.subr.bf16.mxu0 0
    %877 = vmatpush1.bf16.xpose.msra.mxu0 0
    %878 = vmatprep.subr.bf16.mxu0 0
    %879 = vmatpush1.bf16.xpose.msra.mxu0 0
    %880 = vmatprep.subr.bf16.mxu0 0
    %881 = vmatpush1.bf16.xpose.msra.mxu0 0
    %882 = vmatprep.subr.bf16.mxu0 0
    %883 = vmatpush1.bf16.xpose.msra.mxu0 0
    %884 = vmatprep.subr.bf16.mxu0 0
    %885 = vmatpush1.bf16.xpose.msra.mxu0 0
    %886 = vmatprep.subr.bf16.mxu0 0
    %887 = vmatpush1.bf16.xpose.msra.mxu0 0
    %888 = vmatprep.subr.bf16.mxu0 0
    %889 = vmatpush1.bf16.xpose.msra.mxu0 0
    %890 = vmatprep.subr.bf16.mxu0 0
    %891 = vmatpush1.bf16.xpose.msra.mxu0 0
    %892 = vmatprep.mubr.bf16.mxu0 0
    %893 = vmatmul.mubr.bf16.gmra.mrb[0].mxu0 %v855
    %v894 = vpop.f32.mrb[0].mxu0
    %v895 = vadd.f32 0.0, %v894
    %v896 = vpop.f32.mrb[0].mxu0
    %v897 = vpop.f32.mrb[0].mxu0
    %v898 = vpop.f32.mrb[0].mxu0
    %899 = vdwg.mxu0
    %v900 = vsel %vm222, %v895, -inf
    %901 = vmax.xlane.f32.xlu0 %v900
    %v902 = vpop.xlane.xlu0 %901
    %v903 = vsub.f32 %v895, %v902
    %v904 = vmul.f32 %v903, 1.442695
    %v905 = vpow.pop %v904
    %v906 = vsel %vm222, %v905, 0.0
    %907 = vadd.xlane.f32.xlu0 %v906
    %v908 = vpop.xlane.xlu0 %907
    %v909 = vrcp.pop %v908
    %v910 = vmul.f32 %v905, %v909
    %v911 = vpack.c.bf16 %v910, %v910
    %v912 = vrot.slane %v218, 4
    %v914 = vsel %vm222, %v911, 0
    %v917 = vsel %vm284, %v912, 0
    %919 = vmatprep.subr.bf16.mxu0 0
    %920 = vmatpush1.bf16.msra.mxu0 %v917
    %921 = vmatprep.subr.bf16.mxu0 0
    %922 = vmatpush1.bf16.msra.mxu0 0
    %923 = vmatprep.subr.bf16.mxu0 0
    %924 = vmatpush1.bf16.msra.mxu0 0
    %925 = vmatprep.subr.bf16.mxu0 0
    %926 = vmatpush1.bf16.msra.mxu0 0
    %927 = vmatprep.subr.bf16.mxu0 0
    %928 = vmatpush1.bf16.msra.mxu0 0
    %929 = vmatprep.subr.bf16.mxu0 0
    %930 = vmatpush1.bf16.msra.mxu0 0
    %931 = vmatprep.subr.bf16.mxu0 0
    %932 = vmatpush1.bf16.msra.mxu0 0
    %933 = vmatprep.subr.bf16.mxu0 0
    %934 = vmatpush1.bf16.msra.mxu0 0
    %935 = vmatprep.subr.bf16.mxu0 0
    %936 = vmatpush1.bf16.msra.mxu0 0
    %937 = vmatprep.subr.bf16.mxu0 0
    %938 = vmatpush1.bf16.msra.mxu0 0
    %939 = vmatprep.subr.bf16.mxu0 0
    %940 = vmatpush1.bf16.msra.mxu0 0
    %941 = vmatprep.subr.bf16.mxu0 0
    %942 = vmatpush1.bf16.msra.mxu0 0
    %943 = vmatprep.subr.bf16.mxu0 0
    %944 = vmatpush1.bf16.msra.mxu0 0
    %945 = vmatprep.subr.bf16.mxu0 0
    %946 = vmatpush1.bf16.msra.mxu0 0
    %947 = vmatprep.subr.bf16.mxu0 0
    %948 = vmatpush1.bf16.msra.mxu0 0
    %949 = vmatprep.subr.bf16.mxu0 0
    %950 = vmatpush1.bf16.msra.mxu0 0
    %951 = vmatprep.mubr.bf16.mxu0 0
    %952 = vmatmul.mubr.bf16.gmra.mrb[0].mxu0 %v914
    %v953 = vpop.f32.mrb[0].mxu0
    %v954 = vadd.f32 0.0, %v953
    %v955 = vpop.f32.mrb[0].mxu0
    %v956 = vpop.f32.mrb[0].mxu0
    %v957 = vpop.f32.mrb[0].mxu0
    %958 = vdwg.mxu0
    %v959 = vpack.c.bf16 %v954, %v954
    %960 = vrot.lane.b32.xlu0 %v850, 120
    %v961 = vpop.permute.xlu0 %960
    %962 = vrot.lane.b32.xlu0 %v851, 88
    %v963 = vpop.permute.xlu0 %962
    %v965 = vsel %vm222, %v961, 0
    %v968 = vsel %vm222, %v963, 0
    %970 = vmatprep.subr.bf16.mxu0 0
    %971 = vmatpush1.bf16.xpose.msra.mxu0 %v968
    %972 = vmatprep.subr.bf16.mxu0 0
    %973 = vmatpush1.bf16.xpose.msra.mxu0 0
    %974 = vmatprep.subr.bf16.mxu0 0
    %975 = vmatpush1.bf16.xpose.msra.mxu0 0
    %976 = vmatprep.subr.bf16.mxu0 0
    %977 = vmatpush1.bf16.xpose.msra.mxu0 0
    %978 = vmatprep.subr.bf16.mxu0 0
    %979 = vmatpush1.bf16.xpose.msra.mxu0 0
    %980 = vmatprep.subr.bf16.mxu0 0
    %981 = vmatpush1.bf16.xpose.msra.mxu0 0
    %982 = vmatprep.subr.bf16.mxu0 0
    %983 = vmatpush1.bf16.xpose.msra.mxu0 0
    %984 = vmatprep.subr.bf16.mxu0 0
    %985 = vmatpush1.bf16.xpose.msra.mxu0 0
    %986 = vmatprep.subr.bf16.mxu0 0
    %987 = vmatpush1.bf16.xpose.msra.mxu0 0
    %988 = vmatprep.subr.bf16.mxu0 0
    %989 = vmatpush1.bf16.xpose.msra.mxu0 0
    %990 = vmatprep.subr.bf16.mxu0 0
    %991 = vmatpush1.bf16.xpose.msra.mxu0 0
    %992 = vmatprep.subr.bf16.mxu0 0
    %993 = vmatpush1.bf16.xpose.msra.mxu0 0
    %994 = vmatprep.subr.bf16.mxu0 0
    %995 = vmatpush1.bf16.xpose.msra.mxu0 0
    %996 = vmatprep.subr.bf16.mxu0 0
    %997 = vmatpush1.bf16.xpose.msra.mxu0 0
    %998 = vmatprep.subr.bf16.mxu0 0
    %999 = vmatpush1.bf16.xpose.msra.mxu0 0
    %1000 = vmatprep.subr.bf16.mxu0 0
    %1001 = vmatpush1.bf16.xpose.msra.mxu0 0
    %1002 = vmatprep.mubr.bf16.mxu0 0
    %1003 = vmatmul.mubr.bf16.gmra.mrb[0].mxu0 %v965
    %v1004 = vpop.f32.mrb[0].mxu0
    %v1005 = vadd.f32 0.0, %v1004
    %v1006 = vpop.f32.mrb[0].mxu0
    %v1007 = vpop.f32.mrb[0].mxu0
    %v1008 = vpop.f32.mrb[0].mxu0
    %1009 = vdwg.mxu0
    %v1010 = vsel %vm222, %v1005, -inf
    %1011 = vmax.xlane.f32.xlu0 %v1010
    %v1012 = vpop.xlane.xlu0 %1011
    %v1013 = vsub.f32 %v1005, %v1012
    %v1014 = vmul.f32 %v1013, 1.442695
    %v1015 = vpow.pop %v1014
    %v1016 = vsel %vm222, %v1015, 0.0
    %1017 = vadd.xlane.f32.xlu0 %v1016
    %v1018 = vpop.xlane.xlu0 %1017
    %v1019 = vrcp.pop %v1018
    %v1020 = vmul.f32 %v1015, %v1019
    %v1021 = vpack.c.bf16 %v1020, %v1020
    %1022 = vrot.lane.b32.xlu0 %v912, 120
    %v1023 = vpop.permute.xlu0 %1022
    %v1025 = vsel %vm222, %v1021, 0
    %v1028 = vsel %vm284, %v1023, 0
    %1030 = vmatprep.subr.bf16.mxu0 0
    %1031 = vmatpush1.bf16.msra.mxu0 %v1028
    %1032 = vmatprep.subr.bf16.mxu0 0
    %1033 = vmatpush1.bf16.msra.mxu0 0
    %1034 = vmatprep.subr.bf16.mxu0 0
    %1035 = vmatpush1.bf16.msra.mxu0 0
    %1036 = vmatprep.subr.bf16.mxu0 0
    %1037 = vmatpush1.bf16.msra.mxu0 0
    %1038 = vmatprep.subr.bf16.mxu0 0
    %1039 = vmatpush1.bf16.msra.mxu0 0
    %1040 = vmatprep.subr.bf16.mxu0 0
    %1041 = vmatpush1.bf16.msra.mxu0 0
    %1042 = vmatprep.subr.bf16.mxu0 0
    %1043 = vmatpush1.bf16.msra.mxu0 0
    %1044 = vmatprep.subr.bf16.mxu0 0
    %1045 = vmatpush1.bf16.msra.mxu0 0
    %1046 = vmatprep.subr.bf16.mxu0 0
    %1047 = vmatpush1.bf16.msra.mxu0 0
    %1048 = vmatprep.subr.bf16.mxu0 0
    %1049 = vmatpush1.bf16.msra.mxu0 0
    %1050 = vmatprep.subr.bf16.mxu0 0
    %1051 = vmatpush1.bf16.msra.mxu0 0
    %1052 = vmatprep.subr.bf16.mxu0 0
    %1053 = vmatpush1.bf16.msra.mxu0 0
    %1054 = vmatprep.subr.bf16.mxu0 0
    %1055 = vmatpush1.bf16.msra.mxu0 0
    %1056 = vmatprep.subr.bf16.mxu0 0
    %1057 = vmatpush1.bf16.msra.mxu0 0
    %1058 = vmatprep.subr.bf16.mxu0 0
    %1059 = vmatpush1.bf16.msra.mxu0 0
    %1060 = vmatprep.subr.bf16.mxu0 0
    %1061 = vmatpush1.bf16.msra.mxu0 0
    %1062 = vmatprep.mubr.bf16.mxu0 0
    %1063 = vmatmul.mubr.bf16.gmra.mrb[0].mxu0 %v1025
    %v1064 = vpop.f32.mrb[0].mxu0
    %v1065 = vadd.f32 0.0, %v1064
    %v1066 = vpop.f32.mrb[0].mxu0
    %v1067 = vpop.f32.mrb[0].mxu0
    %v1068 = vpop.f32.mrb[0].mxu0
    %1069 = vdwg.mxu0
    %v1070 = vpack.c.bf16 %v1065, %v1065
    %v1072 = vsel %vm222, %v1070, 0
    %1074 = vmatprep.subr.bf16.mxu0 0
    %1075 = vmatpush1.bf16.msra.mxu0 %v446
    %1076 = vmatprep.subr.bf16.mxu0 0
    %1077 = vmatpush1.bf16.msra.mxu0 0
    %1078 = vmatprep.subr.bf16.mxu0 0
    %1079 = vmatpush1.bf16.msra.mxu0 0
    %1080 = vmatprep.subr.bf16.mxu0 0
    %1081 = vmatpush1.bf16.msra.mxu0 0
    %1082 = vmatprep.subr.bf16.mxu0 0
    %1083 = vmatpush1.bf16.msra.mxu0 0
    %1084 = vmatprep.subr.bf16.mxu0 0
    %1085 = vmatpush1.bf16.msra.mxu0 0
    %1086 = vmatprep.subr.bf16.mxu0 0
    %1087 = vmatpush1.bf16.msra.mxu0 0
    %1088 = vmatprep.subr.bf16.mxu0 0
    %1089 = vmatpush1.bf16.msra.mxu0 0
    %1090 = vmatprep.subr.bf16.mxu0 0
    %1091 = vmatpush1.bf16.msra.mxu0 0
    %1092 = vmatprep.subr.bf16.mxu0 0
    %1093 = vmatpush1.bf16.msra.mxu0 0
    %1094 = vmatprep.subr.bf16.mxu0 0
    %1095 = vmatpush1.bf16.msra.mxu0 0
    %1096 = vmatprep.subr.bf16.mxu0 0
    %1097 = vmatpush1.bf16.msra.mxu0 0
    %1098 = vmatprep.subr.bf16.mxu0 0
    %1099 = vmatpush1.bf16.msra.mxu0 0
    %1100 = vmatprep.subr.bf16.mxu0 0
    %1101 = vmatpush1.bf16.msra.mxu0 0
    %1102 = vmatprep.subr.bf16.mxu0 0
    %1103 = vmatpush1.bf16.msra.mxu0 0
    %1104 = vmatprep.subr.bf16.mxu0 0
    %1105 = vmatpush1.bf16.msra.mxu0 0
    %1106 = vmatprep.mubr.bf16.mxu0 0
    %1107 = vmatmul.mubr.bf16.gmra.mrb[0].mxu0 %v1072
    %v1108 = vpop.f32.mrb[0].mxu0
    %v1109 = vadd.f32 0.0, %v1108
    %v1110 = vpop.f32.mrb[0].mxu0
    %v1111 = vpop.f32.mrb[0].mxu0
    %v1112 = vpop.f32.mrb[0].mxu0
    %1113 = vdwg.mxu0
    %v1115 = vsel %vm222, %v959, 0
    %1117 = vmatprep.subr.bf16.mxu0 0
    %1118 = vmatpush1.bf16.msra.mxu0 %v492
    %1119 = vmatprep.subr.bf16.mxu0 0
    %1120 = vmatpush1.bf16.msra.mxu0 0
    %1121 = vmatprep.subr.bf16.mxu0 0
    %1122 = vmatpush1.bf16.msra.mxu0 0
    %1123 = vmatprep.subr.bf16.mxu0 0
    %1124 = vmatpush1.bf16.msra.mxu0 0
    %1125 = vmatprep.subr.bf16.mxu0 0
    %1126 = vmatpush1.bf16.msra.mxu0 0
    %1127 = vmatprep.subr.bf16.mxu0 0
    %1128 = vmatpush1.bf16.msra.mxu0 0
    %1129 = vmatprep.subr.bf16.mxu0 0
    %1130 = vmatpush1.bf16.msra.mxu0 0
    %1131 = vmatprep.subr.bf16.mxu0 0
    %1132 = vmatpush1.bf16.msra.mxu0 0
    %1133 = vmatprep.subr.bf16.mxu0 0
    %1134 = vmatpush1.bf16.msra.mxu0 0
    %1135 = vmatprep.subr.bf16.mxu0 0
    %1136 = vmatpush1.bf16.msra.mxu0 0
    %1137 = vmatprep.subr.bf16.mxu0 0
    %1138 = vmatpush1.bf16.msra.mxu0 0
    %1139 = vmatprep.subr.bf16.mxu0 0
    %1140 = vmatpush1.bf16.msra.mxu0 0
    %1141 = vmatprep.subr.bf16.mxu0 0
    %1142 = vmatpush1.bf16.msra.mxu0 0
    %1143 = vmatprep.subr.bf16.mxu0 0
    %1144 = vmatpush1.bf16.msra.mxu0 0
    %1145 = vmatprep.subr.bf16.mxu0 0
    %1146 = vmatpush1.bf16.msra.mxu0 0
    %1147 = vmatprep.subr.bf16.mxu0 0
    %1148 = vmatpush1.bf16.msra.mxu0 0
    %1149 = vmatprep.mubr.bf16.mxu0 0
    %1150 = vmatmul.mubr.bf16.gmra.mrb[0].mxu0 %v1115
    %v1151 = vpop.f32.mrb[0].mxu0
    %v1152 = vadd.f32 %v1109, %v1151
    %v1153 = vpop.f32.mrb[0].mxu0
    %v1154 = vpop.f32.mrb[0].mxu0
    %v1155 = vpop.f32.mrb[0].mxu0
    %1156 = vdwg.mxu0
    %1157 = vrot.lane.b32.xlu0 %v850, 112
    %v1158 = vpop.permute.xlu0 %1157
    %1159 = vrot.lane.b32.xlu0 %v851, 80
    %v1160 = vpop.permute.xlu0 %1159
    %v1162 = vsel %vm222, %v1158, 0
    %v1165 = vsel %vm222, %v1160, 0
    %1167 = vmatprep.subr.bf16.mxu0 0
    %1168 = vmatpush1.bf16.xpose.msra.mxu0 %v1165
    %1169 = vmatprep.subr.bf16.mxu0 0
    %1170 = vmatpush1.bf16.xpose.msra.mxu0 0
    %1171 = vmatprep.subr.bf16.mxu0 0
    %1172 = vmatpush1.bf16.xpose.msra.mxu0 0
    %1173 = vmatprep.subr.bf16.mxu0 0
    %1174 = vmatpush1.bf16.xpose.msra.mxu0 0
    %1175 = vmatprep.subr.bf16.mxu0 0
    %1176 = vmatpush1.bf16.xpose.msra.mxu0 0
    %1177 = vmatprep.subr.bf16.mxu0 0
    %1178 = vmatpush1.bf16.xpose.msra.mxu0 0
    %1179 = vmatprep.subr.bf16.mxu0 0
    %1180 = vmatpush1.bf16.xpose.msra.mxu0 0
    %1181 = vmatprep.subr.bf16.mxu0 0
    %1182 = vmatpush1.bf16.xpose.msra.mxu0 0
    %1183 = vmatprep.subr.bf16.mxu0 0
    %1184 = vmatpush1.bf16.xpose.msra.mxu0 0
    %1185 = vmatprep.subr.bf16.mxu0 0
    %1186 = vmatpush1.bf16.xpose.msra.mxu0 0
    %1187 = vmatprep.subr.bf16.mxu0 0
    %1188 = vmatpush1.bf16.xpose.msra.mxu0 0
    %1189 = vmatprep.subr.bf16.mxu0 0
    %1190 = vmatpush1.bf16.xpose.msra.mxu0 0
    %1191 = vmatprep.subr.bf16.mxu0 0
    %1192 = vmatpush1.bf16.xpose.msra.mxu0 0
    %1193 = vmatprep.subr.bf16.mxu0 0
    %1194 = vmatpush1.bf16.xpose.msra.mxu0 0
    %1195 = vmatprep.subr.bf16.mxu0 0
    %1196 = vmatpush1.bf16.xpose.msra.mxu0 0
    %1197 = vmatprep.subr.bf16.mxu0 0
    %1198 = vmatpush1.bf16.xpose.msra.mxu0 0
    %1199 = vmatprep.mubr.bf16.mxu0 0
    %1200 = vmatmul.mubr.bf16.gmra.mrb[0].mxu0 %v1162
    %v1201 = vpop.f32.mrb[0].mxu0
    %v1202 = vadd.f32 0.0, %v1201
    %v1203 = vpop.f32.mrb[0].mxu0
    %v1204 = vpop.f32.mrb[0].mxu0
    %v1205 = vpop.f32.mrb[0].mxu0
    %1206 = vdwg.mxu0
    %v1207 = vsel %vm222, %v1202, -inf
    %1208 = vmax.xlane.f32.xlu0 %v1207
    %v1209 = vpop.xlane.xlu0 %1208
    %v1210 = vsub.f32 %v1202, %v1209
    %v1211 = vmul.f32 %v1210, 1.442695
    %v1212 = vpow.pop %v1211
    %v1213 = vsel %vm222, %v1212, 0.0
    %1214 = vadd.xlane.f32.xlu0 %v1213
    %v1215 = vpop.xlane.xlu0 %1214
    %v1216 = vrcp.pop %v1215
    %v1217 = vmul.f32 %v1212, %v1216
    %v1218 = vpack.c.bf16 %v1217, %v1217
    %1219 = vrot.lane.b32.xlu0 %v912, 112
    %v1220 = vpop.permute.xlu0 %1219
    %v1222 = vsel %vm222, %v1218, 0
    %v1225 = vsel %vm284, %v1220, 0
    %1227 = vmatprep.subr.bf16.mxu0 0
    %1228 = vmatpush1.bf16.msra.mxu0 %v1225
    %1229 = vmatprep.subr.bf16.mxu0 0
    %1230 = vmatpush1.bf16.msra.mxu0 0
    %1231 = vmatprep.subr.bf16.mxu0 0
    %1232 = vmatpush1.bf16.msra.mxu0 0
    %1233 = vmatprep.subr.bf16.mxu0 0
    %1234 = vmatpush1.bf16.msra.mxu0 0
    %1235 = vmatprep.subr.bf16.mxu0 0
    %1236 = vmatpush1.bf16.msra.mxu0 0
    %1237 = vmatprep.subr.bf16.mxu0 0
    %1238 = vmatpush1.bf16.msra.mxu0 0
    %1239 = vmatprep.subr.bf16.mxu0 0
    %1240 = vmatpush1.bf16.msra.mxu0 0
    %1241 = vmatprep.subr.bf16.mxu0 0
    %1242 = vmatpush1.bf16.msra.mxu0 0
    %1243 = vmatprep.subr.bf16.mxu0 0
    %1244 = vmatpush1.bf16.msra.mxu0 0
    %1245 = vmatprep.subr.bf16.mxu0 0
    %1246 = vmatpush1.bf16.msra.mxu0 0
    %1247 = vmatprep.subr.bf16.mxu0 0
    %1248 = vmatpush1.bf16.msra.mxu0 0
    %1249 = vmatprep.subr.bf16.mxu0 0
    %1250 = vmatpush1.bf16.msra.mxu0 0
    %1251 = vmatprep.subr.bf16.mxu0 0
    %1252 = vmatpush1.bf16.msra.mxu0 0
    %1253 = vmatprep.subr.bf16.mxu0 0
    %1254 = vmatpush1.bf16.msra.mxu0 0
    %1255 = vmatprep.subr.bf16.mxu0 0
    %1256 = vmatpush1.bf16.msra.mxu0 0
    %1257 = vmatprep.subr.bf16.mxu0 0
    %1258 = vmatpush1.bf16.msra.mxu0 0
    %1259 = vmatprep.mubr.bf16.mxu0 0
    %1260 = vmatmul.mubr.bf16.gmra.mrb[0].mxu0 %v1222
    %v1261 = vpop.f32.mrb[0].mxu0
    %v1262 = vadd.f32 0.0, %v1261
    %v1263 = vpop.f32.mrb[0].mxu0
    %v1264 = vpop.f32.mrb[0].mxu0
    %v1265 = vpop.f32.mrb[0].mxu0
    %1266 = vdwg.mxu0
    %v1267 = vpack.c.bf16 %v1262, %v1262
    %v1269 = vsel %vm222, %v1267, 0
    %1271 = vmatprep.subr.bf16.mxu0 0
    %1272 = vmatpush1.bf16.msra.mxu0 %v649
    %1273 = vmatprep.subr.bf16.mxu0 0
    %1274 = vmatpush1.bf16.msra.mxu0 0
    %1275 = vmatprep.subr.bf16.mxu0 0
    %1276 = vmatpush1.bf16.msra.mxu0 0
    %1277 = vmatprep.subr.bf16.mxu0 0
    %1278 = vmatpush1.bf16.msra.mxu0 0
    %1279 = vmatprep.subr.bf16.mxu0 0
    %1280 = vmatpush1.bf16.msra.mxu0 0
    %1281 = vmatprep.subr.bf16.mxu0 0
    %1282 = vmatpush1.bf16.msra.mxu0 0
    %1283 = vmatprep.subr.bf16.mxu0 0
    %1284 = vmatpush1.bf16.msra.mxu0 0
    %1285 = vmatprep.subr.bf16.mxu0 0
    %1286 = vmatpush1.bf16.msra.mxu0 0
    %1287 = vmatprep.subr.bf16.mxu0 0
    %1288 = vmatpush1.bf16.msra.mxu0 0
    %1289 = vmatprep.subr.bf16.mxu0 0
    %1290 = vmatpush1.bf16.msra.mxu0 0
    %1291 = vmatprep.subr.bf16.mxu0 0
    %1292 = vmatpush1.bf16.msra.mxu0 0
    %1293 = vmatprep.subr.bf16.mxu0 0
    %1294 = vmatpush1.bf16.msra.mxu0 0
    %1295 = vmatprep.subr.bf16.mxu0 0
    %1296 = vmatpush1.bf16.msra.mxu0 0
    %1297 = vmatprep.subr.bf16.mxu0 0
    %1298 = vmatpush1.bf16.msra.mxu0 0
    %1299 = vmatprep.subr.bf16.mxu0 0
    %1300 = vmatpush1.bf16.msra.mxu0 0
    %1301 = vmatprep.subr.bf16.mxu0 0
    %1302 = vmatpush1.bf16.msra.mxu0 0
    %1303 = vmatprep.mubr.bf16.mxu0 0
    %1304 = vmatmul.mubr.bf16.gmra.mrb[0].mxu0 %v1269
    %v1305 = vpop.f32.mrb[0].mxu0
    %v1306 = vadd.f32 0.0, %v1305
    %v1307 = vpop.f32.mrb[0].mxu0
    %v1308 = vpop.f32.mrb[0].mxu0
    %v1309 = vpop.f32.mrb[0].mxu0
    %1310 = vdwg.mxu0
    %v1311 = vadd.f32 %v1152, %v1306
    %1312 = vrot.lane.b32.xlu0 %v850, 104
    %v1313 = vpop.permute.xlu0 %1312
    %1314 = vrot.lane.b32.xlu0 %v851, 72
    %v1315 = vpop.permute.xlu0 %1314
    %v1317 = vsel %vm222, %v1313, 0
    %v1320 = vsel %vm222, %v1315, 0
    %1322 = vmatprep.subr.bf16.mxu0 0
    %1323 = vmatpush1.bf16.xpose.msra.mxu0 %v1320
    %1324 = vmatprep.subr.bf16.mxu0 0
    %1325 = vmatpush1.bf16.xpose.msra.mxu0 0
    %1326 = vmatprep.subr.bf16.mxu0 0
    %1327 = vmatpush1.bf16.xpose.msra.mxu0 0
    %1328 = vmatprep.subr.bf16.mxu0 0
    %1329 = vmatpush1.bf16.xpose.msra.mxu0 0
    %1330 = vmatprep.subr.bf16.mxu0 0
    %1331 = vmatpush1.bf16.xpose.msra.mxu0 0
    %1332 = vmatprep.subr.bf16.mxu0 0
    %1333 = vmatpush1.bf16.xpose.msra.mxu0 0
    %1334 = vmatprep.subr.bf16.mxu0 0
    %1335 = vmatpush1.bf16.xpose.msra.mxu0 0
    %1336 = vmatprep.subr.bf16.mxu0 0
    %1337 = vmatpush1.bf16.xpose.msra.mxu0 0
    %1338 = vmatprep.subr.bf16.mxu0 0
    %1339 = vmatpush1.bf16.xpose.msra.mxu0 0
    %1340 = vmatprep.subr.bf16.mxu0 0
    %1341 = vmatpush1.bf16.xpose.msra.mxu0 0
    %1342 = vmatprep.subr.bf16.mxu0 0
    %1343 = vmatpush1.bf16.xpose.msra.mxu0 0
    %1344 = vmatprep.subr.bf16.mxu0 0
    %1345 = vmatpush1.bf16.xpose.msra.mxu0 0
    %1346 = vmatprep.subr.bf16.mxu0 0
    %1347 = vmatpush1.bf16.xpose.msra.mxu0 0
    %1348 = vmatprep.subr.bf16.mxu0 0
    %1349 = vmatpush1.bf16.xpose.msra.mxu0 0
    %1350 = vmatprep.subr.bf16.mxu0 0
    %1351 = vmatpush1.bf16.xpose.msra.mxu0 0
    %1352 = vmatprep.subr.bf16.mxu0 0
    %1353 = vmatpush1.bf16.xpose.msra.mxu0 0
    %1354 = vmatprep.mubr.bf16.mxu0 0
    %1355 = vmatmul.mubr.bf16.gmra.mrb[0].mxu0 %v1317
    %v1356 = vpop.f32.mrb[0].mxu0
    %v1357 = vadd.f32 0.0, %v1356
    %v1358 = vpop.f32.mrb[0].mxu0
    %v1359 = vpop.f32.mrb[0].mxu0
    %v1360 = vpop.f32.mrb[0].mxu0
    %1361 = vdwg.mxu0
    %v1362 = vsel %vm222, %v1357, -inf
    %1363 = vmax.xlane.f32.xlu0 %v1362
    %v1364 = vpop.xlane.xlu0 %1363
    %v1365 = vsub.f32 %v1357, %v1364
    %v1366 = vmul.f32 %v1365, 1.442695
    %v1367 = vpow.pop %v1366
    %v1368 = vsel %vm222, %v1367, 0.0
    %1369 = vadd.xlane.f32.xlu0 %v1368
    %v1370 = vpop.xlane.xlu0 %1369
    %v1371 = vrcp.pop %v1370
    %v1372 = vmul.f32 %v1367, %v1371
    %v1373 = vpack.c.bf16 %v1372, %v1372
    %1374 = vrot.lane.b32.xlu0 %v912, 104
    %v1375 = vpop.permute.xlu0 %1374
    %v1377 = vsel %vm222, %v1373, 0
    %v1380 = vsel %vm284, %v1375, 0
    %1382 = vmatprep.subr.bf16.mxu0 0
    %1383 = vmatpush1.bf16.msra.mxu0 %v1380
    %1384 = vmatprep.subr.bf16.mxu0 0
    %1385 = vmatpush1.bf16.msra.mxu0 0
    %1386 = vmatprep.subr.bf16.mxu0 0
    %1387 = vmatpush1.bf16.msra.mxu0 0
    %1388 = vmatprep.subr.bf16.mxu0 0
    %1389 = vmatpush1.bf16.msra.mxu0 0
    %1390 = vmatprep.subr.bf16.mxu0 0
    %1391 = vmatpush1.bf16.msra.mxu0 0
    %1392 = vmatprep.subr.bf16.mxu0 0
    %1393 = vmatpush1.bf16.msra.mxu0 0
    %1394 = vmatprep.subr.bf16.mxu0 0
    %1395 = vmatpush1.bf16.msra.mxu0 0
    %1396 = vmatprep.subr.bf16.mxu0 0
    %1397 = vmatpush1.bf16.msra.mxu0 0
    %1398 = vmatprep.subr.bf16.mxu0 0
    %1399 = vmatpush1.bf16.msra.mxu0 0
    %1400 = vmatprep.subr.bf16.mxu0 0
    %1401 = vmatpush1.bf16.msra.mxu0 0
    %1402 = vmatprep.subr.bf16.mxu0 0
    %1403 = vmatpush1.bf16.msra.mxu0 0
    %1404 = vmatprep.subr.bf16.mxu0 0
    %1405 = vmatpush1.bf16.msra.mxu0 0
    %1406 = vmatprep.subr.bf16.mxu0 0
    %1407 = vmatpush1.bf16.msra.mxu0 0
    %1408 = vmatprep.subr.bf16.mxu0 0
    %1409 = vmatpush1.bf16.msra.mxu0 0
    %1410 = vmatprep.subr.bf16.mxu0 0
    %1411 = vmatpush1.bf16.msra.mxu0 0
    %1412 = vmatprep.subr.bf16.mxu0 0
    %1413 = vmatpush1.bf16.msra.mxu0 0
    %1414 = vmatprep.mubr.bf16.mxu0 0
    %1415 = vmatmul.mubr.bf16.gmra.mrb[0].mxu0 %v1377
    %v1416 = vpop.f32.mrb[0].mxu0
    %v1417 = vadd.f32 0.0, %v1416
    %v1418 = vpop.f32.mrb[0].mxu0
    %v1419 = vpop.f32.mrb[0].mxu0
    %v1420 = vpop.f32.mrb[0].mxu0
    %1421 = vdwg.mxu0
    %v1422 = vpack.c.bf16 %v1417, %v1417
    %v1424 = vsel %vm222, %v1422, 0
    %1426 = vmatprep.subr.bf16.mxu0 0
    %1427 = vmatpush1.bf16.msra.mxu0 %v807
    %1428 = vmatprep.subr.bf16.mxu0 0
    %1429 = vmatpush1.bf16.msra.mxu0 0
    %1430 = vmatprep.subr.bf16.mxu0 0
    %1431 = vmatpush1.bf16.msra.mxu0 0
    %1432 = vmatprep.subr.bf16.mxu0 0
    %1433 = vmatpush1.bf16.msra.mxu0 0
    %1434 = vmatprep.subr.bf16.mxu0 0
    %1435 = vmatpush1.bf16.msra.mxu0 0
    %1436 = vmatprep.subr.bf16.mxu0 0
    %1437 = vmatpush1.bf16.msra.mxu0 0
    %1438 = vmatprep.subr.bf16.mxu0 0
    %1439 = vmatpush1.bf16.msra.mxu0 0
    %1440 = vmatprep.subr.bf16.mxu0 0
    %1441 = vmatpush1.bf16.msra.mxu0 0
    %1442 = vmatprep.subr.bf16.mxu0 0
    %1443 = vmatpush1.bf16.msra.mxu0 0
    %1444 = vmatprep.subr.bf16.mxu0 0
    %1445 = vmatpush1.bf16.msra.mxu0 0
    %1446 = vmatprep.subr.bf16.mxu0 0
    %1447 = vmatpush1.bf16.msra.mxu0 0
    %1448 = vmatprep.subr.bf16.mxu0 0
    %1449 = vmatpush1.bf16.msra.mxu0 0
    %1450 = vmatprep.subr.bf16.mxu0 0
    %1451 = vmatpush1.bf16.msra.mxu0 0
    %1452 = vmatprep.subr.bf16.mxu0 0
    %1453 = vmatpush1.bf16.msra.mxu0 0
    %1454 = vmatprep.subr.bf16.mxu0 0
    %1455 = vmatpush1.bf16.msra.mxu0 0
    %1456 = vmatprep.subr.bf16.mxu0 0
    %1457 = vmatpush1.bf16.msra.mxu0 0
    %1458 = vmatprep.mubr.bf16.mxu0 0
    %1459 = vmatmul.mubr.bf16.gmra.mrb[0].mxu0 %v1424
    %v1460 = vpop.f32.mrb[0].mxu0
    %v1461 = vadd.f32 0.0, %v1460
    %v1462 = vpop.f32.mrb[0].mxu0
    %v1463 = vpop.f32.mrb[0].mxu0
    %v1464 = vpop.f32.mrb[0].mxu0
    %1465 = vdwg.mxu0
    %v1466 = vadd.f32 %v1311, %v1461
    %v1467 = vlaneseq
    %v1468 = vshrl.u32 %v1467, 7
    %v1469 = vsub.s32 2, %v1468
    %v1470 = vrot.slane %v87, %v1469
    %v1471 = vadd.f32 %v849, %v1470
    %v1472 = vadd.f32 %v1466, %v1470
    %v1473 = vadd.f32 %v59, %v1471
    %v1474 = vadd.f32 %v60, %v1472
    %v1475 = vsel %vm108, %v1473, 0.0
    %1476 = vadd.xlane.f32.xlu0 %v1475
    %v1477 = vpop.xlane.xlu0 %1476
    %v1478 = vsel %vm108, %v1474, 0.0
    %1479 = vadd.xlane.f32.xlu0 %v1478
    %v1480 = vpop.xlane.xlu0 %1479
    %v1481 = vrcp.pop 32.0
    %v1482 = vmul.f32 %v1477, %v1481
    %v1483 = vmul.f32 %v1480, %v1481
    %v1484 = vsub.f32 %v1473, %v1482
    %v1485 = vsub.f32 %v1474, %v1483
    %v1486 = vmul.f32 %v1484, %v1484
    %v1487 = vmul.f32 %v1485, %v1485
    %v1488 = vsel %vm108, %v1486, 0.0
    %1489 = vadd.xlane.f32.xlu0 %v1488
    %v1490 = vpop.xlane.xlu0 %1489
    %v1491 = vsel %vm108, %v1487, 0.0
    %1492 = vadd.xlane.f32.xlu0 %v1491
    %v1493 = vpop.xlane.xlu0 %1492
    %v1494 = vmul.f32 %v1490, %v1481
    %v1495 = vmul.f32 %v1493, %v1481
    %v1496 = vadd.f32 %v1494, 1e-05
    %v1497 = vadd.f32 %v1495, 1e-05
    %v1498 = vrsqrt.pop %v1496
    %v1499 = vrsqrt.pop %v1497
    %v1500 = vmul.f32 %v1484, %v1498
    %v1501 = vmul.f32 %v1485, %v1499
    %v1502 = vlaneseq
    %v1503 = vshrl.u32 %v1502, 7
    %v1504 = vsub.s32 3, %v1503
    %v1505 = vrot.slane %v87, %v1504
    %v1506 = vmul.f32 %v1500, %v1505
    %v1507 = vmul.f32 %v1501, %v1505
    %v1508 = vlaneseq
    %v1509 = vshrl.u32 %v1508, 7
    %v1510 = vsub.s32 4, %v1509
    %v1511 = vrot.slane %v87, %v1510
    %v1512 = vadd.f32 %v1506, %v1511
    %v1513 = vadd.f32 %v1507, %v1511
    %v1514 = vpack.c.bf16 %v1513, %v1512
    %v1515 = vlaneseq
    %v1516 = vshrl.u32 %v1515, 7
    %v1517 = vsub.s32 5, %v1516
    %v1518 = vrot.slane %v87, %v1517
    %v1523 = vunpack.c.l.b16 %v75
    %v1524 = vunpack.c.l.b16 %v76
    %v1525 = vunpack.c.l.b16 %v77
    %v1526 = vunpack.c.l.b16 %v78
    %v1527 = vpack.c.b16 %v1524, %v1523
    %v1528 = vpack.c.b16 %v1526, %v1525
    %v1532 = vsel %vm108, %v1514, 0
    %1534 = vmatprep.subr.bf16.mxu0 0
    %1535 = vmatpush1.bf16.msra.mxu0 %v1527
    %1536 = vmatprep.subr.bf16.mxu0 0
    %1537 = vmatpush1.bf16.msra.mxu0 %v1528
    %1538 = vmatprep.subr.bf16.mxu0 0
    %1539 = vmatpush1.bf16.msra.mxu0 0
    %1540 = vmatprep.subr.bf16.mxu0 0
    %1541 = vmatpush1.bf16.msra.mxu0 0
    %1542 = vmatprep.subr.bf16.mxu0 0
    %1543 = vmatpush1.bf16.msra.mxu0 0
    %1544 = vmatprep.subr.bf16.mxu0 0
    %1545 = vmatpush1.bf16.msra.mxu0 0
    %1546 = vmatprep.subr.bf16.mxu0 0
    %1547 = vmatpush1.bf16.msra.mxu0 0
    %1548 = vmatprep.subr.bf16.mxu0 0
    %1549 = vmatpush1.bf16.msra.mxu0 0
    %1550 = vmatprep.subr.bf16.mxu0 0
    %1551 = vmatpush1.bf16.msra.mxu0 0
    %1552 = vmatprep.subr.bf16.mxu0 0
    %1553 = vmatpush1.bf16.msra.mxu0 0
    %1554 = vmatprep.subr.bf16.mxu0 0
    %1555 = vmatpush1.bf16.msra.mxu0 0
    %1556 = vmatprep.subr.bf16.mxu0 0
    %1557 = vmatpush1.bf16.msra.mxu0 0
    %1558 = vmatprep.subr.bf16.mxu0 0
    %1559 = vmatpush1.bf16.msra.mxu0 0
    %1560 = vmatprep.subr.bf16.mxu0 0
    %1561 = vmatpush1.bf16.msra.mxu0 0
    %1562 = vmatprep.subr.bf16.mxu0 0
    %1563 = vmatpush1.bf16.msra.mxu0 0
    %1564 = vmatprep.subr.bf16.mxu0 0
    %1565 = vmatpush1.bf16.msra.mxu0 0
    %1566 = vmatprep.mubr.bf16.mxu0 0
    %1567 = vmatmul.mubr.bf16.gmra.mrb[0].mxu0 %v1532
    %v1568 = vpop.f32.mrb[0].mxu0
    %v1569 = vadd.f32 %v1518, %v1568
    %v1570 = vpop.f32.mrb[0].mxu0
    %v1571 = vpop.f32.mrb[0].mxu0
    %v1572 = vadd.f32 %v1518, %v1571
    %v1573 = vpop.f32.mrb[0].mxu0
    %1574 = vdwg.mxu0
    %v1575 = vmax.f32 %v1569, 0.0
    %v1576 = vmax.f32 %v1572, 0.0
    %v1577 = vpack.c.bf16 %v1576, %v1575
    %v1578 = vlaneseq
    %v1579 = vshrl.u32 %v1578, 7
    %v1580 = vsub.s32 6, %v1579
    %v1581 = vrot.slane %v87, %v1580
    %v1590 = vunpack.c.l.b16 %v79
    %v1591 = vunpack.c.l.b16 %v80
    %v1592 = vunpack.c.l.b16 %v81
    %v1593 = vunpack.c.l.b16 %v82
    %v1594 = vunpack.c.l.b16 %v83
    %v1595 = vunpack.c.l.b16 %v84
    %v1596 = vunpack.c.l.b16 %v85
    %v1597 = vunpack.c.l.b16 %v86
    %v1598 = vpack.c.b16 %v1591, %v1590
    %v1599 = vpack.c.b16 %v1593, %v1592
    %v1600 = vpack.c.b16 %v1595, %v1594
    %v1601 = vpack.c.b16 %v1597, %v1596
    %vm1606 = vcmask 523264
    %v1608 = vsel %vm1606, %v1577, 0
    %1610 = vmatprep.subr.bf16.mxu0 0
    %1611 = vmatpush1.bf16.msra.mxu0 %v1598
    %1612 = vmatprep.subr.bf16.mxu0 0
    %1613 = vmatpush1.bf16.msra.mxu0 %v1599
    %1614 = vmatprep.subr.bf16.mxu0 0
    %1615 = vmatpush1.bf16.msra.mxu0 %v1600
    %1616 = vmatprep.subr.bf16.mxu0 0
    %1617 = vmatpush1.bf16.msra.mxu0 %v1601
    %1618 = vmatprep.subr.bf16.mxu0 0
    %1619 = vmatpush1.bf16.msra.mxu0 0
    %1620 = vmatprep.subr.bf16.mxu0 0
    %1621 = vmatpush1.bf16.msra.mxu0 0
    %1622 = vmatprep.subr.bf16.mxu0 0
    %1623 = vmatpush1.bf16.msra.mxu0 0
    %1624 = vmatprep.subr.bf16.mxu0 0
    %1625 = vmatpush1.bf16.msra.mxu0 0
    %1626 = vmatprep.subr.bf16.mxu0 0
    %1627 = vmatpush1.bf16.msra.mxu0 0
    %1628 = vmatprep.subr.bf16.mxu0 0
    %1629 = vmatpush1.bf16.msra.mxu0 0
    %1630 = vmatprep.subr.bf16.mxu0 0
    %1631 = vmatpush1.bf16.msra.mxu0 0
    %1632 = vmatprep.subr.bf16.mxu0 0
    %1633 = vmatpush1.bf16.msra.mxu0 0
    %1634 = vmatprep.subr.bf16.mxu0 0
    %1635 = vmatpush1.bf16.msra.mxu0 0
    %1636 = vmatprep.subr.bf16.mxu0 0
    %1637 = vmatpush1.bf16.msra.mxu0 0
    %1638 = vmatprep.subr.bf16.mxu0 0
    %1639 = vmatpush1.bf16.msra.mxu0 0
    %1640 = vmatprep.subr.bf16.mxu0 0
    %1641 = vmatpush1.bf16.msra.mxu0 0
    %1642 = vmatprep.mubr.bf16.mxu0 0
    %1643 = vmatmul.mubr.bf16.gmra.mrb[0].mxu0 %v1608
    %v1644 = vpop.f32.mrb[0].mxu0
    %v1645 = vadd.f32 %v1581, %v1644
    %v1646 = vpop.f32.mrb[0].mxu0
    %v1647 = vpop.f32.mrb[0].mxu0
    %v1648 = vadd.f32 %v1581, %v1647
    %v1649 = vpop.f32.mrb[0].mxu0
    %1650 = vdwg.mxu0
    %v1651 = vadd.f32 %v1512, %v1645
    %v1652 = vadd.f32 %v1513, %v1648
    %v1653 = vsel %vm108, %v1651, 0.0
    %1654 = vadd.xlane.f32.xlu0 %v1653
    %v1655 = vpop.xlane.xlu0 %1654
    %v1656 = vsel %vm108, %v1652, 0.0
    %1657 = vadd.xlane.f32.xlu0 %v1656
    %v1658 = vpop.xlane.xlu0 %1657
    %v1659 = vmul.f32 %v1655, %v1481
    %v1660 = vmul.f32 %v1658, %v1481
    %v1661 = vsub.f32 %v1651, %v1659
    %v1662 = vsub.f32 %v1652, %v1660
    %v1663 = vmul.f32 %v1661, %v1661
    %v1664 = vmul.f32 %v1662, %v1662
    %v1665 = vsel %vm108, %v1663, 0.0
    %1666 = vadd.xlane.f32.xlu0 %v1665
    %v1667 = vpop.xlane.xlu0 %1666
    %v1668 = vsel %vm108, %v1664, 0.0
    %1669 = vadd.xlane.f32.xlu0 %v1668
    %v1670 = vpop.xlane.xlu0 %1669
    %v1671 = vmul.f32 %v1667, %v1481
    %v1672 = vmul.f32 %v1670, %v1481
    %v1673 = vadd.f32 %v1671, 1e-05
    %v1674 = vadd.f32 %v1672, 1e-05
    %v1675 = vrsqrt.pop %v1673
    %v1676 = vrsqrt.pop %v1674
    %v1677 = vmul.f32 %v1661, %v1675
    %v1678 = vmul.f32 %v1662, %v1676
    %v1679 = vlaneseq
    %v1680 = vshrl.u32 %v1679, 7
    %v1681 = vsub.s32 7, %v1680
    %v1682 = vrot.slane %v87, %v1681
    %v1683 = vmul.f32 %v1677, %v1682
    %v1684 = vmul.f32 %v1678, %v1682
    %v1685 = vlaneseq
    %v1686 = vshrl.u32 %v1685, 7
    %v1687 = vsub.s32 0, %v1686
    %v1688 = vrot.slane %v88, %v1687
    %v1689 = vadd.f32 %v1683, %v1688
    %v1690 = vadd.f32 %v1684, %v1688
    %s1691 = scalar_lea.vmem %s2, 16
    %v1692 = vld [vmem:[%s1691] sm:$0xf]
    %v1693 = vld [vmem:[%s1691 + $0x4] sm:$0xf]
    %v1694 = vld [vmem:[%s1691 + $0x8] sm:$0xf]
    %v1695 = vld [vmem:[%s1691 + $0xc] sm:$0xf]
    %s1696 = scalar_lea.vmem %s3, 16
    %v1697 = vld [vmem:[%s1696] sm:$0xf]
    %v1698 = vld [vmem:[%s1696 + $0x4] sm:$0xf]
    %v1699 = vld [vmem:[%s1696 + $0x8] sm:$0xf]
    %v1700 = vld [vmem:[%s1696 + $0xc] sm:$0xf]
    %s1701 = scalar_lea.vmem %s4, 16
    %v1702 = vld [vmem:[%s1701] sm:$0xf]
    %v1703 = vld [vmem:[%s1701 + $0x4] sm:$0xf]
    %v1704 = vld [vmem:[%s1701 + $0x8] sm:$0xf]
    %v1705 = vld [vmem:[%s1701 + $0xc] sm:$0xf]
    %s1706 = scalar_lea.vmem %s5, 16
    %v1707 = vld [vmem:[%s1706] sm:$0xf]
    %v1708 = vld [vmem:[%s1706 + $0x4] sm:$0xf]
    %v1709 = vld [vmem:[%s1706 + $0x8] sm:$0xf]
    %v1710 = vld [vmem:[%s1706 + $0xc] sm:$0xf]
    %s1711 = scalar_lea.vmem %s6, 32
    %v1712 = vld [vmem:[%s1711] sm:$0xf]
    %v1713 = vld [vmem:[%s1711 + $0x4] sm:$0xf]
    %v1714 = vld [vmem:[%s1711 + $0x8] sm:$0xf]
    %v1715 = vld [vmem:[%s1711 + $0xc] sm:$0xf]
    %v1716 = vld [vmem:[%s1711 + $0x10] sm:$0xf]
    %v1717 = vld [vmem:[%s1711 + $0x14] sm:$0xf]
    %v1718 = vld [vmem:[%s1711 + $0x18] sm:$0xf]
    %v1719 = vld [vmem:[%s1711 + $0x1c] sm:$0xf]
    %s1720 = scalar_lea.vmem %s7, 16
    %v1721 = vld [vmem:[%s1720] sm:$0xff]
    %v1722 = vld [vmem:[%s1720 + $0x8] sm:$0x1]
    %v1723 = vadd.f32 %v1689, %v61
    %v1724 = vadd.f32 %v1690, %v62
    %v1725 = vpack.c.bf16 %v1724, %v1723
    %v1726 = vlaneseq
    %v1727 = vshrl.u32 %v1726, 7
    %v1728 = vsub.s32 0, %v1727
    %v1729 = vrot.slane %v1721, %v1728
    %v1734 = vunpack.c.l.b16 %v1692
    %v1735 = vunpack.c.l.b16 %v1693
    %v1736 = vunpack.c.l.b16 %v1694
    %v1737 = vunpack.c.l.b16 %v1695
    %v1738 = vpack.c.b16 %v1735, %v1734
    %v1739 = vpack.c.b16 %v1737, %v1736
    %v1743 = vsel %vm108, %v1725, 0
    %1745 = vmatprep.subr.bf16.mxu0 0
    %1746 = vmatpush1.bf16.msra.mxu0 %v1738
    %1747 = vmatprep.subr.bf16.mxu0 0
    %1748 = vmatpush1.bf16.msra.mxu0 %v1739
    %1749 = vmatprep.subr.bf16.mxu0 0
    %1750 = vmatpush1.bf16.msra.mxu0 0
    %1751 = vmatprep.subr.bf16.mxu0 0
    %1752 = vmatpush1.bf16.msra.mxu0 0
    %1753 = vmatprep.subr.bf16.mxu0 0
    %1754 = vmatpush1.bf16.msra.mxu0 0
    %1755 = vmatprep.subr.bf16.mxu0 0
    %1756 = vmatpush1.bf16.msra.mxu0 0
    %1757 = vmatprep.subr.bf16.mxu0 0
    %1758 = vmatpush1.bf16.msra.mxu0 0
    %1759 = vmatprep.subr.bf16.mxu0 0
    %1760 = vmatpush1.bf16.msra.mxu0 0
    %1761 = vmatprep.subr.bf16.mxu0 0
    %1762 = vmatpush1.bf16.msra.mxu0 0
    %1763 = vmatprep.subr.bf16.mxu0 0
    %1764 = vmatpush1.bf16.msra.mxu0 0
    %1765 = vmatprep.subr.bf16.mxu0 0
    %1766 = vmatpush1.bf16.msra.mxu0 0
    %1767 = vmatprep.subr.bf16.mxu0 0
    %1768 = vmatpush1.bf16.msra.mxu0 0
    %1769 = vmatprep.subr.bf16.mxu0 0
    %1770 = vmatpush1.bf16.msra.mxu0 0
    %1771 = vmatprep.subr.bf16.mxu0 0
    %1772 = vmatpush1.bf16.msra.mxu0 0
    %1773 = vmatprep.subr.bf16.mxu0 0
    %1774 = vmatpush1.bf16.msra.mxu0 0
    %1775 = vmatprep.subr.bf16.mxu0 0
    %1776 = vmatpush1.bf16.msra.mxu0 0
    %1777 = vmatprep.mubr.bf16.mxu0 0
    %1778 = vmatmul.mubr.bf16.gmra.mrb[0].mxu0 %v1743
    %v1779 = vpop.f32.mrb[0].mxu0
    %v1780 = vadd.f32 %v1729, %v1779
    %v1781 = vpop.f32.mrb[0].mxu0
    %v1782 = vpop.f32.mrb[0].mxu0
    %v1783 = vadd.f32 %v1729, %v1782
    %v1784 = vpop.f32.mrb[0].mxu0
    %1785 = vdwg.mxu0
    %v1786 = vpack.c.bf16 %v1690, %v1689
    %v1787 = vlaneseq
    %v1788 = vshrl.u32 %v1787, 7
    %v1789 = vsub.s32 1, %v1788
    %v1790 = vrot.slane %v1721, %v1789
    %v1795 = vunpack.c.l.b16 %v1697
    %v1796 = vunpack.c.l.b16 %v1698
    %v1797 = vunpack.c.l.b16 %v1699
    %v1798 = vunpack.c.l.b16 %v1700
    %v1799 = vpack.c.b16 %v1796, %v1795
    %v1800 = vpack.c.b16 %v1798, %v1797
    %v1804 = vsel %vm108, %v1786, 0
    %1806 = vmatprep.subr.bf16.mxu0 0
    %1807 = vmatpush1.bf16.msra.mxu0 %v1799
    %1808 = vmatprep.subr.bf16.mxu0 0
    %1809 = vmatpush1.bf16.msra.mxu0 %v1800
    %1810 = vmatprep.subr.bf16.mxu0 0
    %1811 = vmatpush1.bf16.msra.mxu0 0
    %1812 = vmatprep.subr.bf16.mxu0 0
    %1813 = vmatpush1.bf16.msra.mxu0 0
    %1814 = vmatprep.subr.bf16.mxu0 0
    %1815 = vmatpush1.bf16.msra.mxu0 0
    %1816 = vmatprep.subr.bf16.mxu0 0
    %1817 = vmatpush1.bf16.msra.mxu0 0
    %1818 = vmatprep.subr.bf16.mxu0 0
    %1819 = vmatpush1.bf16.msra.mxu0 0
    %1820 = vmatprep.subr.bf16.mxu0 0
    %1821 = vmatpush1.bf16.msra.mxu0 0
    %1822 = vmatprep.subr.bf16.mxu0 0
    %1823 = vmatpush1.bf16.msra.mxu0 0
    %1824 = vmatprep.subr.bf16.mxu0 0
    %1825 = vmatpush1.bf16.msra.mxu0 0
    %1826 = vmatprep.subr.bf16.mxu0 0
    %1827 = vmatpush1.bf16.msra.mxu0 0
    %1828 = vmatprep.subr.bf16.mxu0 0
    %1829 = vmatpush1.bf16.msra.mxu0 0
    %1830 = vmatprep.subr.bf16.mxu0 0
    %1831 = vmatpush1.bf16.msra.mxu0 0
    %1832 = vmatprep.subr.bf16.mxu0 0
    %1833 = vmatpush1.bf16.msra.mxu0 0
    %1834 = vmatprep.subr.bf16.mxu0 0
    %1835 = vmatpush1.bf16.msra.mxu0 0
    %1836 = vmatprep.subr.bf16.mxu0 0
    %1837 = vmatpush1.bf16.msra.mxu0 0
    %1838 = vmatprep.mubr.bf16.mxu0 0
    %1839 = vmatmul.mubr.bf16.gmra.mrb[0].mxu0 %v1804
    %v1840 = vpop.f32.mrb[0].mxu0
    %v1841 = vadd.f32 %v1790, %v1840
    %v1842 = vpop.f32.mrb[0].mxu0
    %v1843 = vpop.f32.mrb[0].mxu0
    %v1844 = vadd.f32 %v1790, %v1843
    %v1845 = vpop.f32.mrb[0].mxu0
    %1846 = vdwg.mxu0
    %v1847 = vmul.f32 %v1780, 0.35355338
    %v1848 = vmul.f32 %v1783, 0.35355338
    %v1849 = vpack.c.bf16 %v1848, %v1847
    %v1850 = vpack.c.bf16 %v1783, %v1780
    %v1851 = vpack.c.bf16 %v1844, %v1841
    %1853 = vrot.lane.b32.xlu0 %v1850, 96
    %v1854 = vpop.permute.xlu0 %1853
    %v1856 = vsel %vm222, %v1849, 0
    %v1859 = vsel %vm222, %v1854, 0
    %1861 = vmatprep.subr.bf16.mxu0 0
    %1862 = vmatpush1.bf16.xpose.msra.mxu0 %v1859
    %1863 = vmatprep.subr.bf16.mxu0 0
    %1864 = vmatpush1.bf16.xpose.msra.mxu0 0
    %1865 = vmatprep.subr.bf16.mxu0 0
    %1866 = vmatpush1.bf16.xpose.msra.mxu0 0
    %1867 = vmatprep.subr.bf16.mxu0 0
    %1868 = vmatpush1.bf16.xpose.msra.mxu0 0
    %1869 = vmatprep.subr.bf16.mxu0 0
    %1870 = vmatpush1.bf16.xpose.msra.mxu0 0
    %1871 = vmatprep.subr.bf16.mxu0 0
    %1872 = vmatpush1.bf16.xpose.msra.mxu0 0
    %1873 = vmatprep.subr.bf16.mxu0 0
    %1874 = vmatpush1.bf16.xpose.msra.mxu0 0
    %1875 = vmatprep.subr.bf16.mxu0 0
    %1876 = vmatpush1.bf16.xpose.msra.mxu0 0
    %1877 = vmatprep.subr.bf16.mxu0 0
    %1878 = vmatpush1.bf16.xpose.msra.mxu0 0
    %1879 = vmatprep.subr.bf16.mxu0 0
    %1880 = vmatpush1.bf16.xpose.msra.mxu0 0
    %1881 = vmatprep.subr.bf16.mxu0 0
    %1882 = vmatpush1.bf16.xpose.msra.mxu0 0
    %1883 = vmatprep.subr.bf16.mxu0 0
    %1884 = vmatpush1.bf16.xpose.msra.mxu0 0
    %1885 = vmatprep.subr.bf16.mxu0 0
    %1886 = vmatpush1.bf16.xpose.msra.mxu0 0
    %1887 = vmatprep.subr.bf16.mxu0 0
    %1888 = vmatpush1.bf16.xpose.msra.mxu0 0
    %1889 = vmatprep.subr.bf16.mxu0 0
    %1890 = vmatpush1.bf16.xpose.msra.mxu0 0
    %1891 = vmatprep.subr.bf16.mxu0 0
    %1892 = vmatpush1.bf16.xpose.msra.mxu0 0
    %1893 = vmatprep.mubr.bf16.mxu0 0
    %1894 = vmatmul.mubr.bf16.gmra.mrb[0].mxu0 %v1856
    %v1895 = vpop.f32.mrb[0].mxu0
    %v1896 = vadd.f32 0.0, %v1895
    %v1897 = vpop.f32.mrb[0].mxu0
    %v1898 = vpop.f32.mrb[0].mxu0
    %v1899 = vpop.f32.mrb[0].mxu0
    %1900 = vdwg.mxu0
    %v1901 = vsel %vm222, %v1896, -inf
    %1902 = vmax.xlane.f32.xlu0 %v1901
    %v1903 = vpop.xlane.xlu0 %1902
    %v1904 = vsub.f32 %v1896, %v1903
    %v1905 = vmul.f32 %v1904, 1.442695
    %v1906 = vpow.pop %v1905
    %v1907 = vsel %vm222, %v1906, 0.0
    %1908 = vadd.xlane.f32.xlu0 %v1907
    %v1909 = vpop.xlane.xlu0 %1908
    %v1910 = vrcp.pop %v1909
    %v1911 = vmul.f32 %v1906, %v1910
    %v1912 = vpack.c.bf16 %v1911, %v1911
    %v1914 = vsel %vm222, %v1912, 0
    %v1917 = vsel %vm284, %v1851, 0
    %1919 = vmatprep.subr.bf16.mxu0 0
    %1920 = vmatpush1.bf16.msra.mxu0 %v1917
    %1921 = vmatprep.subr.bf16.mxu0 0
    %1922 = vmatpush1.bf16.msra.mxu0 0
    %1923 = vmatprep.subr.bf16.mxu0 0
    %1924 = vmatpush1.bf16.msra.mxu0 0
    %1925 = vmatprep.subr.bf16.mxu0 0
    %1926 = vmatpush1.bf16.msra.mxu0 0
    %1927 = vmatprep.subr.bf16.mxu0 0
    %1928 = vmatpush1.bf16.msra.mxu0 0
    %1929 = vmatprep.subr.bf16.mxu0 0
    %1930 = vmatpush1.bf16.msra.mxu0 0
    %1931 = vmatprep.subr.bf16.mxu0 0
    %1932 = vmatpush1.bf16.msra.mxu0 0
    %1933 = vmatprep.subr.bf16.mxu0 0
    %1934 = vmatpush1.bf16.msra.mxu0 0
    %1935 = vmatprep.subr.bf16.mxu0 0
    %1936 = vmatpush1.bf16.msra.mxu0 0
    %1937 = vmatprep.subr.bf16.mxu0 0
    %1938 = vmatpush1.bf16.msra.mxu0 0
    %1939 = vmatprep.subr.bf16.mxu0 0
    %1940 = vmatpush1.bf16.msra.mxu0 0
    %1941 = vmatprep.subr.bf16.mxu0 0
    %1942 = vmatpush1.bf16.msra.mxu0 0
    %1943 = vmatprep.subr.bf16.mxu0 0
    %1944 = vmatpush1.bf16.msra.mxu0 0
    %1945 = vmatprep.subr.bf16.mxu0 0
    %1946 = vmatpush1.bf16.msra.mxu0 0
    %1947 = vmatprep.subr.bf16.mxu0 0
    %1948 = vmatpush1.bf16.msra.mxu0 0
    %1949 = vmatprep.subr.bf16.mxu0 0
    %1950 = vmatpush1.bf16.msra.mxu0 0
    %1951 = vmatprep.mubr.bf16.mxu0 0
    %1952 = vmatmul.mubr.bf16.gmra.mrb[0].mxu0 %v1914
    %v1953 = vpop.f32.mrb[0].mxu0
    %v1954 = vadd.f32 0.0, %v1953
    %v1955 = vpop.f32.mrb[0].mxu0
    %v1956 = vpop.f32.mrb[0].mxu0
    %v1957 = vpop.f32.mrb[0].mxu0
    %1958 = vdwg.mxu0
    %v1959 = vpack.c.bf16 %v1954, %v1954
    %1961 = vrot.lane.b32.xlu0 %v1849, 120
    %v1962 = vpop.permute.xlu0 %1961
    %1963 = vrot.lane.b32.xlu0 %v1850, 88
    %v1964 = vpop.permute.xlu0 %1963
    %v1966 = vsel %vm222, %v1962, 0
    %v1969 = vsel %vm222, %v1964, 0
    %1971 = vmatprep.subr.bf16.mxu0 0
    %1972 = vmatpush1.bf16.xpose.msra.mxu0 %v1969
    %1973 = vmatprep.subr.bf16.mxu0 0
    %1974 = vmatpush1.bf16.xpose.msra.mxu0 0
    %1975 = vmatprep.subr.bf16.mxu0 0
    %1976 = vmatpush1.bf16.xpose.msra.mxu0 0
    %1977 = vmatprep.subr.bf16.mxu0 0
    %1978 = vmatpush1.bf16.xpose.msra.mxu0 0
    %1979 = vmatprep.subr.bf16.mxu0 0
    %1980 = vmatpush1.bf16.xpose.msra.mxu0 0
    %1981 = vmatprep.subr.bf16.mxu0 0
    %1982 = vmatpush1.bf16.xpose.msra.mxu0 0
    %1983 = vmatprep.subr.bf16.mxu0 0
    %1984 = vmatpush1.bf16.xpose.msra.mxu0 0
    %1985 = vmatprep.subr.bf16.mxu0 0
    %1986 = vmatpush1.bf16.xpose.msra.mxu0 0
    %1987 = vmatprep.subr.bf16.mxu0 0
    %1988 = vmatpush1.bf16.xpose.msra.mxu0 0
    %1989 = vmatprep.subr.bf16.mxu0 0
    %1990 = vmatpush1.bf16.xpose.msra.mxu0 0
    %1991 = vmatprep.subr.bf16.mxu0 0
    %1992 = vmatpush1.bf16.xpose.msra.mxu0 0
    %1993 = vmatprep.subr.bf16.mxu0 0
    %1994 = vmatpush1.bf16.xpose.msra.mxu0 0
    %1995 = vmatprep.subr.bf16.mxu0 0
    %1996 = vmatpush1.bf16.xpose.msra.mxu0 0
    %1997 = vmatprep.subr.bf16.mxu0 0
    %1998 = vmatpush1.bf16.xpose.msra.mxu0 0
    %1999 = vmatprep.subr.bf16.mxu0 0
    %2000 = vmatpush1.bf16.xpose.msra.mxu0 0
    %2001 = vmatprep.subr.bf16.mxu0 0
    %2002 = vmatpush1.bf16.xpose.msra.mxu0 0
    %2003 = vmatprep.mubr.bf16.mxu0 0
    %2004 = vmatmul.mubr.bf16.gmra.mrb[0].mxu0 %v1966
    %v2005 = vpop.f32.mrb[0].mxu0
    %v2006 = vadd.f32 0.0, %v2005
    %v2007 = vpop.f32.mrb[0].mxu0
    %v2008 = vpop.f32.mrb[0].mxu0
    %v2009 = vpop.f32.mrb[0].mxu0
    %2010 = vdwg.mxu0
    %v2011 = vsel %vm222, %v2006, -inf
    %2012 = vmax.xlane.f32.xlu0 %v2011
    %v2013 = vpop.xlane.xlu0 %2012
    %v2014 = vsub.f32 %v2006, %v2013
    %v2015 = vmul.f32 %v2014, 1.442695
    %v2016 = vpow.pop %v2015
    %v2017 = vsel %vm222, %v2016, 0.0
    %2018 = vadd.xlane.f32.xlu0 %v2017
    %v2019 = vpop.xlane.xlu0 %2018
    %v2020 = vrcp.pop %v2019
    %v2021 = vmul.f32 %v2016, %v2020
    %v2022 = vpack.c.bf16 %v2021, %v2021
    %2024 = vrot.lane.b32.xlu0 %v1851, 120
    %v2025 = vpop.permute.xlu0 %2024
    %v2027 = vsel %vm222, %v2022, 0
    %v2030 = vsel %vm284, %v2025, 0
    %2032 = vmatprep.subr.bf16.mxu0 0
    %2033 = vmatpush1.bf16.msra.mxu0 %v2030
    %2034 = vmatprep.subr.bf16.mxu0 0
    %2035 = vmatpush1.bf16.msra.mxu0 0
    %2036 = vmatprep.subr.bf16.mxu0 0
    %2037 = vmatpush1.bf16.msra.mxu0 0
    %2038 = vmatprep.subr.bf16.mxu0 0
    %2039 = vmatpush1.bf16.msra.mxu0 0
    %2040 = vmatprep.subr.bf16.mxu0 0
    %2041 = vmatpush1.bf16.msra.mxu0 0
    %2042 = vmatprep.subr.bf16.mxu0 0
    %2043 = vmatpush1.bf16.msra.mxu0 0
    %2044 = vmatprep.subr.bf16.mxu0 0
    %2045 = vmatpush1.bf16.msra.mxu0 0
    %2046 = vmatprep.subr.bf16.mxu0 0
    %2047 = vmatpush1.bf16.msra.mxu0 0
    %2048 = vmatprep.subr.bf16.mxu0 0
    %2049 = vmatpush1.bf16.msra.mxu0 0
    %2050 = vmatprep.subr.bf16.mxu0 0
    %2051 = vmatpush1.bf16.msra.mxu0 0
    %2052 = vmatprep.subr.bf16.mxu0 0
    %2053 = vmatpush1.bf16.msra.mxu0 0
    %2054 = vmatprep.subr.bf16.mxu0 0
    %2055 = vmatpush1.bf16.msra.mxu0 0
    %2056 = vmatprep.subr.bf16.mxu0 0
    %2057 = vmatpush1.bf16.msra.mxu0 0
    %2058 = vmatprep.subr.bf16.mxu0 0
    %2059 = vmatpush1.bf16.msra.mxu0 0
    %2060 = vmatprep.subr.bf16.mxu0 0
    %2061 = vmatpush1.bf16.msra.mxu0 0
    %2062 = vmatprep.subr.bf16.mxu0 0
    %2063 = vmatpush1.bf16.msra.mxu0 0
    %2064 = vmatprep.mubr.bf16.mxu0 0
    %2065 = vmatmul.mubr.bf16.gmra.mrb[0].mxu0 %v2027
    %v2066 = vpop.f32.mrb[0].mxu0
    %v2067 = vadd.f32 0.0, %v2066
    %v2068 = vpop.f32.mrb[0].mxu0
    %v2069 = vpop.f32.mrb[0].mxu0
    %v2070 = vpop.f32.mrb[0].mxu0
    %2071 = vdwg.mxu0
    %v2072 = vpack.c.bf16 %v2067, %v2067
    %v2074 = vsel %vm222, %v2072, 0
    %v2077 = vsel %vm284, %v1703, 0
    %2079 = vmatprep.subr.bf16.mxu0 0
    %2080 = vmatpush1.bf16.msra.mxu0 %v2077
    %2081 = vmatprep.subr.bf16.mxu0 0
    %2082 = vmatpush1.bf16.msra.mxu0 0
    %2083 = vmatprep.subr.bf16.mxu0 0
    %2084 = vmatpush1.bf16.msra.mxu0 0
    %2085 = vmatprep.subr.bf16.mxu0 0
    %2086 = vmatpush1.bf16.msra.mxu0 0
    %2087 = vmatprep.subr.bf16.mxu0 0
    %2088 = vmatpush1.bf16.msra.mxu0 0
    %2089 = vmatprep.subr.bf16.mxu0 0
    %2090 = vmatpush1.bf16.msra.mxu0 0
    %2091 = vmatprep.subr.bf16.mxu0 0
    %2092 = vmatpush1.bf16.msra.mxu0 0
    %2093 = vmatprep.subr.bf16.mxu0 0
    %2094 = vmatpush1.bf16.msra.mxu0 0
    %2095 = vmatprep.subr.bf16.mxu0 0
    %2096 = vmatpush1.bf16.msra.mxu0 0
    %2097 = vmatprep.subr.bf16.mxu0 0
    %2098 = vmatpush1.bf16.msra.mxu0 0
    %2099 = vmatprep.subr.bf16.mxu0 0
    %2100 = vmatpush1.bf16.msra.mxu0 0
    %2101 = vmatprep.subr.bf16.mxu0 0
    %2102 = vmatpush1.bf16.msra.mxu0 0
    %2103 = vmatprep.subr.bf16.mxu0 0
    %2104 = vmatpush1.bf16.msra.mxu0 0
    %2105 = vmatprep.subr.bf16.mxu0 0
    %2106 = vmatpush1.bf16.msra.mxu0 0
    %2107 = vmatprep.subr.bf16.mxu0 0
    %2108 = vmatpush1.bf16.msra.mxu0 0
    %2109 = vmatprep.subr.bf16.mxu0 0
    %2110 = vmatpush1.bf16.msra.mxu0 0
    %2111 = vmatprep.mubr.bf16.mxu0 0
    %2112 = vmatmul.mubr.bf16.gmra.mrb[0].mxu0 %v2074
    %v2113 = vpop.f32.mrb[0].mxu0
    %v2114 = vadd.f32 0.0, %v2113
    %v2115 = vpop.f32.mrb[0].mxu0
    %v2116 = vpop.f32.mrb[0].mxu0
    %v2117 = vpop.f32.mrb[0].mxu0
    %2118 = vdwg.mxu0
    %v2120 = vsel %vm222, %v1959, 0
    %v2123 = vsel %vm284, %v1702, 0
    %2125 = vmatprep.subr.bf16.mxu0 0
    %2126 = vmatpush1.bf16.msra.mxu0 %v2123
    %2127 = vmatprep.subr.bf16.mxu0 0
    %2128 = vmatpush1.bf16.msra.mxu0 0
    %2129 = vmatprep.subr.bf16.mxu0 0
    %2130 = vmatpush1.bf16.msra.mxu0 0
    %2131 = vmatprep.subr.bf16.mxu0 0
    %2132 = vmatpush1.bf16.msra.mxu0 0
    %2133 = vmatprep.subr.bf16.mxu0 0
    %2134 = vmatpush1.bf16.msra.mxu0 0
    %2135 = vmatprep.subr.bf16.mxu0 0
    %2136 = vmatpush1.bf16.msra.mxu0 0
    %2137 = vmatprep.subr.bf16.mxu0 0
    %2138 = vmatpush1.bf16.msra.mxu0 0
    %2139 = vmatprep.subr.bf16.mxu0 0
    %2140 = vmatpush1.bf16.msra.mxu0 0
    %2141 = vmatprep.subr.bf16.mxu0 0
    %2142 = vmatpush1.bf16.msra.mxu0 0
    %2143 = vmatprep.subr.bf16.mxu0 0
    %2144 = vmatpush1.bf16.msra.mxu0 0
    %2145 = vmatprep.subr.bf16.mxu0 0
    %2146 = vmatpush1.bf16.msra.mxu0 0
    %2147 = vmatprep.subr.bf16.mxu0 0
    %2148 = vmatpush1.bf16.msra.mxu0 0
    %2149 = vmatprep.subr.bf16.mxu0 0
    %2150 = vmatpush1.bf16.msra.mxu0 0
    %2151 = vmatprep.subr.bf16.mxu0 0
    %2152 = vmatpush1.bf16.msra.mxu0 0
    %2153 = vmatprep.subr.bf16.mxu0 0
    %2154 = vmatpush1.bf16.msra.mxu0 0
    %2155 = vmatprep.subr.bf16.mxu0 0
    %2156 = vmatpush1.bf16.msra.mxu0 0
    %2157 = vmatprep.mubr.bf16.mxu0 0
    %2158 = vmatmul.mubr.bf16.gmra.mrb[0].mxu0 %v2120
    %v2159 = vpop.f32.mrb[0].mxu0
    %v2160 = vadd.f32 %v2114, %v2159
    %v2161 = vpop.f32.mrb[0].mxu0
    %v2162 = vpop.f32.mrb[0].mxu0
    %v2163 = vpop.f32.mrb[0].mxu0
    %2164 = vdwg.mxu0
    %2165 = vrot.lane.b32.xlu0 %v1849, 112
    %v2166 = vpop.permute.xlu0 %2165
    %2167 = vrot.lane.b32.xlu0 %v1850, 80
    %v2168 = vpop.permute.xlu0 %2167
    %v2170 = vsel %vm222, %v2166, 0
    %v2173 = vsel %vm222, %v2168, 0
    %2175 = vmatprep.subr.bf16.mxu0 0
    %2176 = vmatpush1.bf16.xpose.msra.mxu0 %v2173
    %2177 = vmatprep.subr.bf16.mxu0 0
    %2178 = vmatpush1.bf16.xpose.msra.mxu0 0
    %2179 = vmatprep.subr.bf16.mxu0 0
    %2180 = vmatpush1.bf16.xpose.msra.mxu0 0
    %2181 = vmatprep.subr.bf16.mxu0 0
    %2182 = vmatpush1.bf16.xpose.msra.mxu0 0
    %2183 = vmatprep.subr.bf16.mxu0 0
    %2184 = vmatpush1.bf16.xpose.msra.mxu0 0
    %2185 = vmatprep.subr.bf16.mxu0 0
    %2186 = vmatpush1.bf16.xpose.msra.mxu0 0
    %2187 = vmatprep.subr.bf16.mxu0 0
    %2188 = vmatpush1.bf16.xpose.msra.mxu0 0
    %2189 = vmatprep.subr.bf16.mxu0 0
    %2190 = vmatpush1.bf16.xpose.msra.mxu0 0
    %2191 = vmatprep.subr.bf16.mxu0 0
    %2192 = vmatpush1.bf16.xpose.msra.mxu0 0
    %2193 = vmatprep.subr.bf16.mxu0 0
    %2194 = vmatpush1.bf16.xpose.msra.mxu0 0
    %2195 = vmatprep.subr.bf16.mxu0 0
    %2196 = vmatpush1.bf16.xpose.msra.mxu0 0
    %2197 = vmatprep.subr.bf16.mxu0 0
    %2198 = vmatpush1.bf16.xpose.msra.mxu0 0
    %2199 = vmatprep.subr.bf16.mxu0 0
    %2200 = vmatpush1.bf16.xpose.msra.mxu0 0
    %2201 = vmatprep.subr.bf16.mxu0 0
    %2202 = vmatpush1.bf16.xpose.msra.mxu0 0
    %2203 = vmatprep.subr.bf16.mxu0 0
    %2204 = vmatpush1.bf16.xpose.msra.mxu0 0
    %2205 = vmatprep.subr.bf16.mxu0 0
    %2206 = vmatpush1.bf16.xpose.msra.mxu0 0
    %2207 = vmatprep.mubr.bf16.mxu0 0
    %2208 = vmatmul.mubr.bf16.gmra.mrb[0].mxu0 %v2170
    %v2209 = vpop.f32.mrb[0].mxu0
    %v2210 = vadd.f32 0.0, %v2209
    %v2211 = vpop.f32.mrb[0].mxu0
    %v2212 = vpop.f32.mrb[0].mxu0
    %v2213 = vpop.f32.mrb[0].mxu0
    %2214 = vdwg.mxu0
    %v2215 = vsel %vm222, %v2210, -inf
    %2216 = vmax.xlane.f32.xlu0 %v2215
    %v2217 = vpop.xlane.xlu0 %2216
    %v2218 = vsub.f32 %v2210, %v2217
    %v2219 = vmul.f32 %v2218, 1.442695
    %v2220 = vpow.pop %v2219
    %v2221 = vsel %vm222, %v2220, 0.0
    %2222 = vadd.xlane.f32.xlu0 %v2221
    %v2223 = vpop.xlane.xlu0 %2222
    %v2224 = vrcp.pop %v2223
    %v2225 = vmul.f32 %v2220, %v2224
    %v2226 = vpack.c.bf16 %v2225, %v2225
    %2227 = vrot.lane.b32.xlu0 %v1851, 112
    %v2228 = vpop.permute.xlu0 %2227
    %v2230 = vsel %vm222, %v2226, 0
    %v2233 = vsel %vm284, %v2228, 0
    %2235 = vmatprep.subr.bf16.mxu0 0
    %2236 = vmatpush1.bf16.msra.mxu0 %v2233
    %2237 = vmatprep.subr.bf16.mxu0 0
    %2238 = vmatpush1.bf16.msra.mxu0 0
    %2239 = vmatprep.subr.bf16.mxu0 0
    %2240 = vmatpush1.bf16.msra.mxu0 0
    %2241 = vmatprep.subr.bf16.mxu0 0
    %2242 = vmatpush1.bf16.msra.mxu0 0
    %2243 = vmatprep.subr.bf16.mxu0 0
    %2244 = vmatpush1.bf16.msra.mxu0 0
    %2245 = vmatprep.subr.bf16.mxu0 0
    %2246 = vmatpush1.bf16.msra.mxu0 0
    %2247 = vmatprep.subr.bf16.mxu0 0
    %2248 = vmatpush1.bf16.msra.mxu0 0
    %2249 = vmatprep.subr.bf16.mxu0 0
    %2250 = vmatpush1.bf16.msra.mxu0 0
    %2251 = vmatprep.subr.bf16.mxu0 0
    %2252 = vmatpush1.bf16.msra.mxu0 0
    %2253 = vmatprep.subr.bf16.mxu0 0
    %2254 = vmatpush1.bf16.msra.mxu0 0
    %2255 = vmatprep.subr.bf16.mxu0 0
    %2256 = vmatpush1.bf16.msra.mxu0 0
    %2257 = vmatprep.subr.bf16.mxu0 0
    %2258 = vmatpush1.bf16.msra.mxu0 0
    %2259 = vmatprep.subr.bf16.mxu0 0
    %2260 = vmatpush1.bf16.msra.mxu0 0
    %2261 = vmatprep.subr.bf16.mxu0 0
    %2262 = vmatpush1.bf16.msra.mxu0 0
    %2263 = vmatprep.subr.bf16.mxu0 0
    %2264 = vmatpush1.bf16.msra.mxu0 0
    %2265 = vmatprep.subr.bf16.mxu0 0
    %2266 = vmatpush1.bf16.msra.mxu0 0
    %2267 = vmatprep.mubr.bf16.mxu0 0
    %2268 = vmatmul.mubr.bf16.gmra.mrb[0].mxu0 %v2230
    %v2269 = vpop.f32.mrb[0].mxu0
    %v2270 = vadd.f32 0.0, %v2269
    %v2271 = vpop.f32.mrb[0].mxu0
    %v2272 = vpop.f32.mrb[0].mxu0
    %v2273 = vpop.f32.mrb[0].mxu0
    %2274 = vdwg.mxu0
    %v2275 = vpack.c.bf16 %v2270, %v2270
    %v2277 = vsel %vm222, %v2275, 0
    %v2280 = vsel %vm284, %v1704, 0
    %2282 = vmatprep.subr.bf16.mxu0 0
    %2283 = vmatpush1.bf16.msra.mxu0 %v2280
    %2284 = vmatprep.subr.bf16.mxu0 0
    %2285 = vmatpush1.bf16.msra.mxu0 0
    %2286 = vmatprep.subr.bf16.mxu0 0
    %2287 = vmatpush1.bf16.msra.mxu0 0
    %2288 = vmatprep.subr.bf16.mxu0 0
    %2289 = vmatpush1.bf16.msra.mxu0 0
    %2290 = vmatprep.subr.bf16.mxu0 0
    %2291 = vmatpush1.bf16.msra.mxu0 0
    %2292 = vmatprep.subr.bf16.mxu0 0
    %2293 = vmatpush1.bf16.msra.mxu0 0
    %2294 = vmatprep.subr.bf16.mxu0 0
    %2295 = vmatpush1.bf16.msra.mxu0 0
    %2296 = vmatprep.subr.bf16.mxu0 0
    %2297 = vmatpush1.bf16.msra.mxu0 0
    %2298 = vmatprep.subr.bf16.mxu0 0
    %2299 = vmatpush1.bf16.msra.mxu0 0
    %2300 = vmatprep.subr.bf16.mxu0 0
    %2301 = vmatpush1.bf16.msra.mxu0 0
    %2302 = vmatprep.subr.bf16.mxu0 0
    %2303 = vmatpush1.bf16.msra.mxu0 0
    %2304 = vmatprep.subr.bf16.mxu0 0
    %2305 = vmatpush1.bf16.msra.mxu0 0
    %2306 = vmatprep.subr.bf16.mxu0 0
    %2307 = vmatpush1.bf16.msra.mxu0 0
    %2308 = vmatprep.subr.bf16.mxu0 0
    %2309 = vmatpush1.bf16.msra.mxu0 0
    %2310 = vmatprep.subr.bf16.mxu0 0
    %2311 = vmatpush1.bf16.msra.mxu0 0
    %2312 = vmatprep.subr.bf16.mxu0 0
    %2313 = vmatpush1.bf16.msra.mxu0 0
    %2314 = vmatprep.mubr.bf16.mxu0 0
    %2315 = vmatmul.mubr.bf16.gmra.mrb[0].mxu0 %v2277
    %v2316 = vpop.f32.mrb[0].mxu0
    %v2317 = vadd.f32 0.0, %v2316
    %v2318 = vpop.f32.mrb[0].mxu0
    %v2319 = vpop.f32.mrb[0].mxu0
    %v2320 = vpop.f32.mrb[0].mxu0
    %2321 = vdwg.mxu0
    %v2322 = vadd.f32 %v2160, %v2317
    %2323 = vrot.lane.b32.xlu0 %v1849, 104
    %v2324 = vpop.permute.xlu0 %2323
    %2325 = vrot.lane.b32.xlu0 %v1850, 72
    %v2326 = vpop.permute.xlu0 %2325
    %v2328 = vsel %vm222, %v2324, 0
    %v2331 = vsel %vm222, %v2326, 0
    %2333 = vmatprep.subr.bf16.mxu0 0
    %2334 = vmatpush1.bf16.xpose.msra.mxu0 %v2331
    %2335 = vmatprep.subr.bf16.mxu0 0
    %2336 = vmatpush1.bf16.xpose.msra.mxu0 0
    %2337 = vmatprep.subr.bf16.mxu0 0
    %2338 = vmatpush1.bf16.xpose.msra.mxu0 0
    %2339 = vmatprep.subr.bf16.mxu0 0
    %2340 = vmatpush1.bf16.xpose.msra.mxu0 0
    %2341 = vmatprep.subr.bf16.mxu0 0
    %2342 = vmatpush1.bf16.xpose.msra.mxu0 0
    %2343 = vmatprep.subr.bf16.mxu0 0
    %2344 = vmatpush1.bf16.xpose.msra.mxu0 0
    %2345 = vmatprep.subr.bf16.mxu0 0
    %2346 = vmatpush1.bf16.xpose.msra.mxu0 0
    %2347 = vmatprep.subr.bf16.mxu0 0
    %2348 = vmatpush1.bf16.xpose.msra.mxu0 0
    %2349 = vmatprep.subr.bf16.mxu0 0
    %2350 = vmatpush1.bf16.xpose.msra.mxu0 0
    %2351 = vmatprep.subr.bf16.mxu0 0
    %2352 = vmatpush1.bf16.xpose.msra.mxu0 0
    %2353 = vmatprep.subr.bf16.mxu0 0
    %2354 = vmatpush1.bf16.xpose.msra.mxu0 0
    %2355 = vmatprep.subr.bf16.mxu0 0
    %2356 = vmatpush1.bf16.xpose.msra.mxu0 0
    %2357 = vmatprep.subr.bf16.mxu0 0
    %2358 = vmatpush1.bf16.xpose.msra.mxu0 0
    %2359 = vmatprep.subr.bf16.mxu0 0
    %2360 = vmatpush1.bf16.xpose.msra.mxu0 0
    %2361 = vmatprep.subr.bf16.mxu0 0
    %2362 = vmatpush1.bf16.xpose.msra.mxu0 0
    %2363 = vmatprep.subr.bf16.mxu0 0
    %2364 = vmatpush1.bf16.xpose.msra.mxu0 0
    %2365 = vmatprep.mubr.bf16.mxu0 0
    %2366 = vmatmul.mubr.bf16.gmra.mrb[0].mxu0 %v2328
    %v2367 = vpop.f32.mrb[0].mxu0
    %v2368 = vadd.f32 0.0, %v2367
    %v2369 = vpop.f32.mrb[0].mxu0
    %v2370 = vpop.f32.mrb[0].mxu0
    %v2371 = vpop.f32.mrb[0].mxu0
    %2372 = vdwg.mxu0
    %v2373 = vsel %vm222, %v2368, -inf
    %2374 = vmax.xlane.f32.xlu0 %v2373
    %v2375 = vpop.xlane.xlu0 %2374
    %v2376 = vsub.f32 %v2368, %v2375
    %v2377 = vmul.f32 %v2376, 1.442695
    %v2378 = vpow.pop %v2377
    %v2379 = vsel %vm222, %v2378, 0.0
    %2380 = vadd.xlane.f32.xlu0 %v2379
    %v2381 = vpop.xlane.xlu0 %2380
    %v2382 = vrcp.pop %v2381
    %v2383 = vmul.f32 %v2378, %v2382
    %v2384 = vpack.c.bf16 %v2383, %v2383
    %2385 = vrot.lane.b32.xlu0 %v1851, 104
    %v2386 = vpop.permute.xlu0 %2385
    %v2388 = vsel %vm222, %v2384, 0
    %v2391 = vsel %vm284, %v2386, 0
    %2393 = vmatprep.subr.bf16.mxu0 0
    %2394 = vmatpush1.bf16.msra.mxu0 %v2391
    %2395 = vmatprep.subr.bf16.mxu0 0
    %2396 = vmatpush1.bf16.msra.mxu0 0
    %2397 = vmatprep.subr.bf16.mxu0 0
    %2398 = vmatpush1.bf16.msra.mxu0 0
    %2399 = vmatprep.subr.bf16.mxu0 0
    %2400 = vmatpush1.bf16.msra.mxu0 0
    %2401 = vmatprep.subr.bf16.mxu0 0
    %2402 = vmatpush1.bf16.msra.mxu0 0
    %2403 = vmatprep.subr.bf16.mxu0 0
    %2404 = vmatpush1.bf16.msra.mxu0 0
    %2405 = vmatprep.subr.bf16.mxu0 0
    %2406 = vmatpush1.bf16.msra.mxu0 0
    %2407 = vmatprep.subr.bf16.mxu0 0
    %2408 = vmatpush1.bf16.msra.mxu0 0
    %2409 = vmatprep.subr.bf16.mxu0 0
    %2410 = vmatpush1.bf16.msra.mxu0 0
    %2411 = vmatprep.subr.bf16.mxu0 0
    %2412 = vmatpush1.bf16.msra.mxu0 0
    %2413 = vmatprep.subr.bf16.mxu0 0
    %2414 = vmatpush1.bf16.msra.mxu0 0
    %2415 = vmatprep.subr.bf16.mxu0 0
    %2416 = vmatpush1.bf16.msra.mxu0 0
    %2417 = vmatprep.subr.bf16.mxu0 0
    %2418 = vmatpush1.bf16.msra.mxu0 0
    %2419 = vmatprep.subr.bf16.mxu0 0
    %2420 = vmatpush1.bf16.msra.mxu0 0
    %2421 = vmatprep.subr.bf16.mxu0 0
    %2422 = vmatpush1.bf16.msra.mxu0 0
    %2423 = vmatprep.subr.bf16.mxu0 0
    %2424 = vmatpush1.bf16.msra.mxu0 0
    %2425 = vmatprep.mubr.bf16.mxu0 0
    %2426 = vmatmul.mubr.bf16.gmra.mrb[0].mxu0 %v2388
    %v2427 = vpop.f32.mrb[0].mxu0
    %v2428 = vadd.f32 0.0, %v2427
    %v2429 = vpop.f32.mrb[0].mxu0
    %v2430 = vpop.f32.mrb[0].mxu0
    %v2431 = vpop.f32.mrb[0].mxu0
    %2432 = vdwg.mxu0
    %v2433 = vpack.c.bf16 %v2428, %v2428
    %v2435 = vsel %vm222, %v2433, 0
    %v2438 = vsel %vm284, %v1705, 0
    %2440 = vmatprep.subr.bf16.mxu0 0
    %2441 = vmatpush1.bf16.msra.mxu0 %v2438
    %2442 = vmatprep.subr.bf16.mxu0 0
    %2443 = vmatpush1.bf16.msra.mxu0 0
    %2444 = vmatprep.subr.bf16.mxu0 0
    %2445 = vmatpush1.bf16.msra.mxu0 0
    %2446 = vmatprep.subr.bf16.mxu0 0
    %2447 = vmatpush1.bf16.msra.mxu0 0
    %2448 = vmatprep.subr.bf16.mxu0 0
    %2449 = vmatpush1.bf16.msra.mxu0 0
    %2450 = vmatprep.subr.bf16.mxu0 0
    %2451 = vmatpush1.bf16.msra.mxu0 0
    %2452 = vmatprep.subr.bf16.mxu0 0
    %2453 = vmatpush1.bf16.msra.mxu0 0
    %2454 = vmatprep.subr.bf16.mxu0 0
    %2455 = vmatpush1.bf16.msra.mxu0 0
    %2456 = vmatprep.subr.bf16.mxu0 0
    %2457 = vmatpush1.bf16.msra.mxu0 0
    %2458 = vmatprep.subr.bf16.mxu0 0
    %2459 = vmatpush1.bf16.msra.mxu0 0
    %2460 = vmatprep.subr.bf16.mxu0 0
    %2461 = vmatpush1.bf16.msra.mxu0 0
    %2462 = vmatprep.subr.bf16.mxu0 0
    %2463 = vmatpush1.bf16.msra.mxu0 0
    %2464 = vmatprep.subr.bf16.mxu0 0
    %2465 = vmatpush1.bf16.msra.mxu0 0
    %2466 = vmatprep.subr.bf16.mxu0 0
    %2467 = vmatpush1.bf16.msra.mxu0 0
    %2468 = vmatprep.subr.bf16.mxu0 0
    %2469 = vmatpush1.bf16.msra.mxu0 0
    %2470 = vmatprep.subr.bf16.mxu0 0
    %2471 = vmatpush1.bf16.msra.mxu0 0
    %2472 = vmatprep.mubr.bf16.mxu0 0
    %2473 = vmatmul.mubr.bf16.gmra.mrb[0].mxu0 %v2435
    %v2474 = vpop.f32.mrb[0].mxu0
    %v2475 = vadd.f32 0.0, %v2474
    %v2476 = vpop.f32.mrb[0].mxu0
    %v2477 = vpop.f32.mrb[0].mxu0
    %v2478 = vpop.f32.mrb[0].mxu0
    %2479 = vdwg.mxu0
    %v2480 = vadd.f32 %v2322, %v2475
    %v2481 = vrot.slane %v1849, 4
    %v2482 = vrot.slane %v1850, 4
    %2483 = vrot.lane.b32.xlu0 %v2482, 96
    %v2484 = vpop.permute.xlu0 %2483
    %v2486 = vsel %vm222, %v2481, 0
    %v2489 = vsel %vm222, %v2484, 0
    %2491 = vmatprep.subr.bf16.mxu0 0
    %2492 = vmatpush1.bf16.xpose.msra.mxu0 %v2489
    %2493 = vmatprep.subr.bf16.mxu0 0
    %2494 = vmatpush1.bf16.xpose.msra.mxu0 0
    %2495 = vmatprep.subr.bf16.mxu0 0
    %2496 = vmatpush1.bf16.xpose.msra.mxu0 0
    %2497 = vmatprep.subr.bf16.mxu0 0
    %2498 = vmatpush1.bf16.xpose.msra.mxu0 0
    %2499 = vmatprep.subr.bf16.mxu0 0
    %2500 = vmatpush1.bf16.xpose.msra.mxu0 0
    %2501 = vmatprep.subr.bf16.mxu0 0
    %2502 = vmatpush1.bf16.xpose.msra.mxu0 0
    %2503 = vmatprep.subr.bf16.mxu0 0
    %2504 = vmatpush1.bf16.xpose.msra.mxu0 0
    %2505 = vmatprep.subr.bf16.mxu0 0
    %2506 = vmatpush1.bf16.xpose.msra.mxu0 0
    %2507 = vmatprep.subr.bf16.mxu0 0
    %2508 = vmatpush1.bf16.xpose.msra.mxu0 0
    %2509 = vmatprep.subr.bf16.mxu0 0
    %2510 = vmatpush1.bf16.xpose.msra.mxu0 0
    %2511 = vmatprep.subr.bf16.mxu0 0
    %2512 = vmatpush1.bf16.xpose.msra.mxu0 0
    %2513 = vmatprep.subr.bf16.mxu0 0
    %2514 = vmatpush1.bf16.xpose.msra.mxu0 0
    %2515 = vmatprep.subr.bf16.mxu0 0
    %2516 = vmatpush1.bf16.xpose.msra.mxu0 0
    %2517 = vmatprep.subr.bf16.mxu0 0
    %2518 = vmatpush1.bf16.xpose.msra.mxu0 0
    %2519 = vmatprep.subr.bf16.mxu0 0
    %2520 = vmatpush1.bf16.xpose.msra.mxu0 0
    %2521 = vmatprep.subr.bf16.mxu0 0
    %2522 = vmatpush1.bf16.xpose.msra.mxu0 0
    %2523 = vmatprep.mubr.bf16.mxu0 0
    %2524 = vmatmul.mubr.bf16.gmra.mrb[0].mxu0 %v2486
    %v2525 = vpop.f32.mrb[0].mxu0
    %v2526 = vadd.f32 0.0, %v2525
    %v2527 = vpop.f32.mrb[0].mxu0
    %v2528 = vpop.f32.mrb[0].mxu0
    %v2529 = vpop.f32.mrb[0].mxu0
    %2530 = vdwg.mxu0
    %v2531 = vsel %vm222, %v2526, -inf
    %2532 = vmax.xlane.f32.xlu0 %v2531
    %v2533 = vpop.xlane.xlu0 %2532
    %v2534 = vsub.f32 %v2526, %v2533
    %v2535 = vmul.f32 %v2534, 1.442695
    %v2536 = vpow.pop %v2535
    %v2537 = vsel %vm222, %v2536, 0.0
    %2538 = vadd.xlane.f32.xlu0 %v2537
    %v2539 = vpop.xlane.xlu0 %2538
    %v2540 = vrcp.pop %v2539
    %v2541 = vmul.f32 %v2536, %v2540
    %v2542 = vpack.c.bf16 %v2541, %v2541
    %v2543 = vrot.slane %v1851, 4
    %v2545 = vsel %vm222, %v2542, 0
    %v2548 = vsel %vm284, %v2543, 0
    %2550 = vmatprep.subr.bf16.mxu0 0
    %2551 = vmatpush1.bf16.msra.mxu0 %v2548
    %2552 = vmatprep.subr.bf16.mxu0 0
    %2553 = vmatpush1.bf16.msra.mxu0 0
    %2554 = vmatprep.subr.bf16.mxu0 0
    %2555 = vmatpush1.bf16.msra.mxu0 0
    %2556 = vmatprep.subr.bf16.mxu0 0
    %2557 = vmatpush1.bf16.msra.mxu0 0
    %2558 = vmatprep.subr.bf16.mxu0 0
    %2559 = vmatpush1.bf16.msra.mxu0 0
    %2560 = vmatprep.subr.bf16.mxu0 0
    %2561 = vmatpush1.bf16.msra.mxu0 0
    %2562 = vmatprep.subr.bf16.mxu0 0
    %2563 = vmatpush1.bf16.msra.mxu0 0
    %2564 = vmatprep.subr.bf16.mxu0 0
    %2565 = vmatpush1.bf16.msra.mxu0 0
    %2566 = vmatprep.subr.bf16.mxu0 0
    %2567 = vmatpush1.bf16.msra.mxu0 0
    %2568 = vmatprep.subr.bf16.mxu0 0
    %2569 = vmatpush1.bf16.msra.mxu0 0
    %2570 = vmatprep.subr.bf16.mxu0 0
    %2571 = vmatpush1.bf16.msra.mxu0 0
    %2572 = vmatprep.subr.bf16.mxu0 0
    %2573 = vmatpush1.bf16.msra.mxu0 0
    %2574 = vmatprep.subr.bf16.mxu0 0
    %2575 = vmatpush1.bf16.msra.mxu0 0
    %2576 = vmatprep.subr.bf16.mxu0 0
    %2577 = vmatpush1.bf16.msra.mxu0 0
    %2578 = vmatprep.subr.bf16.mxu0 0
    %2579 = vmatpush1.bf16.msra.mxu0 0
    %2580 = vmatprep.subr.bf16.mxu0 0
    %2581 = vmatpush1.bf16.msra.mxu0 0
    %2582 = vmatprep.mubr.bf16.mxu0 0
    %2583 = vmatmul.mubr.bf16.gmra.mrb[0].mxu0 %v2545
    %v2584 = vpop.f32.mrb[0].mxu0
    %v2585 = vadd.f32 0.0, %v2584
    %v2586 = vpop.f32.mrb[0].mxu0
    %v2587 = vpop.f32.mrb[0].mxu0
    %v2588 = vpop.f32.mrb[0].mxu0
    %2589 = vdwg.mxu0
    %v2590 = vpack.c.bf16 %v2585, %v2585
    %2591 = vrot.lane.b32.xlu0 %v2481, 120
    %v2592 = vpop.permute.xlu0 %2591
    %2593 = vrot.lane.b32.xlu0 %v2482, 88
    %v2594 = vpop.permute.xlu0 %2593
    %v2596 = vsel %vm222, %v2592, 0
    %v2599 = vsel %vm222, %v2594, 0
    %2601 = vmatprep.subr.bf16.mxu0 0
    %2602 = vmatpush1.bf16.xpose.msra.mxu0 %v2599
    %2603 = vmatprep.subr.bf16.mxu0 0
    %2604 = vmatpush1.bf16.xpose.msra.mxu0 0
    %2605 = vmatprep.subr.bf16.mxu0 0
    %2606 = vmatpush1.bf16.xpose.msra.mxu0 0
    %2607 = vmatprep.subr.bf16.mxu0 0
    %2608 = vmatpush1.bf16.xpose.msra.mxu0 0
    %2609 = vmatprep.subr.bf16.mxu0 0
    %2610 = vmatpush1.bf16.xpose.msra.mxu0 0
    %2611 = vmatprep.subr.bf16.mxu0 0
    %2612 = vmatpush1.bf16.xpose.msra.mxu0 0
    %2613 = vmatprep.subr.bf16.mxu0 0
    %2614 = vmatpush1.bf16.xpose.msra.mxu0 0
    %2615 = vmatprep.subr.bf16.mxu0 0
    %2616 = vmatpush1.bf16.xpose.msra.mxu0 0
    %2617 = vmatprep.subr.bf16.mxu0 0
    %2618 = vmatpush1.bf16.xpose.msra.mxu0 0
    %2619 = vmatprep.subr.bf16.mxu0 0
    %2620 = vmatpush1.bf16.xpose.msra.mxu0 0
    %2621 = vmatprep.subr.bf16.mxu0 0
    %2622 = vmatpush1.bf16.xpose.msra.mxu0 0
    %2623 = vmatprep.subr.bf16.mxu0 0
    %2624 = vmatpush1.bf16.xpose.msra.mxu0 0
    %2625 = vmatprep.subr.bf16.mxu0 0
    %2626 = vmatpush1.bf16.xpose.msra.mxu0 0
    %2627 = vmatprep.subr.bf16.mxu0 0
    %2628 = vmatpush1.bf16.xpose.msra.mxu0 0
    %2629 = vmatprep.subr.bf16.mxu0 0
    %2630 = vmatpush1.bf16.xpose.msra.mxu0 0
    %2631 = vmatprep.subr.bf16.mxu0 0
    %2632 = vmatpush1.bf16.xpose.msra.mxu0 0
    %2633 = vmatprep.mubr.bf16.mxu0 0
    %2634 = vmatmul.mubr.bf16.gmra.mrb[0].mxu0 %v2596
    %v2635 = vpop.f32.mrb[0].mxu0
    %v2636 = vadd.f32 0.0, %v2635
    %v2637 = vpop.f32.mrb[0].mxu0
    %v2638 = vpop.f32.mrb[0].mxu0
    %v2639 = vpop.f32.mrb[0].mxu0
    %2640 = vdwg.mxu0
    %v2641 = vsel %vm222, %v2636, -inf
    %2642 = vmax.xlane.f32.xlu0 %v2641
    %v2643 = vpop.xlane.xlu0 %2642
    %v2644 = vsub.f32 %v2636, %v2643
    %v2645 = vmul.f32 %v2644, 1.442695
    %v2646 = vpow.pop %v2645
    %v2647 = vsel %vm222, %v2646, 0.0
    %2648 = vadd.xlane.f32.xlu0 %v2647
    %v2649 = vpop.xlane.xlu0 %2648
    %v2650 = vrcp.pop %v2649
    %v2651 = vmul.f32 %v2646, %v2650
    %v2652 = vpack.c.bf16 %v2651, %v2651
    %2653 = vrot.lane.b32.xlu0 %v2543, 120
    %v2654 = vpop.permute.xlu0 %2653
    %v2656 = vsel %vm222, %v2652, 0
    %v2659 = vsel %vm284, %v2654, 0
    %2661 = vmatprep.subr.bf16.mxu0 0
    %2662 = vmatpush1.bf16.msra.mxu0 %v2659
    %2663 = vmatprep.subr.bf16.mxu0 0
    %2664 = vmatpush1.bf16.msra.mxu0 0
    %2665 = vmatprep.subr.bf16.mxu0 0
    %2666 = vmatpush1.bf16.msra.mxu0 0
    %2667 = vmatprep.subr.bf16.mxu0 0
    %2668 = vmatpush1.bf16.msra.mxu0 0
    %2669 = vmatprep.subr.bf16.mxu0 0
    %2670 = vmatpush1.bf16.msra.mxu0 0
    %2671 = vmatprep.subr.bf16.mxu0 0
    %2672 = vmatpush1.bf16.msra.mxu0 0
    %2673 = vmatprep.subr.bf16.mxu0 0
    %2674 = vmatpush1.bf16.msra.mxu0 0
    %2675 = vmatprep.subr.bf16.mxu0 0
    %2676 = vmatpush1.bf16.msra.mxu0 0
    %2677 = vmatprep.subr.bf16.mxu0 0
    %2678 = vmatpush1.bf16.msra.mxu0 0
    %2679 = vmatprep.subr.bf16.mxu0 0
    %2680 = vmatpush1.bf16.msra.mxu0 0
    %2681 = vmatprep.subr.bf16.mxu0 0
    %2682 = vmatpush1.bf16.msra.mxu0 0
    %2683 = vmatprep.subr.bf16.mxu0 0
    %2684 = vmatpush1.bf16.msra.mxu0 0
    %2685 = vmatprep.subr.bf16.mxu0 0
    %2686 = vmatpush1.bf16.msra.mxu0 0
    %2687 = vmatprep.subr.bf16.mxu0 0
    %2688 = vmatpush1.bf16.msra.mxu0 0
    %2689 = vmatprep.subr.bf16.mxu0 0
    %2690 = vmatpush1.bf16.msra.mxu0 0
    %2691 = vmatprep.subr.bf16.mxu0 0
    %2692 = vmatpush1.bf16.msra.mxu0 0
    %2693 = vmatprep.mubr.bf16.mxu0 0
    %2694 = vmatmul.mubr.bf16.gmra.mrb[0].mxu0 %v2656
    %v2695 = vpop.f32.mrb[0].mxu0
    %v2696 = vadd.f32 0.0, %v2695
    %v2697 = vpop.f32.mrb[0].mxu0
    %v2698 = vpop.f32.mrb[0].mxu0
    %v2699 = vpop.f32.mrb[0].mxu0
    %2700 = vdwg.mxu0
    %v2701 = vpack.c.bf16 %v2696, %v2696
    %v2703 = vsel %vm222, %v2701, 0
    %2705 = vmatprep.subr.bf16.mxu0 0
    %2706 = vmatpush1.bf16.msra.mxu0 %v2077
    %2707 = vmatprep.subr.bf16.mxu0 0
    %2708 = vmatpush1.bf16.msra.mxu0 0
    %2709 = vmatprep.subr.bf16.mxu0 0
    %2710 = vmatpush1.bf16.msra.mxu0 0
    %2711 = vmatprep.subr.bf16.mxu0 0
    %2712 = vmatpush1.bf16.msra.mxu0 0
    %2713 = vmatprep.subr.bf16.mxu0 0
    %2714 = vmatpush1.bf16.msra.mxu0 0
    %2715 = vmatprep.subr.bf16.mxu0 0
    %2716 = vmatpush1.bf16.msra.mxu0 0
    %2717 = vmatprep.subr.bf16.mxu0 0
    %2718 = vmatpush1.bf16.msra.mxu0 0
    %2719 = vmatprep.subr.bf16.mxu0 0
    %2720 = vmatpush1.bf16.msra.mxu0 0
    %2721 = vmatprep.subr.bf16.mxu0 0
    %2722 = vmatpush1.bf16.msra.mxu0 0
    %2723 = vmatprep.subr.bf16.mxu0 0
    %2724 = vmatpush1.bf16.msra.mxu0 0
    %2725 = vmatprep.subr.bf16.mxu0 0
    %2726 = vmatpush1.bf16.msra.mxu0 0
    %2727 = vmatprep.subr.bf16.mxu0 0
    %2728 = vmatpush1.bf16.msra.mxu0 0
    %2729 = vmatprep.subr.bf16.mxu0 0
    %2730 = vmatpush1.bf16.msra.mxu0 0
    %2731 = vmatprep.subr.bf16.mxu0 0
    %2732 = vmatpush1.bf16.msra.mxu0 0
    %2733 = vmatprep.subr.bf16.mxu0 0
    %2734 = vmatpush1.bf16.msra.mxu0 0
    %2735 = vmatprep.subr.bf16.mxu0 0
    %2736 = vmatpush1.bf16.msra.mxu0 0
    %2737 = vmatprep.mubr.bf16.mxu0 0
    %2738 = vmatmul.mubr.bf16.gmra.mrb[0].mxu0 %v2703
    %v2739 = vpop.f32.mrb[0].mxu0
    %v2740 = vadd.f32 0.0, %v2739
    %v2741 = vpop.f32.mrb[0].mxu0
    %v2742 = vpop.f32.mrb[0].mxu0
    %v2743 = vpop.f32.mrb[0].mxu0
    %2744 = vdwg.mxu0
    %v2746 = vsel %vm222, %v2590, 0
    %2748 = vmatprep.subr.bf16.mxu0 0
    %2749 = vmatpush1.bf16.msra.mxu0 %v2123
    %2750 = vmatprep.subr.bf16.mxu0 0
    %2751 = vmatpush1.bf16.msra.mxu0 0
    %2752 = vmatprep.subr.bf16.mxu0 0
    %2753 = vmatpush1.bf16.msra.mxu0 0
    %2754 = vmatprep.subr.bf16.mxu0 0
    %2755 = vmatpush1.bf16.msra.mxu0 0
    %2756 = vmatprep.subr.bf16.mxu0 0
    %2757 = vmatpush1.bf16.msra.mxu0 0
    %2758 = vmatprep.subr.bf16.mxu0 0
    %2759 = vmatpush1.bf16.msra.mxu0 0
    %2760 = vmatprep.subr.bf16.mxu0 0
    %2761 = vmatpush1.bf16.msra.mxu0 0
    %2762 = vmatprep.subr.bf16.mxu0 0
    %2763 = vmatpush1.bf16.msra.mxu0 0
    %2764 = vmatprep.subr.bf16.mxu0 0
    %2765 = vmatpush1.bf16.msra.mxu0 0
    %2766 = vmatprep.subr.bf16.mxu0 0
    %2767 = vmatpush1.bf16.msra.mxu0 0
    %2768 = vmatprep.subr.bf16.mxu0 0
    %2769 = vmatpush1.bf16.msra.mxu0 0
    %2770 = vmatprep.subr.bf16.mxu0 0
    %2771 = vmatpush1.bf16.msra.mxu0 0
    %2772 = vmatprep.subr.bf16.mxu0 0
    %2773 = vmatpush1.bf16.msra.mxu0 0
    %2774 = vmatprep.subr.bf16.mxu0 0
    %2775 = vmatpush1.bf16.msra.mxu0 0
    %2776 = vmatprep.subr.bf16.mxu0 0
    %2777 = vmatpush1.bf16.msra.mxu0 0
    %2778 = vmatprep.subr.bf16.mxu0 0
    %2779 = vmatpush1.bf16.msra.mxu0 0
    %2780 = vmatprep.mubr.bf16.mxu0 0
    %2781 = vmatmul.mubr.bf16.gmra.mrb[0].mxu0 %v2746
    %v2782 = vpop.f32.mrb[0].mxu0
    %v2783 = vadd.f32 %v2740, %v2782
    %v2784 = vpop.f32.mrb[0].mxu0
    %v2785 = vpop.f32.mrb[0].mxu0
    %v2786 = vpop.f32.mrb[0].mxu0
    %2787 = vdwg.mxu0
    %2788 = vrot.lane.b32.xlu0 %v2481, 112
    %v2789 = vpop.permute.xlu0 %2788
    %2790 = vrot.lane.b32.xlu0 %v2482, 80
    %v2791 = vpop.permute.xlu0 %2790
    %v2793 = vsel %vm222, %v2789, 0
    %v2796 = vsel %vm222, %v2791, 0
    %2798 = vmatprep.subr.bf16.mxu0 0
    %2799 = vmatpush1.bf16.xpose.msra.mxu0 %v2796
    %2800 = vmatprep.subr.bf16.mxu0 0
    %2801 = vmatpush1.bf16.xpose.msra.mxu0 0
    %2802 = vmatprep.subr.bf16.mxu0 0
    %2803 = vmatpush1.bf16.xpose.msra.mxu0 0
    %2804 = vmatprep.subr.bf16.mxu0 0
    %2805 = vmatpush1.bf16.xpose.msra.mxu0 0
    %2806 = vmatprep.subr.bf16.mxu0 0
    %2807 = vmatpush1.bf16.xpose.msra.mxu0 0
    %2808 = vmatprep.subr.bf16.mxu0 0
    %2809 = vmatpush1.bf16.xpose.msra.mxu0 0
    %2810 = vmatprep.subr.bf16.mxu0 0
    %2811 = vmatpush1.bf16.xpose.msra.mxu0 0
    %2812 = vmatprep.subr.bf16.mxu0 0
    %2813 = vmatpush1.bf16.xpose.msra.mxu0 0
    %2814 = vmatprep.subr.bf16.mxu0 0
    %2815 = vmatpush1.bf16.xpose.msra.mxu0 0
    %2816 = vmatprep.subr.bf16.mxu0 0
    %2817 = vmatpush1.bf16.xpose.msra.mxu0 0
    %2818 = vmatprep.subr.bf16.mxu0 0
    %2819 = vmatpush1.bf16.xpose.msra.mxu0 0
    %2820 = vmatprep.subr.bf16.mxu0 0
    %2821 = vmatpush1.bf16.xpose.msra.mxu0 0
    %2822 = vmatprep.subr.bf16.mxu0 0
    %2823 = vmatpush1.bf16.xpose.msra.mxu0 0
    %2824 = vmatprep.subr.bf16.mxu0 0
    %2825 = vmatpush1.bf16.xpose.msra.mxu0 0
    %2826 = vmatprep.subr.bf16.mxu0 0
    %2827 = vmatpush1.bf16.xpose.msra.mxu0 0
    %2828 = vmatprep.subr.bf16.mxu0 0
    %2829 = vmatpush1.bf16.xpose.msra.mxu0 0
    %2830 = vmatprep.mubr.bf16.mxu0 0
    %2831 = vmatmul.mubr.bf16.gmra.mrb[0].mxu0 %v2793
    %v2832 = vpop.f32.mrb[0].mxu0
    %v2833 = vadd.f32 0.0, %v2832
    %v2834 = vpop.f32.mrb[0].mxu0
    %v2835 = vpop.f32.mrb[0].mxu0
    %v2836 = vpop.f32.mrb[0].mxu0
    %2837 = vdwg.mxu0
    %v2838 = vsel %vm222, %v2833, -inf
    %2839 = vmax.xlane.f32.xlu0 %v2838
    %v2840 = vpop.xlane.xlu0 %2839
    %v2841 = vsub.f32 %v2833, %v2840
    %v2842 = vmul.f32 %v2841, 1.442695
    %v2843 = vpow.pop %v2842
    %v2844 = vsel %vm222, %v2843, 0.0
    %2845 = vadd.xlane.f32.xlu0 %v2844
    %v2846 = vpop.xlane.xlu0 %2845
    %v2847 = vrcp.pop %v2846
    %v2848 = vmul.f32 %v2843, %v2847
    %v2849 = vpack.c.bf16 %v2848, %v2848
    %2850 = vrot.lane.b32.xlu0 %v2543, 112
    %v2851 = vpop.permute.xlu0 %2850
    %v2853 = vsel %vm222, %v2849, 0
    %v2856 = vsel %vm284, %v2851, 0
    %2858 = vmatprep.subr.bf16.mxu0 0
    %2859 = vmatpush1.bf16.msra.mxu0 %v2856
    %2860 = vmatprep.subr.bf16.mxu0 0
    %2861 = vmatpush1.bf16.msra.mxu0 0
    %2862 = vmatprep.subr.bf16.mxu0 0
    %2863 = vmatpush1.bf16.msra.mxu0 0
    %2864 = vmatprep.subr.bf16.mxu0 0
    %2865 = vmatpush1.bf16.msra.mxu0 0
    %2866 = vmatprep.subr.bf16.mxu0 0
    %2867 = vmatpush1.bf16.msra.mxu0 0
    %2868 = vmatprep.subr.bf16.mxu0 0
    %2869 = vmatpush1.bf16.msra.mxu0 0
    %2870 = vmatprep.subr.bf16.mxu0 0
    %2871 = vmatpush1.bf16.msra.mxu0 0
    %2872 = vmatprep.subr.bf16.mxu0 0
    %2873 = vmatpush1.bf16.msra.mxu0 0
    %2874 = vmatprep.subr.bf16.mxu0 0
    %2875 = vmatpush1.bf16.msra.mxu0 0
    %2876 = vmatprep.subr.bf16.mxu0 0
    %2877 = vmatpush1.bf16.msra.mxu0 0
    %2878 = vmatprep.subr.bf16.mxu0 0
    %2879 = vmatpush1.bf16.msra.mxu0 0
    %2880 = vmatprep.subr.bf16.mxu0 0
    %2881 = vmatpush1.bf16.msra.mxu0 0
    %2882 = vmatprep.subr.bf16.mxu0 0
    %2883 = vmatpush1.bf16.msra.mxu0 0
    %2884 = vmatprep.subr.bf16.mxu0 0
    %2885 = vmatpush1.bf16.msra.mxu0 0
    %2886 = vmatprep.subr.bf16.mxu0 0
    %2887 = vmatpush1.bf16.msra.mxu0 0
    %2888 = vmatprep.subr.bf16.mxu0 0
    %2889 = vmatpush1.bf16.msra.mxu0 0
    %2890 = vmatprep.mubr.bf16.mxu0 0
    %2891 = vmatmul.mubr.bf16.gmra.mrb[0].mxu0 %v2853
    %v2892 = vpop.f32.mrb[0].mxu0
    %v2893 = vadd.f32 0.0, %v2892
    %v2894 = vpop.f32.mrb[0].mxu0
    %v2895 = vpop.f32.mrb[0].mxu0
    %v2896 = vpop.f32.mrb[0].mxu0
    %2897 = vdwg.mxu0
    %v2898 = vpack.c.bf16 %v2893, %v2893
    %v2900 = vsel %vm222, %v2898, 0
    %2902 = vmatprep.subr.bf16.mxu0 0
    %2903 = vmatpush1.bf16.msra.mxu0 %v2280
    %2904 = vmatprep.subr.bf16.mxu0 0
    %2905 = vmatpush1.bf16.msra.mxu0 0
    %2906 = vmatprep.subr.bf16.mxu0 0
    %2907 = vmatpush1.bf16.msra.mxu0 0
    %2908 = vmatprep.subr.bf16.mxu0 0
    %2909 = vmatpush1.bf16.msra.mxu0 0
    %2910 = vmatprep.subr.bf16.mxu0 0
    %2911 = vmatpush1.bf16.msra.mxu0 0
    %2912 = vmatprep.subr.bf16.mxu0 0
    %2913 = vmatpush1.bf16.msra.mxu0 0
    %2914 = vmatprep.subr.bf16.mxu0 0
    %2915 = vmatpush1.bf16.msra.mxu0 0
    %2916 = vmatprep.subr.bf16.mxu0 0
    %2917 = vmatpush1.bf16.msra.mxu0 0
    %2918 = vmatprep.subr.bf16.mxu0 0
    %2919 = vmatpush1.bf16.msra.mxu0 0
    %2920 = vmatprep.subr.bf16.mxu0 0
    %2921 = vmatpush1.bf16.msra.mxu0 0
    %2922 = vmatprep.subr.bf16.mxu0 0
    %2923 = vmatpush1.bf16.msra.mxu0 0
    %2924 = vmatprep.subr.bf16.mxu0 0
    %2925 = vmatpush1.bf16.msra.mxu0 0
    %2926 = vmatprep.subr.bf16.mxu0 0
    %2927 = vmatpush1.bf16.msra.mxu0 0
    %2928 = vmatprep.subr.bf16.mxu0 0
    %2929 = vmatpush1.bf16.msra.mxu0 0
    %2930 = vmatprep.subr.bf16.mxu0 0
    %2931 = vmatpush1.bf16.msra.mxu0 0
    %2932 = vmatprep.subr.bf16.mxu0 0
    %2933 = vmatpush1.bf16.msra.mxu0 0
    %2934 = vmatprep.mubr.bf16.mxu0 0
    %2935 = vmatmul.mubr.bf16.gmra.mrb[0].mxu0 %v2900
    %v2936 = vpop.f32.mrb[0].mxu0
    %v2937 = vadd.f32 0.0, %v2936
    %v2938 = vpop.f32.mrb[0].mxu0
    %v2939 = vpop.f32.mrb[0].mxu0
    %v2940 = vpop.f32.mrb[0].mxu0
    %2941 = vdwg.mxu0
    %v2942 = vadd.f32 %v2783, %v2937
    %2943 = vrot.lane.b32.xlu0 %v2481, 104
    %v2944 = vpop.permute.xlu0 %2943
    %2945 = vrot.lane.b32.xlu0 %v2482, 72
    %v2946 = vpop.permute.xlu0 %2945
    %v2948 = vsel %vm222, %v2944, 0
    %v2951 = vsel %vm222, %v2946, 0
    %2953 = vmatprep.subr.bf16.mxu0 0
    %2954 = vmatpush1.bf16.xpose.msra.mxu0 %v2951
    %2955 = vmatprep.subr.bf16.mxu0 0
    %2956 = vmatpush1.bf16.xpose.msra.mxu0 0
    %2957 = vmatprep.subr.bf16.mxu0 0
    %2958 = vmatpush1.bf16.xpose.msra.mxu0 0
    %2959 = vmatprep.subr.bf16.mxu0 0
    %2960 = vmatpush1.bf16.xpose.msra.mxu0 0
    %2961 = vmatprep.subr.bf16.mxu0 0
    %2962 = vmatpush1.bf16.xpose.msra.mxu0 0
    %2963 = vmatprep.subr.bf16.mxu0 0
    %2964 = vmatpush1.bf16.xpose.msra.mxu0 0
    %2965 = vmatprep.subr.bf16.mxu0 0
    %2966 = vmatpush1.bf16.xpose.msra.mxu0 0
    %2967 = vmatprep.subr.bf16.mxu0 0
    %2968 = vmatpush1.bf16.xpose.msra.mxu0 0
    %2969 = vmatprep.subr.bf16.mxu0 0
    %2970 = vmatpush1.bf16.xpose.msra.mxu0 0
    %2971 = vmatprep.subr.bf16.mxu0 0
    %2972 = vmatpush1.bf16.xpose.msra.mxu0 0
    %2973 = vmatprep.subr.bf16.mxu0 0
    %2974 = vmatpush1.bf16.xpose.msra.mxu0 0
    %2975 = vmatprep.subr.bf16.mxu0 0
    %2976 = vmatpush1.bf16.xpose.msra.mxu0 0
    %2977 = vmatprep.subr.bf16.mxu0 0
    %2978 = vmatpush1.bf16.xpose.msra.mxu0 0
    %2979 = vmatprep.subr.bf16.mxu0 0
    %2980 = vmatpush1.bf16.xpose.msra.mxu0 0
    %2981 = vmatprep.subr.bf16.mxu0 0
    %2982 = vmatpush1.bf16.xpose.msra.mxu0 0
    %2983 = vmatprep.subr.bf16.mxu0 0
    %2984 = vmatpush1.bf16.xpose.msra.mxu0 0
    %2985 = vmatprep.mubr.bf16.mxu0 0
    %2986 = vmatmul.mubr.bf16.gmra.mrb[0].mxu0 %v2948
    %v2987 = vpop.f32.mrb[0].mxu0
    %v2988 = vadd.f32 0.0, %v2987
    %v2989 = vpop.f32.mrb[0].mxu0
    %v2990 = vpop.f32.mrb[0].mxu0
    %v2991 = vpop.f32.mrb[0].mxu0
    %2992 = vdwg.mxu0
    %v2993 = vsel %vm222, %v2988, -inf
    %2994 = vmax.xlane.f32.xlu0 %v2993
    %v2995 = vpop.xlane.xlu0 %2994
    %v2996 = vsub.f32 %v2988, %v2995
    %v2997 = vmul.f32 %v2996, 1.442695
    %v2998 = vpow.pop %v2997
    %v2999 = vsel %vm222, %v2998, 0.0
    %3000 = vadd.xlane.f32.xlu0 %v2999
    %v3001 = vpop.xlane.xlu0 %3000
    %v3002 = vrcp.pop %v3001
    %v3003 = vmul.f32 %v2998, %v3002
    %v3004 = vpack.c.bf16 %v3003, %v3003
    %3005 = vrot.lane.b32.xlu0 %v2543, 104
    %v3006 = vpop.permute.xlu0 %3005
    %v3008 = vsel %vm222, %v3004, 0
    %v3011 = vsel %vm284, %v3006, 0
    %3013 = vmatprep.subr.bf16.mxu0 0
    %3014 = vmatpush1.bf16.msra.mxu0 %v3011
    %3015 = vmatprep.subr.bf16.mxu0 0
    %3016 = vmatpush1.bf16.msra.mxu0 0
    %3017 = vmatprep.subr.bf16.mxu0 0
    %3018 = vmatpush1.bf16.msra.mxu0 0
    %3019 = vmatprep.subr.bf16.mxu0 0
    %3020 = vmatpush1.bf16.msra.mxu0 0
    %3021 = vmatprep.subr.bf16.mxu0 0
    %3022 = vmatpush1.bf16.msra.mxu0 0
    %3023 = vmatprep.subr.bf16.mxu0 0
    %3024 = vmatpush1.bf16.msra.mxu0 0
    %3025 = vmatprep.subr.bf16.mxu0 0
    %3026 = vmatpush1.bf16.msra.mxu0 0
    %3027 = vmatprep.subr.bf16.mxu0 0
    %3028 = vmatpush1.bf16.msra.mxu0 0
    %3029 = vmatprep.subr.bf16.mxu0 0
    %3030 = vmatpush1.bf16.msra.mxu0 0
    %3031 = vmatprep.subr.bf16.mxu0 0
    %3032 = vmatpush1.bf16.msra.mxu0 0
    %3033 = vmatprep.subr.bf16.mxu0 0
    %3034 = vmatpush1.bf16.msra.mxu0 0
    %3035 = vmatprep.subr.bf16.mxu0 0
    %3036 = vmatpush1.bf16.msra.mxu0 0
    %3037 = vmatprep.subr.bf16.mxu0 0
    %3038 = vmatpush1.bf16.msra.mxu0 0
    %3039 = vmatprep.subr.bf16.mxu0 0
    %3040 = vmatpush1.bf16.msra.mxu0 0
    %3041 = vmatprep.subr.bf16.mxu0 0
    %3042 = vmatpush1.bf16.msra.mxu0 0
    %3043 = vmatprep.subr.bf16.mxu0 0
    %3044 = vmatpush1.bf16.msra.mxu0 0
    %3045 = vmatprep.mubr.bf16.mxu0 0
    %3046 = vmatmul.mubr.bf16.gmra.mrb[0].mxu0 %v3008
    %v3047 = vpop.f32.mrb[0].mxu0
    %v3048 = vadd.f32 0.0, %v3047
    %v3049 = vpop.f32.mrb[0].mxu0
    %v3050 = vpop.f32.mrb[0].mxu0
    %v3051 = vpop.f32.mrb[0].mxu0
    %3052 = vdwg.mxu0
    %v3053 = vpack.c.bf16 %v3048, %v3048
    %v3055 = vsel %vm222, %v3053, 0
    %3057 = vmatprep.subr.bf16.mxu0 0
    %3058 = vmatpush1.bf16.msra.mxu0 %v2438
    %3059 = vmatprep.subr.bf16.mxu0 0
    %3060 = vmatpush1.bf16.msra.mxu0 0
    %3061 = vmatprep.subr.bf16.mxu0 0
    %3062 = vmatpush1.bf16.msra.mxu0 0
    %3063 = vmatprep.subr.bf16.mxu0 0
    %3064 = vmatpush1.bf16.msra.mxu0 0
    %3065 = vmatprep.subr.bf16.mxu0 0
    %3066 = vmatpush1.bf16.msra.mxu0 0
    %3067 = vmatprep.subr.bf16.mxu0 0
    %3068 = vmatpush1.bf16.msra.mxu0 0
    %3069 = vmatprep.subr.bf16.mxu0 0
    %3070 = vmatpush1.bf16.msra.mxu0 0
    %3071 = vmatprep.subr.bf16.mxu0 0
    %3072 = vmatpush1.bf16.msra.mxu0 0
    %3073 = vmatprep.subr.bf16.mxu0 0
    %3074 = vmatpush1.bf16.msra.mxu0 0
    %3075 = vmatprep.subr.bf16.mxu0 0
    %3076 = vmatpush1.bf16.msra.mxu0 0
    %3077 = vmatprep.subr.bf16.mxu0 0
    %3078 = vmatpush1.bf16.msra.mxu0 0
    %3079 = vmatprep.subr.bf16.mxu0 0
    %3080 = vmatpush1.bf16.msra.mxu0 0
    %3081 = vmatprep.subr.bf16.mxu0 0
    %3082 = vmatpush1.bf16.msra.mxu0 0
    %3083 = vmatprep.subr.bf16.mxu0 0
    %3084 = vmatpush1.bf16.msra.mxu0 0
    %3085 = vmatprep.subr.bf16.mxu0 0
    %3086 = vmatpush1.bf16.msra.mxu0 0
    %3087 = vmatprep.subr.bf16.mxu0 0
    %3088 = vmatpush1.bf16.msra.mxu0 0
    %3089 = vmatprep.mubr.bf16.mxu0 0
    %3090 = vmatmul.mubr.bf16.gmra.mrb[0].mxu0 %v3055
    %v3091 = vpop.f32.mrb[0].mxu0
    %v3092 = vadd.f32 0.0, %v3091
    %v3093 = vpop.f32.mrb[0].mxu0
    %v3094 = vpop.f32.mrb[0].mxu0
    %v3095 = vpop.f32.mrb[0].mxu0
    %3096 = vdwg.mxu0
    %v3097 = vadd.f32 %v2942, %v3092
    %v3098 = vlaneseq
    %v3099 = vshrl.u32 %v3098, 7
    %v3100 = vsub.s32 2, %v3099
    %v3101 = vrot.slane %v1721, %v3100
    %v3102 = vadd.f32 %v2480, %v3101
    %v3103 = vadd.f32 %v3097, %v3101
    %v3104 = vadd.f32 %v1689, %v3102
    %v3105 = vadd.f32 %v1690, %v3103
    %v3106 = vsel %vm108, %v3104, 0.0
    %3107 = vadd.xlane.f32.xlu0 %v3106
    %v3108 = vpop.xlane.xlu0 %3107
    %v3109 = vsel %vm108, %v3105, 0.0
    %3110 = vadd.xlane.f32.xlu0 %v3109
    %v3111 = vpop.xlane.xlu0 %3110
    %v3112 = vmul.f32 %v3108, %v1481
    %v3113 = vmul.f32 %v3111, %v1481
    %v3114 = vsub.f32 %v3104, %v3112
    %v3115 = vsub.f32 %v3105, %v3113
    %v3116 = vmul.f32 %v3114, %v3114
    %v3117 = vmul.f32 %v3115, %v3115
    %v3118 = vsel %vm108, %v3116, 0.0
    %3119 = vadd.xlane.f32.xlu0 %v3118
    %v3120 = vpop.xlane.xlu0 %3119
    %v3121 = vsel %vm108, %v3117, 0.0
    %3122 = vadd.xlane.f32.xlu0 %v3121
    %v3123 = vpop.xlane.xlu0 %3122
    %v3124 = vmul.f32 %v3120, %v1481
    %v3125 = vmul.f32 %v3123, %v1481
    %v3126 = vadd.f32 %v3124, 1e-05
    %v3127 = vadd.f32 %v3125, 1e-05
    %v3128 = vrsqrt.pop %v3126
    %v3129 = vrsqrt.pop %v3127
    %v3130 = vmul.f32 %v3114, %v3128
    %v3131 = vmul.f32 %v3115, %v3129
    %v3132 = vlaneseq
    %v3133 = vshrl.u32 %v3132, 7
    %v3134 = vsub.s32 3, %v3133
    %v3135 = vrot.slane %v1721, %v3134
    %v3136 = vmul.f32 %v3130, %v3135
    %v3137 = vmul.f32 %v3131, %v3135
    %v3138 = vlaneseq
    %v3139 = vshrl.u32 %v3138, 7
    %v3140 = vsub.s32 4, %v3139
    %v3141 = vrot.slane %v1721, %v3140
    %v3142 = vadd.f32 %v3136, %v3141
    %v3143 = vadd.f32 %v3137, %v3141
    %v3144 = vpack.c.bf16 %v3143, %v3142
    %v3145 = vlaneseq
    %v3146 = vshrl.u32 %v3145, 7
    %v3147 = vsub.s32 5, %v3146
    %v3148 = vrot.slane %v1721, %v3147
    %v3153 = vunpack.c.l.b16 %v1707
    %v3154 = vunpack.c.l.b16 %v1708
    %v3155 = vunpack.c.l.b16 %v1709
    %v3156 = vunpack.c.l.b16 %v1710
    %v3157 = vpack.c.b16 %v3154, %v3153
    %v3158 = vpack.c.b16 %v3156, %v3155
    %v3162 = vsel %vm108, %v3144, 0
    %3164 = vmatprep.subr.bf16.mxu0 0
    %3165 = vmatpush1.bf16.msra.mxu0 %v3157
    %3166 = vmatprep.subr.bf16.mxu0 0
    %3167 = vmatpush1.bf16.msra.mxu0 %v3158
    %3168 = vmatprep.subr.bf16.mxu0 0
    %3169 = vmatpush1.bf16.msra.mxu0 0
    %3170 = vmatprep.subr.bf16.mxu0 0
    %3171 = vmatpush1.bf16.msra.mxu0 0
    %3172 = vmatprep.subr.bf16.mxu0 0
    %3173 = vmatpush1.bf16.msra.mxu0 0
    %3174 = vmatprep.subr.bf16.mxu0 0
    %3175 = vmatpush1.bf16.msra.mxu0 0
    %3176 = vmatprep.subr.bf16.mxu0 0
    %3177 = vmatpush1.bf16.msra.mxu0 0
    %3178 = vmatprep.subr.bf16.mxu0 0
    %3179 = vmatpush1.bf16.msra.mxu0 0
    %3180 = vmatprep.subr.bf16.mxu0 0
    %3181 = vmatpush1.bf16.msra.mxu0 0
    %3182 = vmatprep.subr.bf16.mxu0 0
    %3183 = vmatpush1.bf16.msra.mxu0 0
    %3184 = vmatprep.subr.bf16.mxu0 0
    %3185 = vmatpush1.bf16.msra.mxu0 0
    %3186 = vmatprep.subr.bf16.mxu0 0
    %3187 = vmatpush1.bf16.msra.mxu0 0
    %3188 = vmatprep.subr.bf16.mxu0 0
    %3189 = vmatpush1.bf16.msra.mxu0 0
    %3190 = vmatprep.subr.bf16.mxu0 0
    %3191 = vmatpush1.bf16.msra.mxu0 0
    %3192 = vmatprep.subr.bf16.mxu0 0
    %3193 = vmatpush1.bf16.msra.mxu0 0
    %3194 = vmatprep.subr.bf16.mxu0 0
    %3195 = vmatpush1.bf16.msra.mxu0 0
    %3196 = vmatprep.mubr.bf16.mxu0 0
    %3197 = vmatmul.mubr.bf16.gmra.mrb[0].mxu0 %v3162
    %v3198 = vpop.f32.mrb[0].mxu0
    %v3199 = vadd.f32 %v3148, %v3198
    %v3200 = vpop.f32.mrb[0].mxu0
    %v3201 = vpop.f32.mrb[0].mxu0
    %v3202 = vadd.f32 %v3148, %v3201
    %v3203 = vpop.f32.mrb[0].mxu0
    %3204 = vdwg.mxu0
    %v3205 = vmax.f32 %v3199, 0.0
    %v3206 = vmax.f32 %v3202, 0.0
    %v3207 = vpack.c.bf16 %v3206, %v3205
    %v3208 = vlaneseq
    %v3209 = vshrl.u32 %v3208, 7
    %v3210 = vsub.s32 6, %v3209
    %v3211 = vrot.slane %v1721, %v3210
    %v3220 = vunpack.c.l.b16 %v1712
    %v3221 = vunpack.c.l.b16 %v1713
    %v3222 = vunpack.c.l.b16 %v1714
    %v3223 = vunpack.c.l.b16 %v1715
    %v3224 = vunpack.c.l.b16 %v1716
    %v3225 = vunpack.c.l.b16 %v1717
    %v3226 = vunpack.c.l.b16 %v1718
    %v3227 = vunpack.c.l.b16 %v1719
    %v3228 = vpack.c.b16 %v3221, %v3220
    %v3229 = vpack.c.b16 %v3223, %v3222
    %v3230 = vpack.c.b16 %v3225, %v3224
    %v3231 = vpack.c.b16 %v3227, %v3226
    %v3237 = vsel %vm1606, %v3207, 0
    %3239 = vmatprep.subr.bf16.mxu0 0
    %3240 = vmatpush1.bf16.msra.mxu0 %v3228
    %3241 = vmatprep.subr.bf16.mxu0 0
    %3242 = vmatpush1.bf16.msra.mxu0 %v3229
    %3243 = vmatprep.subr.bf16.mxu0 0
    %3244 = vmatpush1.bf16.msra.mxu0 %v3230
    %3245 = vmatprep.subr.bf16.mxu0 0
    %3246 = vmatpush1.bf16.msra.mxu0 %v3231
    %3247 = vmatprep.subr.bf16.mxu0 0
    %3248 = vmatpush1.bf16.msra.mxu0 0
    %3249 = vmatprep.subr.bf16.mxu0 0
    %3250 = vmatpush1.bf16.msra.mxu0 0
    %3251 = vmatprep.subr.bf16.mxu0 0
    %3252 = vmatpush1.bf16.msra.mxu0 0
    %3253 = vmatprep.subr.bf16.mxu0 0
    %3254 = vmatpush1.bf16.msra.mxu0 0
    %3255 = vmatprep.subr.bf16.mxu0 0
    %3256 = vmatpush1.bf16.msra.mxu0 0
    %3257 = vmatprep.subr.bf16.mxu0 0
    %3258 = vmatpush1.bf16.msra.mxu0 0
    %3259 = vmatprep.subr.bf16.mxu0 0
    %3260 = vmatpush1.bf16.msra.mxu0 0
    %3261 = vmatprep.subr.bf16.mxu0 0
    %3262 = vmatpush1.bf16.msra.mxu0 0
    %3263 = vmatprep.subr.bf16.mxu0 0
    %3264 = vmatpush1.bf16.msra.mxu0 0
    %3265 = vmatprep.subr.bf16.mxu0 0
    %3266 = vmatpush1.bf16.msra.mxu0 0
    %3267 = vmatprep.subr.bf16.mxu0 0
    %3268 = vmatpush1.bf16.msra.mxu0 0
    %3269 = vmatprep.subr.bf16.mxu0 0
    %3270 = vmatpush1.bf16.msra.mxu0 0
    %3271 = vmatprep.mubr.bf16.mxu0 0
    %3272 = vmatmul.mubr.bf16.gmra.mrb[0].mxu0 %v3237
    %v3273 = vpop.f32.mrb[0].mxu0
    %v3274 = vadd.f32 %v3211, %v3273
    %v3275 = vpop.f32.mrb[0].mxu0
    %v3276 = vpop.f32.mrb[0].mxu0
    %v3277 = vadd.f32 %v3211, %v3276
    %v3278 = vpop.f32.mrb[0].mxu0
    %3279 = vdwg.mxu0
    %v3280 = vadd.f32 %v3142, %v3274
    %v3281 = vadd.f32 %v3143, %v3277
    %v3282 = vsel %vm108, %v3280, 0.0
    %3283 = vadd.xlane.f32.xlu0 %v3282
    %v3284 = vpop.xlane.xlu0 %3283
    %v3285 = vsel %vm108, %v3281, 0.0
    %3286 = vadd.xlane.f32.xlu0 %v3285
    %v3287 = vpop.xlane.xlu0 %3286
    %v3288 = vmul.f32 %v3284, %v1481
    %v3289 = vmul.f32 %v3287, %v1481
    %v3290 = vsub.f32 %v3280, %v3288
    %v3291 = vsub.f32 %v3281, %v3289
    %v3292 = vmul.f32 %v3290, %v3290
    %v3293 = vmul.f32 %v3291, %v3291
    %v3294 = vsel %vm108, %v3292, 0.0
    %3295 = vadd.xlane.f32.xlu0 %v3294
    %v3296 = vpop.xlane.xlu0 %3295
    %v3297 = vsel %vm108, %v3293, 0.0
    %3298 = vadd.xlane.f32.xlu0 %v3297
    %v3299 = vpop.xlane.xlu0 %3298
    %v3300 = vmul.f32 %v3296, %v1481
    %v3301 = vmul.f32 %v3299, %v1481
    %v3302 = vadd.f32 %v3300, 1e-05
    %v3303 = vadd.f32 %v3301, 1e-05
    %v3304 = vrsqrt.pop %v3302
    %v3305 = vrsqrt.pop %v3303
    %v3306 = vmul.f32 %v3290, %v3304
    %v3307 = vmul.f32 %v3291, %v3305
    %v3308 = vlaneseq
    %v3309 = vshrl.u32 %v3308, 7
    %v3310 = vsub.s32 7, %v3309
    %v3311 = vrot.slane %v1721, %v3310
    %v3312 = vmul.f32 %v3306, %v3311
    %v3313 = vmul.f32 %v3307, %v3311
    %v3314 = vlaneseq
    %v3315 = vshrl.u32 %v3314, 7
    %v3316 = vsub.s32 0, %v3315
    %v3317 = vrot.slane %v1722, %v3316
    %v3318 = vadd.f32 %v3312, %v3317
    %v3319 = vadd.f32 %v3313, %v3317
    %3320 = vst.msk [vmem:[#allocation7] sm:$0xff] %vm108, %v3318
    %3321 = vst.msk [vmem:[#allocation7 + $0x8] sm:$0xff] %vm108, %v3319
    // Predicated region
    $region42: #{tpu_custom_call.1} parent=1 // pred_check
      _
    $region43: #{tpu_custom_call.1} parent=1 // pred_check_branch
      %3323 = sbr.rel (0) target = $region45
    $region44: #{tpu_custom_call.1} parent=1 // pred_region
      %s3325 = ssub.s32 256, 256
      %3326 = vsyncadd [#allocation4], %s3325
      %s3327 = sshll.u32 [#allocation7], 4
      %s3328 = int_to_ptr.vmem [resolvable:$true] %s3327
      %3333 = dma.vmem_to_hbm [thread:$0]  %s3328, 256, %s8, [#allocation4], 128, 128, 8
    $region45: #{tpu_custom_call.1} parent=1 // pred_fallthru
      _
    // Predicated region
    $region46: #{tpu_custom_call.1} parent=1 // pred_check
      _
    $region47: #{tpu_custom_call.1} parent=1 // pred_check_branch
      %3335 = sbr.rel (0) target = $region49
    $region48: #{tpu_custom_call.1} parent=1 // pred_region
      %3336 = dma.done [#allocation4], 256
    $region49: #{tpu_custom_call.1} parent=1 // pred_fallthru
      _
    %3337 = vsyncpa [#allocation3], 1
    %3338 = vsyncpa [#allocation6], 1
    %3339 = vsyncpa [#allocation4], 1

</llo_original>
